<compile_context>
chip_gen: v7x
topology: tpu7x:2x2x1
jax: 0.10.0
libtpu: 0.0.40
codegen_flags: <defaults>
</compile_context>

<pallas_src>
import functools

import jax
import jax.numpy as jnp
from jax.experimental import pallas as pl
from jax.experimental.pallas import tpu as pltpu

FEAT = 3136          # feature width of the (effective) first Linear
FEAT_PAD = 3200      # padded to 25 * 128 lanes
HID = 512            # hidden width of each head (streamed as one block per head)
OUT_LANES = 128      # lane-dense fused head output
N_HEADS = 2          # head 0 = state value, head 1 = advantage


def dqn_kernel(obs_ref, w0_ref, b0_ref, w1_ref, s1_ref, b1_ref, w2_ref, b2_ref,
               out_ref):
    # feature = obs @ W0 + b0 (f32 accumulate), fed to the MXU as bf16.
    feat = (jnp.dot(obs_ref[...], w0_ref[...],
                    preferred_element_type=jnp.float32) + b0_ref[...]
            ).astype(jnp.bfloat16)

    # Hidden layer of this head.  W1 arrives as int8; dequantize to bf16 in VMEM
    # and apply the per-output-column scale to the matmul RESULT (exact:
    # z_c = s_c * (feat @ q[:, c]) + b1_c).
    w1 = w1_ref[...].astype(jnp.bfloat16)
    z = (jnp.dot(feat, w1, preferred_element_type=jnp.float32)
         * s1_ref[...] + b1_ref[...])
    h = jnp.maximum(z, 0.0).astype(jnp.bfloat16)

    # Second layer of this head (bf16 weights, f32 accumulate) into the
    # lane-dense (B, 128) output slab.
    out_ref[...] = (jnp.dot(h, w2_ref[...], preferred_element_type=jnp.float32)
                    + b2_ref[...])


@functools.partial(jax.jit, static_argnames=("n_action",))
def cnn_qnetwork_forward(obs, packed, n_action):
    assert n_action <= OUT_LANES, "advantage head must fit in one 128-lane slab"
    w0p, b0p, w1q, s1f, b1f, w2f, b2f = packed
    B = obs.shape[0]

    flops = 2 * B * (4 * FEAT_PAD + FEAT_PAD * N_HEADS * HID
                     + N_HEADS * HID * OUT_LANES)
    bytes_accessed = (obs.size * obs.dtype.itemsize
                      + w0p.size * 4 + b0p.size * 4
                      + w1q.size * 1 + s1f.size * 4 + b1f.size * 4
                      + w2f.size * 2 + b2f.size * 4
                      + N_HEADS * B * OUT_LANES * 4)

    fused = pl.pallas_call(
        dqn_kernel,
        out_shape=jax.ShapeDtypeStruct((N_HEADS, B, OUT_LANES), jnp.float32),
        grid=(N_HEADS,),
        in_specs=[
            pl.BlockSpec((B, 4), lambda h: (0, 0)),              # obs
            pl.BlockSpec((4, FEAT_PAD), lambda h: (0, 0)),       # W0 (padded)
            pl.BlockSpec((1, FEAT_PAD), lambda h: (0, 0)),       # b0 (padded)
            pl.BlockSpec((FEAT_PAD, HID), lambda h: (0, h)),     # fused W1 (int8)
            pl.BlockSpec((1, HID), lambda h: (0, h)),            # W1 column scales
            pl.BlockSpec((1, HID), lambda h: (0, h)),            # fused b1
            pl.BlockSpec((None, HID, OUT_LANES), lambda h: (h, 0, 0)),  # fused W2 (bf16)
            pl.BlockSpec((None, 1, OUT_LANES), lambda h: (h, 0, 0)),    # fused b2
        ],
        out_specs=pl.BlockSpec((None, B, OUT_LANES), lambda h: (h, 0, 0)),
        compiler_params=pltpu.CompilerParams(
            dimension_semantics=("parallel",)),
        cost_estimate=pl.CostEstimate(flops=flops, transcendentals=0,
                                      bytes_accessed=bytes_accessed),
    )(obs, w0p, b0p, w1q, s1f, b1f, w2f, b2f)

    state_values = fused[0, :, 0:1]        # (B, 1)
    advantage = fused[1, :, :n_action]     # (B, A)
    # torch.mean(advantage) with no dim => GLOBAL mean over batch AND actions,
    # matching the original module literally.
    return state_values + advantage - jnp.mean(advantage)


def init_params(key, n_action):
    """Plain f32, PyTorch-Linear-style init (uniform +-1/sqrt(fan_in)).

    Weights are (in_features, out_features); biases (1, out_features).
    """
    def linear(k, fan_in, fan_out):
        kw, kb = jax.random.split(k)
        bound = 1.0 / jnp.sqrt(float(fan_in))
        w = jax.random.uniform(kw, (fan_in, fan_out), jnp.float32, -bound, bound)
        b = jax.random.uniform(kb, (1, fan_out), jnp.float32, -bound, bound)
        return w, b

    k0, k1s, k2s, k1a, k2a = jax.random.split(key, 5)
    w0, b0 = linear(k0, 4, FEAT)              # "conv_layers" = Linear(4, 3136)
    w1s, b1s = linear(k1s, FEAT, HID)         # fc_state[0]
    w2s, b2s = linear(k2s, HID, 1)            # fc_state[2]
    w1a, b1a = linear(k1a, FEAT, HID)         # fc_advantage[0]
    w2a, b2a = linear(k2a, HID, n_action)     # fc_advantage[2]
    return (w0, b0, w1s, b1s, w2s, b2s, w1a, b1a, w2a, b2a)


def prepare_params(params):
    """Quantize / fuse / pad params into the kernel's streamed layout.

    Returns (packed_kernel_params, effective_f32_params).  The effective params
    have the int8 (W1) and bf16 (W2) storage baked in, so the f32 reference and
    the kernel use exactly the same stored weights.
    """
    (w0, b0, w1s, b1s, w2s, b2s, w1a, b1a, w2a, b2a) = params
    n_action = w2a.shape[1]

    def quant_cols_int8(w):
        scale = jnp.max(jnp.abs(w), axis=0, keepdims=True) / 127.0
        scale = jnp.maximum(scale, 1e-12).astype(jnp.float32)
        q = jnp.clip(jnp.round(w / scale), -127, 127).astype(jnp.int8)
        return q, scale, q.astype(jnp.float32) * scale

    q1s, s1s, w1s_eff = quant_cols_int8(w1s)
    q1a, s1a, w1a_eff = quant_cols_int8(w1a)
    w2s_eff = w2s.astype(jnp.bfloat16).astype(jnp.float32)
    w2a_eff = w2a.astype(jnp.bfloat16).astype(jnp.float32)

    eff_params = (w0, b0, w1s_eff, b1s, w2s_eff, b2s, w1a_eff, b1a, w2a_eff, b2a)

    # Feature dim padded 3136 -> 3200 with zeros (zero W0/b0 columns + zero W1
    # rows mean the padded features contribute nothing).
    w0p = jnp.zeros((4, FEAT_PAD), jnp.float32).at[:, :FEAT].set(w0)
    b0p = jnp.zeros((1, FEAT_PAD), jnp.float32).at[:, :FEAT].set(b0)

    # Fused hidden layer (int8 + per-column f32 scale):
    # columns [0:512) = state head, [512:1024) = advantage head.
    w1q = jnp.zeros((FEAT_PAD, N_HEADS * HID), jnp.int8)
    w1q = w1q.at[:FEAT, :HID].set(q1s).at[:FEAT, HID:].set(q1a)
    s1f = jnp.concatenate([s1s, s1a], axis=1)                # (1, 1024) f32
    b1f = jnp.concatenate([b1s, b1a], axis=1)                # (1, 1024) f32

    # Fused, lane-padded second layers (bf16 weights, f32 bias): head 0 -> state
    # value in lane 0, head 1 -> advantages in lanes [0, n_action).
    w2f = jnp.zeros((N_HEADS, HID, OUT_LANES), jnp.float32)
    w2f = w2f.at[0, :, 0:1].set(w2s_eff).at[1, :, :n_action].set(w2a_eff)
    w2f = w2f.astype(jnp.bfloat16)
    b2f = jnp.zeros((N_HEADS, 1, OUT_LANES), jnp.float32)
    b2f = b2f.at[0, :, 0:1].set(b2s).at[1, :, :n_action].set(b2a)

    packed = (w0p, b0p, w1q, s1f, b1f, w2f, b2f)
    return packed, eff_params


def reference_forward(obs, eff_params):
    """Pure-JAX f32 reference of the PyTorch forward (same stored weights)."""
    (w0, b0, w1s, b1s, w2s, b2s, w1a, b1a, w2a, b2a) = eff_params
    feat = obs @ w0 + b0
    hs = jnp.maximum(feat @ w1s + b1s, 0.0)
    sv = hs @ w2s + b2s
    ha = jnp.maximum(feat @ w1a + b1a, 0.0)
    adv = ha @ w2a + b2a
    return sv + adv - jnp.mean(adv)


if __name__ == "__main__":
    key = jax.random.PRNGKey(0)
    k_params, k_obs = jax.random.split(key)

    n_action = 6
    batch = 2
    params = init_params(k_params, n_action)
    packed, eff_params = prepare_params(params)
    obs = jax.random.normal(k_obs, (batch, 4), jnp.float32)

    out = cnn_qnetwork_forward(obs, packed, n_action)
    out = jax.block_until_ready(out)

    ref = reference_forward(obs, eff_params)
    assert out.shape == (batch, n_action), out.shape
    # int8 W1 / bf16 W2 storage is baked into the reference; remaining error is
    # bf16 activations into the MXU (f32 accumulate) -> expected |err| ~1e-3.
    assert jnp.allclose(out, ref, atol=1e-2, rtol=1e-2), (out, ref)

    print("KERNEL_OK")
</pallas_src>

<mosaic_0001>
module attributes {stable_mosaic.version = 11 : i64} {
  func.func @dqn_kernel(%arg0: i32, %arg1: memref<2x4xf32, #tpu.memory_space<vmem>>, %arg2: memref<4x3200xf32, #tpu.memory_space<vmem>>, %arg3: memref<1x3200xf32, #tpu.memory_space<vmem>>, %arg4: memref<3200x512xi8, #tpu.memory_space<vmem>>, %arg5: memref<1x512xf32, #tpu.memory_space<vmem>>, %arg6: memref<1x512xf32, #tpu.memory_space<vmem>>, %arg7: memref<1x512x128xbf16, #tpu.memory_space<vmem>>, %arg8: memref<1x1x128xf32, #tpu.memory_space<vmem>>, %arg9: memref<1x2x128xf32, #tpu.memory_space<vmem>>) attributes {dimension_semantics = [#tpu.dimension_semantics<parallel>], iteration_bounds = array<i64: 2>, scalar_prefetch = 0 : i64, scratch_operands = 0 : i64, tpu.core_type = #tpu.core_type<tc>, window_params = [{pipeline_mode = #tpu.pipeline_mode<synchronous>, transform_indices = @transform_0, window_bounds = array<i64: 2, 4>}, {pipeline_mode = #tpu.pipeline_mode<synchronous>, transform_indices = @transform_1, window_bounds = array<i64: 4, 3200>}, {pipeline_mode = #tpu.pipeline_mode<synchronous>, transform_indices = @transform_2, window_bounds = array<i64: 1, 3200>}, {transform_indices = @transform_3, window_bounds = array<i64: 3200, 512>}, {transform_indices = @transform_4, window_bounds = array<i64: 1, 512>}, {transform_indices = @transform_5, window_bounds = array<i64: 1, 512>}, {transform_indices = @transform_6, window_bounds = array<i64: 1, 512, 128>}, {transform_indices = @transform_7, window_bounds = array<i64: 1, 1, 128>}, {transform_indices = @transform_8, window_bounds = array<i64: 1, 2, 128>}]} {
    %c0 = arith.constant 0 : index
    %c0_0 = arith.constant 0 : index
    %0 = vector.load %arg1[%c0, %c0_0] : memref<2x4xf32, #tpu.memory_space<vmem>>, vector<2x4xf32>
    %c0_1 = arith.constant 0 : index
    %c0_2 = arith.constant 0 : index
    %1 = vector.load %arg2[%c0_1, %c0_2] : memref<4x3200xf32, #tpu.memory_space<vmem>>, vector<4x3200xf32>
    %cst = arith.constant dense<0.000000e+00> : vector<2x3200xf32>
    %2 = tpu.matmul %0, %1, %cst {dimension_numbers = #tpu.dot_dimension_numbers<[1], [0], [0], [1], [0, 0, 1, 1], [], []>} : vector<2x4xf32>, vector<4x3200xf32>, vector<2x3200xf32> -> vector<2x3200xf32>
    %c0_3 = arith.constant 0 : index
    %c0_4 = arith.constant 0 : index
    %3 = vector.load %arg3[%c0_3, %c0_4] : memref<1x3200xf32, #tpu.memory_space<vmem>>, vector<1x3200xf32>
    %4 = vector.broadcast %3 : vector<1x3200xf32> to vector<2x3200xf32>
    %5 = arith.addf %2, %4 : vector<2x3200xf32>
    %6 = arith.truncf %5 : vector<2x3200xf32> to vector<2x3200xbf16>
    %c0_5 = arith.constant 0 : index
    %c0_6 = arith.constant 0 : index
    %7 = vector.load %arg4[%c0_5, %c0_6] : memref<3200x512xi8, #tpu.memory_space<vmem>>, vector<3200x512xi8>
    %8 = arith.sitofp %7 : vector<3200x512xi8> to vector<3200x512xbf16>
    %cst_7 = arith.constant dense<0.000000e+00> : vector<2x512xf32>
    %9 = tpu.matmul %6, %8, %cst_7 {dimension_numbers = #tpu.dot_dimension_numbers<[1], [0], [0], [1], [0, 0, 1, 1], [], []>} : vector<2x3200xbf16>, vector<3200x512xbf16>, vector<2x512xf32> -> vector<2x512xf32>
    %c0_8 = arith.constant 0 : index
    %c0_9 = arith.constant 0 : index
    %10 = vector.load %arg5[%c0_8, %c0_9] : memref<1x512xf32, #tpu.memory_space<vmem>>, vector<1x512xf32>
    %11 = vector.broadcast %10 : vector<1x512xf32> to vector<2x512xf32>
    %12 = arith.mulf %9, %11 : vector<2x512xf32>
    %c0_10 = arith.constant 0 : index
    %c0_11 = arith.constant 0 : index
    %13 = vector.load %arg6[%c0_10, %c0_11] : memref<1x512xf32, #tpu.memory_space<vmem>>, vector<1x512xf32>
    %14 = vector.broadcast %13 : vector<1x512xf32> to vector<2x512xf32>
    %15 = arith.addf %12, %14 : vector<2x512xf32>
    %cst_12 = arith.constant 0.000000e+00 : f32
    %16 = vector.broadcast %cst_12 : f32 to vector<2x512xf32>
    %17 = arith.maximumf %15, %16 : vector<2x512xf32>
    %18 = arith.truncf %17 : vector<2x512xf32> to vector<2x512xbf16>
    %c0_13 = arith.constant 0 : index
    %c0_14 = arith.constant 0 : index
    %c0_15 = arith.constant 0 : index
    %19 = vector.load %arg7[%c0_13, %c0_14, %c0_15] : memref<1x512x128xbf16, #tpu.memory_space<vmem>>, vector<1x512x128xbf16>
    %20 = vector.shape_cast %19 : vector<1x512x128xbf16> to vector<512x128xbf16>
    %cst_16 = arith.constant dense<0.000000e+00> : vector<2x128xf32>
    %21 = tpu.matmul %18, %20, %cst_16 {dimension_numbers = #tpu.dot_dimension_numbers<[1], [0], [0], [1], [0, 0, 1, 1], [], []>} : vector<2x512xbf16>, vector<512x128xbf16>, vector<2x128xf32> -> vector<2x128xf32>
    %c0_17 = arith.constant 0 : index
    %c0_18 = arith.constant 0 : index
    %c0_19 = arith.constant 0 : index
    %22 = vector.load %arg8[%c0_17, %c0_18, %c0_19] : memref<1x1x128xf32, #tpu.memory_space<vmem>>, vector<1x1x128xf32>
    %23 = vector.shape_cast %22 : vector<1x1x128xf32> to vector<1x128xf32>
    %24 = vector.broadcast %23 : vector<1x128xf32> to vector<2x128xf32>
    %25 = arith.addf %21, %24 : vector<2x128xf32>
    %c0_20 = arith.constant 0 : index
    %c0_21 = arith.constant 0 : index
    %c0_22 = arith.constant 0 : index
    %26 = vector.load %arg9[%c0_20, %c0_21, %c0_22] : memref<1x2x128xf32, #tpu.memory_space<vmem>>, vector<1x2x128xf32>
    %27 = vector.shape_cast %26 : vector<1x2x128xf32> to vector<2x128xf32>
    %28 = vector.shape_cast %25 : vector<2x128xf32> to vector<1x2x128xf32>
    tpu.vector_store %arg9[%c0_20, %c0_21, %c0_22], %28 {strides = array<i32>} : memref<1x2x128xf32, #tpu.memory_space<vmem>>, vector<1x2x128xf32>,
    return
  }
  func.func @transform_0(%arg0: i32) -> (i32, i32) {
    %c0_i32 = arith.constant 0 : i32
    %c0_i32_0 = arith.constant 0 : i32
    %c0_i32_1 = arith.constant 0 : i32
    return %c0_i32, %c0_i32_0 : i32, i32
  }
  func.func @transform_1(%arg0: i32) -> (i32, i32) {
    %c0_i32 = arith.constant 0 : i32
    %c0_i32_0 = arith.constant 0 : i32
    %c0_i32_1 = arith.constant 0 : i32
    return %c0_i32, %c0_i32_0 : i32, i32
  }
  func.func @transform_2(%arg0: i32) -> (i32, i32) {
    %c0_i32 = arith.constant 0 : i32
    %c0_i32_0 = arith.constant 0 : i32
    %c0_i32_1 = arith.constant 0 : i32
    return %c0_i32, %c0_i32_0 : i32, i32
  }
  func.func @transform_3(%arg0: i32) -> (i32, i32) {
    %c0_i32 = arith.constant 0 : i32
    %c0_i32_0 = arith.constant 0 : i32
    return %c0_i32, %arg0 : i32, i32
  }
  func.func @transform_4(%arg0: i32) -> (i32, i32) {
    %c0_i32 = arith.constant 0 : i32
    %c0_i32_0 = arith.constant 0 : i32
    return %c0_i32, %arg0 : i32, i32
  }
  func.func @transform_5(%arg0: i32) -> (i32, i32) {
    %c0_i32 = arith.constant 0 : i32
    %c0_i32_0 = arith.constant 0 : i32
    return %c0_i32, %arg0 : i32, i32
  }
  func.func @transform_6(%arg0: i32) -> (i32, i32, i32) {
    %c0_i32 = arith.constant 0 : i32
    %c0_i32_0 = arith.constant 0 : i32
    %c0_i32_1 = arith.constant 0 : i32
    return %arg0, %c0_i32, %c0_i32_0 : i32, i32, i32
  }
  func.func @transform_7(%arg0: i32) -> (i32, i32, i32) {
    %c0_i32 = arith.constant 0 : i32
    %c0_i32_0 = arith.constant 0 : i32
    %c0_i32_1 = arith.constant 0 : i32
    return %arg0, %c0_i32, %c0_i32_0 : i32, i32, i32
  }
  func.func @transform_8(%arg0: i32) -> (i32, i32, i32) {
    %c0_i32 = arith.constant 0 : i32
    %c0_i32_0 = arith.constant 0 : i32
    %c0_i32_1 = arith.constant 0 : i32
    return %arg0, %c0_i32, %c0_i32_0 : i32, i32, i32
  }
}

</mosaic_0001>

<llo_original>
// kernel: cnn_qnetwork_forward.1
$region0: #{cnn_qnetwork_forward.1}
  #allocation0 [shape = 'u32[]', space=smem, size = 0x4, offset = 0x4, fixed_abs, tag = 'smem constant byte address 0x4 - core index']
  #allocation1 [shape = 'u32[144,128]{1,0:T(1,128)}', space=vmem, size = 0x12000, scoped, tag = 'internal scratch']
  %s0 = inlined_call_operand.hbm [shape: f32[2,4], index: 0, kind: input, shape index: {}]
  %s1 = inlined_call_operand.hbm [shape: f32[4,3200], index: 1, kind: input, shape index: {}]
  %s2 = inlined_call_operand.hbm [shape: f32[1,3200], index: 2, kind: input, shape index: {}]
  %s3 = inlined_call_operand.hbm [shape: s8[3200,1024], index: 3, kind: input, shape index: {}]
  %s4 = inlined_call_operand.hbm [shape: f32[1,1024], index: 4, kind: input, shape index: {}]
  %s5 = inlined_call_operand.hbm [shape: f32[1,1024], index: 5, kind: input, shape index: {}]
  %s6 = inlined_call_operand.hbm [shape: bf16[2,512,128], index: 6, kind: input, shape index: {}]
  %s7 = inlined_call_operand.hbm [shape: f32[2,1,128], index: 7, kind: input, shape index: {}]
  %s8 = inlined_call_operand.vmem [shape: f32[2,2,128], index: 8, kind: output, shape index: {}]
  %s9 = sld [smem:[#allocation0]]
  $region97: #{cnn_qnetwork_forward.1} parent=0
    _
  %s11 = ssub.s32 1, %s9
  %s12 = scalar_select 0, %s11, %s9
  $region1: #{cnn_qnetwork_forward.1} parent=0
    #allocation2 [shape = 'u8[1024]{0}', space=vmem, size = 0x400, scoped, tag = 'input window, operand 0, single buffered']
    #allocation3 [shape = 's32[2]{0}', space=sflag, size = 0x8, scoped, tag = 'scoped memory for cnn_qnetwork_forward.1']
    #allocation4 [shape = 'u8[51200]{0}', space=vmem, size = 0xc800, scoped, tag = 'input window, operand 1, single buffered']
    #allocation5 [shape = 's32[1]{0}', space=sflag, size = 0x4, scoped, tag = 'scoped memory for cnn_qnetwork_forward.1']
    #allocation6 [shape = 'u8[12800]{0}', space=vmem, size = 0x3400, scoped, tag = 'input window, operand 2, single buffered']
    #allocation7 [shape = 'u8[3276800]{0}', space=vmem, size = 0x320000, scoped, tag = 'input window, operand 3']
    #allocation8 [shape = 's32[2]{0}', space=sflag, size = 0x8, scoped, tag = 'scoped memory for cnn_qnetwork_forward.1']
    #allocation9 [shape = 'u8[4096]{0}', space=vmem, size = 0x1000, scoped, tag = 'input window, operand 4']
    #allocation10 [shape = 'u8[4096]{0}', space=vmem, size = 0x1000, scoped, tag = 'input window, operand 5']
    #allocation11 [shape = 's32[2]{0}', space=sflag, size = 0x8, scoped, tag = 'scoped memory for cnn_qnetwork_forward.1']
    #allocation12 [shape = 'u8[262144]{0}', space=vmem, size = 0x40000, scoped, tag = 'input window, operand 6']
    #allocation13 [shape = 'u8[1024]{0}', space=vmem, size = 0x400, scoped, tag = 'input window, operand 7']
    #allocation14 [shape = 's32[2]{0}', space=sflag, size = 0x8, scoped, tag = 'scoped memory for cnn_qnetwork_forward.1']
    %13 = vsyncpa [#allocation3], 0
    %14 = vsyncpa [#allocation5], 0
    %15 = vsyncpa [#allocation8], 0
    %s16 = scalar_lea.sflag [#allocation8], 1
    %17 = vsyncpa %s16, 0
    %18 = vsyncpa [#allocation11], 0
    %s19 = scalar_lea.sflag [#allocation11], 1
    %20 = vsyncpa %s19, 0
    %21 = vsyncpa [#allocation14], 0
    %s22 = scalar_lea.sflag [#allocation14], 1
    %23 = vsyncpa %s22, 0
    loop: start=0, step=1, limit=4
    $region2: #{cnn_qnetwork_forward.1} parent=1 // loop_pre_header
      _
    $region3: #{cnn_qnetwork_forward.1} parent=1 // loop_header
      %s25 = sphi 0, %s29
      %p26 = scmp.ge.s32.totalorder %s25, 4
      %s33 = sphi 0, %s33
      %s35 = sphi 0, %s33
      %s36 = sphi 0, %s35
      %s50 = sphi 0, %s36
      %s54 = sphi 0, %s54
      %s56 = sphi 0, %s54
      %s57 = sphi 0, %s56
      %s71 = sphi 0, %s57
      %s75 = sphi 0, %s75
      %s77 = sphi 0, %s75
      %s78 = sphi 0, %s77
      %s92 = sphi 0, %s78
      %s98 = sphi 0, %s100
      %s101 = sphi 0, %s98
      %s102 = sphi 0, %s101
      %s118 = sphi 0, %s102
      %s124 = sphi 0, %s126
      %s127 = sphi 0, %s124
      %s128 = sphi 0, %s127
      %s144 = sphi 0, %s128
      %s150 = sphi 0, %s152
      %s153 = sphi 0, %s150
      %s154 = sphi 0, %s153
      %s170 = sphi 0, %s154
      %s176 = sphi 0, %s178
      %s179 = sphi 0, %s176
      %s180 = sphi 0, %s179
      %s196 = sphi 0, %s180
      %s202 = sphi 0, %s204
      %s205 = sphi 0, %s202
      %s206 = sphi 0, %s205
      %s222 = sphi 0, %s206
      %s228 = sphi 0, %s230
      %s231 = sphi 0, %s228
      %s232 = sphi 0, %s231
      %s248 = sphi 0, %s232
    $region4: #{cnn_qnetwork_forward.1} parent=1 // loop_header_branch
      %28 = sbr.rel (%p26) target = $region8
    $region5: #{cnn_qnetwork_forward.1} parent=1 // loop_body
      %s30 = ssub.s32 %s25, 1
      %s31 = ssub.s32 %s25, 2
      %s32 = sadd.s32 %s25, 1
      %s34 = sadd.s32 %s33, 1
      %p37 = scmp.eq.s32.totalorder %s25, 1
      %p38 = scmp.ne.s32.totalorder %s33, %s35
      %p39 = scmp.eq.s32.totalorder %s25, 0
      %p40 = por %p38, %p39
      %p41 = scmp.ne.s32.totalorder %s33, %s35
      %p42 = scmp.eq.s32.totalorder %s30, 1
      %p43 = por %p41, %p42
      %p44 = scmp.ne.s32.totalorder %s35, %s36
      %p45 = scmp.eq.s32.totalorder %s30, 0
      %p46 = por %p44, %p45
      %p47 = scmp.ne.s32.totalorder %s35, %s36
      %p48 = scmp.eq.s32.totalorder %s31, 1
      %p49 = por %p47, %p48
      %p51 = scmp.ne.s32.totalorder %s36, %s50
      %p52 = scmp.eq.s32.totalorder %s31, 0
      %p53 = por %p51, %p52
      %s55 = sadd.s32 %s54, 1
      %p58 = scmp.eq.s32.totalorder %s25, 1
      %p59 = scmp.ne.s32.totalorder %s54, %s56
      %p60 = scmp.eq.s32.totalorder %s25, 0
      %p61 = por %p59, %p60
      %p62 = scmp.ne.s32.totalorder %s54, %s56
      %p63 = scmp.eq.s32.totalorder %s30, 1
      %p64 = por %p62, %p63
      %p65 = scmp.ne.s32.totalorder %s56, %s57
      %p66 = scmp.eq.s32.totalorder %s30, 0
      %p67 = por %p65, %p66
      %p68 = scmp.ne.s32.totalorder %s56, %s57
      %p69 = scmp.eq.s32.totalorder %s31, 1
      %p70 = por %p68, %p69
      %p72 = scmp.ne.s32.totalorder %s57, %s71
      %p73 = scmp.eq.s32.totalorder %s31, 0
      %p74 = por %p72, %p73
      %s76 = sadd.s32 %s75, 1
      %p79 = scmp.eq.s32.totalorder %s25, 1
      %p80 = scmp.ne.s32.totalorder %s75, %s77
      %p81 = scmp.eq.s32.totalorder %s25, 0
      %p82 = por %p80, %p81
      %p83 = scmp.ne.s32.totalorder %s75, %s77
      %p84 = scmp.eq.s32.totalorder %s30, 1
      %p85 = por %p83, %p84
      %p86 = scmp.ne.s32.totalorder %s77, %s78
      %p87 = scmp.eq.s32.totalorder %s30, 0
      %p88 = por %p86, %p87
      %p89 = scmp.ne.s32.totalorder %s77, %s78
      %p90 = scmp.eq.s32.totalorder %s31, 1
      %p91 = por %p89, %p90
      %p93 = scmp.ne.s32.totalorder %s78, %s92
      %p94 = scmp.eq.s32.totalorder %s31, 0
      %p95 = por %p93, %p94
      %s96 = ssub.s32 %s25, %s32
      %p97 = scmp.eq.s32.totalorder %s96, 0
      %s99 = sadd.s32 %s98, 1
      %s100 = scalar_select %p97, %s98, %s99
      %p103 = pneg %p97
      %p104 = scmp.eq.s32.totalorder %s25, 1
      %p105 = por %p103, %p104
      %p106 = scmp.ne.s32.totalorder %s98, %s101
      %p107 = scmp.eq.s32.totalorder %s25, 0
      %p108 = por %p106, %p107
      %p109 = scmp.ne.s32.totalorder %s98, %s101
      %p110 = scmp.eq.s32.totalorder %s30, 1
      %p111 = por %p109, %p110
      %p112 = scmp.ne.s32.totalorder %s101, %s102
      %p113 = scmp.eq.s32.totalorder %s30, 0
      %p114 = por %p112, %p113
      %p115 = scmp.ne.s32.totalorder %s101, %s102
      %p116 = scmp.eq.s32.totalorder %s31, 1
      %p117 = por %p115, %p116
      %p119 = scmp.ne.s32.totalorder %s102, %s118
      %p120 = scmp.eq.s32.totalorder %s31, 0
      %p121 = por %p119, %p120
      %s122 = ssub.s32 %s25, %s32
      %p123 = scmp.eq.s32.totalorder %s122, 0
      %s125 = sadd.s32 %s124, 1
      %s126 = scalar_select %p123, %s124, %s125
      %p129 = pneg %p123
      %p130 = scmp.eq.s32.totalorder %s25, 1
      %p131 = por %p129, %p130
      %p132 = scmp.ne.s32.totalorder %s124, %s127
      %p133 = scmp.eq.s32.totalorder %s25, 0
      %p134 = por %p132, %p133
      %p135 = scmp.ne.s32.totalorder %s124, %s127
      %p136 = scmp.eq.s32.totalorder %s30, 1
      %p137 = por %p135, %p136
      %p138 = scmp.ne.s32.totalorder %s127, %s128
      %p139 = scmp.eq.s32.totalorder %s30, 0
      %p140 = por %p138, %p139
      %p141 = scmp.ne.s32.totalorder %s127, %s128
      %p142 = scmp.eq.s32.totalorder %s31, 1
      %p143 = por %p141, %p142
      %p145 = scmp.ne.s32.totalorder %s128, %s144
      %p146 = scmp.eq.s32.totalorder %s31, 0
      %p147 = por %p145, %p146
      %s148 = ssub.s32 %s25, %s32
      %p149 = scmp.eq.s32.totalorder %s148, 0
      %s151 = sadd.s32 %s150, 1
      %s152 = scalar_select %p149, %s150, %s151
      %p155 = pneg %p149
      %p156 = scmp.eq.s32.totalorder %s25, 1
      %p157 = por %p155, %p156
      %p158 = scmp.ne.s32.totalorder %s150, %s153
      %p159 = scmp.eq.s32.totalorder %s25, 0
      %p160 = por %p158, %p159
      %p161 = scmp.ne.s32.totalorder %s150, %s153
      %p162 = scmp.eq.s32.totalorder %s30, 1
      %p163 = por %p161, %p162
      %p164 = scmp.ne.s32.totalorder %s153, %s154
      %p165 = scmp.eq.s32.totalorder %s30, 0
      %p166 = por %p164, %p165
      %p167 = scmp.ne.s32.totalorder %s153, %s154
      %p168 = scmp.eq.s32.totalorder %s31, 1
      %p169 = por %p167, %p168
      %p171 = scmp.ne.s32.totalorder %s154, %s170
      %p172 = scmp.eq.s32.totalorder %s31, 0
      %p173 = por %p171, %p172
      %s174 = ssub.s32 %s25, %s32
      %p175 = scmp.eq.s32.totalorder %s174, 0
      %s177 = sadd.s32 %s176, 1
      %s178 = scalar_select %p175, %s176, %s177
      %p181 = pneg %p175
      %p182 = scmp.eq.s32.totalorder %s25, 1
      %p183 = por %p181, %p182
      %p184 = scmp.ne.s32.totalorder %s176, %s179
      %p185 = scmp.eq.s32.totalorder %s25, 0
      %p186 = por %p184, %p185
      %p187 = scmp.ne.s32.totalorder %s176, %s179
      %p188 = scmp.eq.s32.totalorder %s30, 1
      %p189 = por %p187, %p188
      %p190 = scmp.ne.s32.totalorder %s179, %s180
      %p191 = scmp.eq.s32.totalorder %s30, 0
      %p192 = por %p190, %p191
      %p193 = scmp.ne.s32.totalorder %s179, %s180
      %p194 = scmp.eq.s32.totalorder %s31, 1
      %p195 = por %p193, %p194
      %p197 = scmp.ne.s32.totalorder %s180, %s196
      %p198 = scmp.eq.s32.totalorder %s31, 0
      %p199 = por %p197, %p198
      %s200 = ssub.s32 %s25, %s32
      %p201 = scmp.eq.s32.totalorder %s200, 0
      %s203 = sadd.s32 %s202, 1
      %s204 = scalar_select %p201, %s202, %s203
      %p207 = pneg %p201
      %p208 = scmp.eq.s32.totalorder %s25, 1
      %p209 = por %p207, %p208
      %p210 = scmp.ne.s32.totalorder %s202, %s205
      %p211 = scmp.eq.s32.totalorder %s25, 0
      %p212 = por %p210, %p211
      %p213 = scmp.ne.s32.totalorder %s202, %s205
      %p214 = scmp.eq.s32.totalorder %s30, 1
      %p215 = por %p213, %p214
      %p216 = scmp.ne.s32.totalorder %s205, %s206
      %p217 = scmp.eq.s32.totalorder %s30, 0
      %p218 = por %p216, %p217
      %p219 = scmp.ne.s32.totalorder %s205, %s206
      %p220 = scmp.eq.s32.totalorder %s31, 1
      %p221 = por %p219, %p220
      %p223 = scmp.ne.s32.totalorder %s206, %s222
      %p224 = scmp.eq.s32.totalorder %s31, 0
      %p225 = por %p223, %p224
      %s226 = ssub.s32 %s25, %s32
      %p227 = scmp.eq.s32.totalorder %s226, 0
      %s229 = sadd.s32 %s228, 1
      %s230 = scalar_select %p227, %s228, %s229
      %p233 = pneg %p227
      %p234 = scmp.eq.s32.totalorder %s25, 1
      %p235 = por %p233, %p234
      %p236 = scmp.ne.s32.totalorder %s228, %s231
      %p237 = scmp.eq.s32.totalorder %s25, 0
      %p238 = por %p236, %p237
      %p239 = scmp.ne.s32.totalorder %s228, %s231
      %p240 = scmp.eq.s32.totalorder %s30, 1
      %p241 = por %p239, %p240
      %p242 = scmp.ne.s32.totalorder %s231, %s232
      %p243 = scmp.eq.s32.totalorder %s30, 0
      %p244 = por %p242, %p243
      %p245 = scmp.ne.s32.totalorder %s231, %s232
      %p246 = scmp.eq.s32.totalorder %s31, 1
      %p247 = por %p245, %p246
      %p249 = scmp.ne.s32.totalorder %s232, %s248
      %p250 = scmp.eq.s32.totalorder %s31, 0
      %p251 = por %p249, %p250
      %p252 = scmp.le.s32.totalorder 1, %s25
      %p253 = scmp.lt.s32.totalorder %s25, 3
      %p254 = pnand %p252, %p253
      %p255 = pneg %p254
      // Predicated region
      $region9: #{cnn_qnetwork_forward.1} parent=5 // pred_check
        _
      $region10: #{cnn_qnetwork_forward.1} parent=5 // pred_check_branch
        %257 = sbr.rel (%p254) target = $region12
      $region11: #{cnn_qnetwork_forward.1} parent=5 // pred_region
        %s258 = ssub.s32 %s25, 1
        // Predicated region
        $region13: #{cnn_qnetwork_forward.1} parent=11 // pred_check
          %p259 = pneg %p46
        $region14: #{cnn_qnetwork_forward.1} parent=11 // pred_check_branch
          %261 = sbr.rel (%p259) target = $region16
        $region15: #{cnn_qnetwork_forward.1} parent=11 // pred_region
          %s263 = ssub.s32 32, 32
          %264 = vsyncadd [#allocation3], %s263
          %s266 = sshll.u32 [#allocation2], 4
          %s267 = int_to_ptr.vmem [resolvable:$true] %s266
          %269 = dma.hbm_to_vmem [thread:$0]  %s0, 32, %s267, [#allocation3]
        $region16: #{cnn_qnetwork_forward.1} parent=11 // pred_fallthru
          _
        // Predicated region
        $region17: #{cnn_qnetwork_forward.1} parent=11 // pred_check
          %p270 = pneg %p67
        $region18: #{cnn_qnetwork_forward.1} parent=11 // pred_check_branch
          %272 = sbr.rel (%p270) target = $region20
        $region19: #{cnn_qnetwork_forward.1} parent=11 // pred_region
          %s274 = ssub.s32 1600, 1600
          %275 = vsyncadd [#allocation5], %s274
          %s277 = sshll.u32 [#allocation4], 4
          %s278 = int_to_ptr.vmem [resolvable:$true] %s277
          %280 = dma.hbm_to_vmem [thread:$0]  %s1, 1600, %s278, [#allocation5]
        $region20: #{cnn_qnetwork_forward.1} parent=11 // pred_fallthru
          _
        // Predicated region
        $region21: #{cnn_qnetwork_forward.1} parent=11 // pred_check
          %p281 = pneg %p88
        $region22: #{cnn_qnetwork_forward.1} parent=11 // pred_check_branch
          %283 = sbr.rel (%p281) target = $region24
        $region23: #{cnn_qnetwork_forward.1} parent=11 // pred_region
          %s285 = ssub.s32 400, 400
          %286 = vsyncadd [#allocation5], %s285
          %s288 = sshll.u32 [#allocation6], 4
          %s289 = int_to_ptr.vmem [resolvable:$true] %s288
          %291 = dma.hbm_to_vmem [thread:$0]  %s2, 400, %s289, [#allocation5]
        $region24: #{cnn_qnetwork_forward.1} parent=11 // pred_fallthru
          _
      $region12: #{cnn_qnetwork_forward.1} parent=5 // pred_fallthru
        _
      %p292 = scmp.lt.s32.totalorder %s25, 2
      // Predicated region
      $region25: #{cnn_qnetwork_forward.1} parent=5 // pred_check
        %p293 = pneg %p292
      $region26: #{cnn_qnetwork_forward.1} parent=5 // pred_check_branch
        %295 = sbr.rel (%p293) target = $region28
      $region27: #{cnn_qnetwork_forward.1} parent=5 // pred_region
        // Predicated region
        $region29: #{cnn_qnetwork_forward.1} parent=27 // pred_check
          %p296 = pneg %p108
        $region30: #{cnn_qnetwork_forward.1} parent=27 // pred_check_branch
          %298 = sbr.rel (%p296) target = $region32
        $region31: #{cnn_qnetwork_forward.1} parent=27 // pred_region
          %s299 = sand.u32 %s25, 1
          %s300 = scalar_lea.sflag [#allocation8], %s299
          %s301 = sand.u32 %s98, 1
          %s302 = smul.addr %s301, 3200
          %s303 = scalar_lea.vmem [#allocation7], %s302
          %s304 = smul.u32 4, %s25
          %s306 = ssub.s32 51200, 51200
          %307 = vsyncadd %s300, %s306
          %s308 = smul.addr %s304, 128
          %s309 = scalar_lea.hbm %s3, %s308
          %s310 = sshll.u32 %s303, 4
          %s311 = int_to_ptr.vmem [resolvable:$true] %s310
          %316 = dma.hbm_to_vmem [thread:$0]  %s309, 51200, %s311, %s300, 1024, 512, 32
        $region32: #{cnn_qnetwork_forward.1} parent=27 // pred_fallthru
          _
        // Predicated region
        $region33: #{cnn_qnetwork_forward.1} parent=27 // pred_check
          %p317 = pneg %p134
        $region34: #{cnn_qnetwork_forward.1} parent=27 // pred_check_branch
          %319 = sbr.rel (%p317) target = $region36
        $region35: #{cnn_qnetwork_forward.1} parent=27 // pred_region
          %s320 = sand.u32 %s25, 1
          %s321 = scalar_lea.sflag [#allocation8], %s320
          %s322 = sand.u32 %s124, 1
          %s323 = smul.addr %s322, 4
          %s324 = scalar_lea.vmem [#allocation9], %s323
          %s325 = smul.u32 4, %s25
          %s327 = ssub.s32 64, 64
          %328 = vsyncadd %s321, %s327
          %s329 = smul.addr %s325, 16
          %s330 = scalar_lea.hbm %s4, %s329
          %s332 = sshll.u32 %s324, 4
          %s333 = int_to_ptr.vmem [resolvable:$true] %s332
          %335 = dma.hbm_to_vmem [thread:$0]  %s330, 64, %s333, %s321
        $region36: #{cnn_qnetwork_forward.1} parent=27 // pred_fallthru
          _
        // Predicated region
        $region37: #{cnn_qnetwork_forward.1} parent=27 // pred_check
          %p336 = pneg %p160
        $region38: #{cnn_qnetwork_forward.1} parent=27 // pred_check_branch
          %338 = sbr.rel (%p336) target = $region40
        $region39: #{cnn_qnetwork_forward.1} parent=27 // pred_region
          %s339 = sand.u32 %s25, 1
          %s340 = scalar_lea.sflag [#allocation11], %s339
          %s341 = sand.u32 %s150, 1
          %s342 = smul.addr %s341, 4
          %s343 = scalar_lea.vmem [#allocation10], %s342
          %s344 = smul.u32 4, %s25
          %s346 = ssub.s32 64, 64
          %347 = vsyncadd %s340, %s346
          %s348 = smul.addr %s344, 16
          %s349 = scalar_lea.hbm %s5, %s348
          %s351 = sshll.u32 %s343, 4
          %s352 = int_to_ptr.vmem [resolvable:$true] %s351
          %354 = dma.hbm_to_vmem [thread:$0]  %s349, 64, %s352, %s340
        $region40: #{cnn_qnetwork_forward.1} parent=27 // pred_fallthru
          _
        // Predicated region
        $region41: #{cnn_qnetwork_forward.1} parent=27 // pred_check
          %p355 = pneg %p186
        $region42: #{cnn_qnetwork_forward.1} parent=27 // pred_check_branch
          %357 = sbr.rel (%p355) target = $region44
        $region43: #{cnn_qnetwork_forward.1} parent=27 // pred_region
          %s358 = sand.u32 %s25, 1
          %s359 = scalar_lea.sflag [#allocation11], %s358
          %s360 = sand.u32 %s176, 1
          %s361 = smul.addr %s360, 256
          %s362 = scalar_lea.vmem [#allocation12], %s361
          %s364 = ssub.s32 4096, 4096
          %365 = vsyncadd %s359, %s364
          %s366 = smul.addr %s25, 64
          %s367 = smul.addr %s366, 64
          %s368 = scalar_lea.hbm %s6, %s367
          %s369 = sshll.u32 %s362, 4
          %s370 = int_to_ptr.vmem [resolvable:$true] %s369
          %375 = dma.hbm_to_vmem [thread:$0]  %s368, 4096, %s370, %s359, 64, 64, 4
        $region44: #{cnn_qnetwork_forward.1} parent=27 // pred_fallthru
          _
        // Predicated region
        $region45: #{cnn_qnetwork_forward.1} parent=27 // pred_check
          %p376 = pneg %p212
        $region46: #{cnn_qnetwork_forward.1} parent=27 // pred_check_branch
          %378 = sbr.rel (%p376) target = $region48
        $region47: #{cnn_qnetwork_forward.1} parent=27 // pred_region
          %s379 = sand.u32 %s202, 1
          %s380 = scalar_lea.sflag [#allocation14], %s379
          %s381 = sand.u32 %s202, 1
          %s382 = scalar_lea.vmem [#allocation13], %s381
          %s384 = ssub.s32 16, 16
          %385 = vsyncadd %s380, %s384
          %s386 = smul.addr %s25, 16
          %s387 = scalar_lea.hbm %s7, %s386
          %s389 = sshll.u32 %s382, 4
          %s390 = int_to_ptr.vmem [resolvable:$true] %s389
          %392 = dma.hbm_to_vmem [thread:$0]  %s387, 16, %s390, %s380
        $region48: #{cnn_qnetwork_forward.1} parent=27 // pred_fallthru
          _
      $region28: #{cnn_qnetwork_forward.1} parent=5 // pred_fallthru
        _
      %p393 = scmp.le.s32.totalorder 1, %s25
      %p394 = scmp.lt.s32.totalorder %s25, 3
      %p395 = pnand %p393, %p394
      %p396 = pneg %p395
      // Predicated region
      $region49: #{cnn_qnetwork_forward.1} parent=5 // pred_check
        _
      $region50: #{cnn_qnetwork_forward.1} parent=5 // pred_check_branch
        %398 = sbr.rel (%p395) target = $region52
      $region51: #{cnn_qnetwork_forward.1} parent=5 // pred_region
        %s399 = ssub.s32 %s25, 1
        // Predicated region
        $region53: #{cnn_qnetwork_forward.1} parent=51 // pred_check
          %p400 = pneg %p46
        $region54: #{cnn_qnetwork_forward.1} parent=51 // pred_check_branch
          %402 = sbr.rel (%p400) target = $region56
        $region55: #{cnn_qnetwork_forward.1} parent=51 // pred_region
          %403 = dma.done [#allocation3], 32
        $region56: #{cnn_qnetwork_forward.1} parent=51 // pred_fallthru
          _
        // Predicated region
        $region57: #{cnn_qnetwork_forward.1} parent=51 // pred_check
          %p404 = pneg %p67
        $region58: #{cnn_qnetwork_forward.1} parent=51 // pred_check_branch
          %406 = sbr.rel (%p404) target = $region60
        $region59: #{cnn_qnetwork_forward.1} parent=51 // pred_region
          %407 = dma.done [#allocation5], 1600
        $region60: #{cnn_qnetwork_forward.1} parent=51 // pred_fallthru
          _
        // Predicated region
        $region61: #{cnn_qnetwork_forward.1} parent=51 // pred_check
          %p408 = pneg %p88
        $region62: #{cnn_qnetwork_forward.1} parent=51 // pred_check_branch
          %410 = sbr.rel (%p408) target = $region64
        $region63: #{cnn_qnetwork_forward.1} parent=51 // pred_region
          %411 = dma.done [#allocation5], 400
        $region64: #{cnn_qnetwork_forward.1} parent=51 // pred_fallthru
          _
        %s412 = sand.u32 %s30, 1
        %s413 = scalar_lea.sflag [#allocation8], %s412
        %s414 = sand.u32 %s101, 1
        %s415 = smul.addr %s414, 3200
        %s416 = scalar_lea.vmem [#allocation7], %s415
        // Predicated region
        $region65: #{cnn_qnetwork_forward.1} parent=51 // pred_check
          %p417 = pneg %p114
        $region66: #{cnn_qnetwork_forward.1} parent=51 // pred_check_branch
          %419 = sbr.rel (%p417) target = $region68
        $region67: #{cnn_qnetwork_forward.1} parent=51 // pred_region
          %420 = dma.done %s413, 51200
        $region68: #{cnn_qnetwork_forward.1} parent=51 // pred_fallthru
          _
        %s421 = sand.u32 %s30, 1
        %s422 = scalar_lea.sflag [#allocation8], %s421
        %s423 = sand.u32 %s127, 1
        %s424 = smul.addr %s423, 4
        %s425 = scalar_lea.vmem [#allocation9], %s424
        // Predicated region
        $region69: #{cnn_qnetwork_forward.1} parent=51 // pred_check
          %p426 = pneg %p140
        $region70: #{cnn_qnetwork_forward.1} parent=51 // pred_check_branch
          %428 = sbr.rel (%p426) target = $region72
        $region71: #{cnn_qnetwork_forward.1} parent=51 // pred_region
          %429 = dma.done %s422, 64
        $region72: #{cnn_qnetwork_forward.1} parent=51 // pred_fallthru
          _
        %s430 = sand.u32 %s30, 1
        %s431 = scalar_lea.sflag [#allocation11], %s430
        %s432 = sand.u32 %s153, 1
        %s433 = smul.addr %s432, 4
        %s434 = scalar_lea.vmem [#allocation10], %s433
        // Predicated region
        $region73: #{cnn_qnetwork_forward.1} parent=51 // pred_check
          %p435 = pneg %p166
        $region74: #{cnn_qnetwork_forward.1} parent=51 // pred_check_branch
          %437 = sbr.rel (%p435) target = $region76
        $region75: #{cnn_qnetwork_forward.1} parent=51 // pred_region
          %438 = dma.done %s431, 64
        $region76: #{cnn_qnetwork_forward.1} parent=51 // pred_fallthru
          _
        %s439 = sand.u32 %s30, 1
        %s440 = scalar_lea.sflag [#allocation11], %s439
        %s441 = sand.u32 %s179, 1
        %s442 = smul.addr %s441, 256
        %s443 = scalar_lea.vmem [#allocation12], %s442
        // Predicated region
        $region77: #{cnn_qnetwork_forward.1} parent=51 // pred_check
          %p444 = pneg %p192
        $region78: #{cnn_qnetwork_forward.1} parent=51 // pred_check_branch
          %446 = sbr.rel (%p444) target = $region80
        $region79: #{cnn_qnetwork_forward.1} parent=51 // pred_region
          %447 = dma.done %s440, 4096
        $region80: #{cnn_qnetwork_forward.1} parent=51 // pred_fallthru
          _
        %s448 = sand.u32 %s205, 1
        %s449 = scalar_lea.sflag [#allocation14], %s448
        %s450 = sand.u32 %s205, 1
        %s451 = scalar_lea.vmem [#allocation13], %s450
        // Predicated region
        $region81: #{cnn_qnetwork_forward.1} parent=51 // pred_check
          %p452 = pneg %p218
        $region82: #{cnn_qnetwork_forward.1} parent=51 // pred_check_branch
          %454 = sbr.rel (%p452) target = $region84
        $region83: #{cnn_qnetwork_forward.1} parent=51 // pred_region
          %455 = dma.done %s449, 16
        $region84: #{cnn_qnetwork_forward.1} parent=51 // pred_fallthru
          _
        %p456 = pneg %p46
        %p457 = pneg %p43
        %p458 = pneg %p67
        %p459 = pneg %p64
        %p460 = pneg %p88
        %p461 = pneg %p85
        %s462 = sand.u32 %s30, 1
        %s463 = scalar_lea.sflag [#allocation8], %s462
        %s464 = sand.u32 %s101, 1
        %s465 = smul.addr %s464, 3200
        %s466 = scalar_lea.vmem [#allocation7], %s465
        %p467 = pneg %p114
        %p468 = pneg %p111
        %s469 = sand.u32 %s30, 1
        %s470 = scalar_lea.sflag [#allocation8], %s469
        %s471 = sand.u32 %s127, 1
        %s472 = smul.addr %s471, 4
        %s473 = scalar_lea.vmem [#allocation9], %s472
        %p474 = pneg %p140
        %p475 = pneg %p137
        %s476 = sand.u32 %s30, 1
        %s477 = scalar_lea.sflag [#allocation11], %s476
        %s478 = sand.u32 %s153, 1
        %s479 = smul.addr %s478, 4
        %s480 = scalar_lea.vmem [#allocation10], %s479
        %p481 = pneg %p166
        %p482 = pneg %p163
        %s483 = sand.u32 %s30, 1
        %s484 = scalar_lea.sflag [#allocation11], %s483
        %s485 = sand.u32 %s179, 1
        %s486 = smul.addr %s485, 256
        %s487 = scalar_lea.vmem [#allocation12], %s486
        %p488 = pneg %p192
        %p489 = pneg %p189
        %s490 = sand.u32 %s205, 1
        %s491 = scalar_lea.sflag [#allocation14], %s490
        %s492 = sand.u32 %s205, 1
        %s493 = scalar_lea.vmem [#allocation13], %s492
        %p494 = pneg %p218
        %p495 = pneg %p215
        %p496 = pneg %p244
        %p497 = pneg %p241
        %p498 = scmp.lt.s32.totalorder %s30, 1
        %s499 = scalar_select %p498, %s30, 1
        %s500 = smul.addr %s499, 2
        %s501 = scalar_lea.vmem %s8, %s500
        %s502 = smul.u32 4, %s30
        %s503 = smul.u32 4, %s30
        %s504 = smul.u32 4, %s30
        %p505 = scmp.lt.s32.totalorder %s30, 1
        %s506 = scalar_select %p505, %s30, 1
        %s507 = smul.addr %s506, 2
        %s508 = scalar_lea.vmem %s8, %s507
        %v510 = vld [vmem:[#allocation2] sm:$0x3]
        %v511 = vld [vmem:[#allocation4] sm:$0xff]
        %v512 = vld [vmem:[#allocation4 + $0x8] sm:$0xff]
        %v513 = vld [vmem:[#allocation4 + $0x10] sm:$0xff]
        %v514 = vld [vmem:[#allocation4 + $0x18] sm:$0xff]
        %v515 = vld [vmem:[#allocation4 + $0x20] sm:$0xff]
        %v516 = vld [vmem:[#allocation4 + $0x28] sm:$0xff]
        %v517 = vld [vmem:[#allocation4 + $0x30] sm:$0xff]
        %v518 = vld [vmem:[#allocation4 + $0x38] sm:$0xff]
        %v519 = vld [vmem:[#allocation4 + $0x40] sm:$0xff]
        %v520 = vld [vmem:[#allocation4 + $0x48] sm:$0xff]
        %v521 = vld [vmem:[#allocation4 + $0x50] sm:$0xff]
        %v522 = vld [vmem:[#allocation4 + $0x58] sm:$0xff]
        %v523 = vld [vmem:[#allocation4 + $0x60] sm:$0xf]
        %v524 = vld [vmem:[#allocation6] sm:$0xff]
        %v525 = vld [vmem:[#allocation6 + $0x8] sm:$0xff]
        %v526 = vld [vmem:[#allocation6 + $0x10] sm:$0xff]
        %v527 = vld [vmem:[#allocation6 + $0x18] sm:$0x1]
        %v532 = vlaneseq
        %v533 = vshrl.u32 %v532, 7
        %v534 = vsub.s32 0, %v533
        %v535 = vrot.slane %v524, %v534
        %v536 = vlaneseq
        %v537 = vshrl.u32 %v536, 7
        %v538 = vsub.s32 1, %v537
        %v539 = vrot.slane %v524, %v538
        %v540 = vlaneseq
        %v541 = vshrl.u32 %v540, 7
        %v542 = vsub.s32 2, %v541
        %v543 = vrot.slane %v524, %v542
        %v544 = vlaneseq
        %v545 = vshrl.u32 %v544, 7
        %v546 = vsub.s32 3, %v545
        %v547 = vrot.slane %v524, %v546
        %v548 = vlaneseq
        %v549 = vshrl.u32 %v548, 7
        %v550 = vsub.s32 4, %v549
        %v551 = vrot.slane %v524, %v550
        %v552 = vlaneseq
        %v553 = vshrl.u32 %v552, 7
        %v554 = vsub.s32 5, %v553
        %v555 = vrot.slane %v524, %v554
        %v556 = vlaneseq
        %v557 = vshrl.u32 %v556, 7
        %v558 = vsub.s32 6, %v557
        %v559 = vrot.slane %v524, %v558
        %v560 = vlaneseq
        %v561 = vshrl.u32 %v560, 7
        %v562 = vsub.s32 7, %v561
        %v563 = vrot.slane %v524, %v562
        %v564 = vlaneseq
        %v565 = vshrl.u32 %v564, 7
        %v566 = vsub.s32 0, %v565
        %v567 = vrot.slane %v525, %v566
        %v568 = vlaneseq
        %v569 = vshrl.u32 %v568, 7
        %v570 = vsub.s32 1, %v569
        %v571 = vrot.slane %v525, %v570
        %v572 = vlaneseq
        %v573 = vshrl.u32 %v572, 7
        %v574 = vsub.s32 2, %v573
        %v575 = vrot.slane %v525, %v574
        %v576 = vlaneseq
        %v577 = vshrl.u32 %v576, 7
        %v578 = vsub.s32 3, %v577
        %v579 = vrot.slane %v525, %v578
        %v580 = vlaneseq
        %v581 = vshrl.u32 %v580, 7
        %v582 = vsub.s32 4, %v581
        %v583 = vrot.slane %v525, %v582
        %v584 = vlaneseq
        %v585 = vshrl.u32 %v584, 7
        %v586 = vsub.s32 5, %v585
        %v587 = vrot.slane %v525, %v586
        %v588 = vlaneseq
        %v589 = vshrl.u32 %v588, 7
        %v590 = vsub.s32 6, %v589
        %v591 = vrot.slane %v525, %v590
        %v592 = vlaneseq
        %v593 = vshrl.u32 %v592, 7
        %v594 = vsub.s32 7, %v593
        %v595 = vrot.slane %v525, %v594
        %v596 = vlaneseq
        %v597 = vshrl.u32 %v596, 7
        %v598 = vsub.s32 0, %v597
        %v599 = vrot.slane %v526, %v598
        %v600 = vlaneseq
        %v601 = vshrl.u32 %v600, 7
        %v602 = vsub.s32 1, %v601
        %v603 = vrot.slane %v526, %v602
        %v604 = vlaneseq
        %v605 = vshrl.u32 %v604, 7
        %v606 = vsub.s32 2, %v605
        %v607 = vrot.slane %v526, %v606
        %v608 = vlaneseq
        %v609 = vshrl.u32 %v608, 7
        %v610 = vsub.s32 3, %v609
        %v611 = vrot.slane %v526, %v610
        %v612 = vlaneseq
        %v613 = vshrl.u32 %v612, 7
        %v614 = vsub.s32 4, %v613
        %v615 = vrot.slane %v526, %v614
        %v616 = vlaneseq
        %v617 = vshrl.u32 %v616, 7
        %v618 = vsub.s32 5, %v617
        %v619 = vrot.slane %v526, %v618
        %v620 = vlaneseq
        %v621 = vshrl.u32 %v620, 7
        %v622 = vsub.s32 6, %v621
        %v623 = vrot.slane %v526, %v622
        %v624 = vlaneseq
        %v625 = vshrl.u32 %v624, 7
        %v626 = vsub.s32 7, %v625
        %v627 = vrot.slane %v526, %v626
        %v628 = vlaneseq
        %v629 = vshrl.u32 %v628, 7
        %v630 = vsub.s32 0, %v629
        %v631 = vrot.slane %v527, %v630
        %v670 = vcombine.high %v511, %v511
        %v671 = vcombine.high %v512, %v512
        %v672 = vcombine.high %v513, %v513
        %v673 = vcombine.high %v514, %v514
        %v674 = vcombine.high %v515, %v515
        %v675 = vcombine.high %v516, %v516
        %v676 = vcombine.high %v517, %v517
        %v677 = vcombine.high %v518, %v518
        %v678 = vcombine.high %v519, %v519
        %v679 = vcombine.high %v520, %v520
        %v680 = vcombine.high %v521, %v521
        %v681 = vcombine.high %v522, %v522
        %vm682 = vcmask 31744
        %v684 = vsel %vm682, %v510, 0
        %vm686 = vcmask 1043456
        %v687 = vsel %vm686, %v511, 0
        %v689 = vsel %vm686, %v670, 0
        %v691 = vsel %vm686, %v512, 0
        %v693 = vsel %vm686, %v671, 0
        %v695 = vsel %vm686, %v513, 0
        %v697 = vsel %vm686, %v672, 0
        %v699 = vsel %vm686, %v514, 0
        %v701 = vsel %vm686, %v673, 0
        %v703 = vsel %vm686, %v515, 0
        %v705 = vsel %vm686, %v674, 0
        %v707 = vsel %vm686, %v516, 0
        %v709 = vsel %vm686, %v675, 0
        %v711 = vsel %vm686, %v517, 0
        %v713 = vsel %vm686, %v676, 0
        %v715 = vsel %vm686, %v518, 0
        %v717 = vsel %vm686, %v677, 0
        %v719 = vsel %vm686, %v519, 0
        %v721 = vsel %vm686, %v678, 0
        %v723 = vsel %vm686, %v520, 0
        %v725 = vsel %vm686, %v679, 0
        %v727 = vsel %vm686, %v521, 0
        %v729 = vsel %vm686, %v680, 0
        %v731 = vsel %vm686, %v522, 0
        %v733 = vsel %vm686, %v681, 0
        %v735 = vsel %vm686, %v523, 0
        %737 = vmatprep.subr.mxu0 %v689
        %738 = vmatpush1.msra.mxu0 %v687
        %739 = vmatprep.subr.mxu0 0.0
        %740 = vmatpush1.msra.mxu0 0.0
        %741 = vmatprep.subr.mxu0 0.0
        %742 = vmatpush1.msra.mxu0 0.0
        %743 = vmatprep.subr.mxu0 0.0
        %744 = vmatpush1.msra.mxu0 0.0
        %745 = vmatprep.subr.mxu0 0.0
        %746 = vmatpush1.msra.mxu0 0.0
        %747 = vmatprep.subr.mxu0 0.0
        %748 = vmatpush1.msra.mxu0 0.0
        %749 = vmatprep.subr.mxu0 0.0
        %750 = vmatpush1.msra.mxu0 0.0
        %751 = vmatprep.subr.mxu0 0.0
        %752 = vmatpush1.msra.mxu0 0.0
        %753 = vmatprep.subr.mxu0 0.0
        %754 = vmatpush1.msra.mxu0 0.0
        %755 = vmatprep.subr.mxu0 0.0
        %756 = vmatpush1.msra.mxu0 0.0
        %757 = vmatprep.subr.mxu0 0.0
        %758 = vmatpush1.msra.mxu0 0.0
        %759 = vmatprep.subr.mxu0 0.0
        %760 = vmatpush1.msra.mxu0 0.0
        %761 = vmatprep.subr.mxu0 0.0
        %762 = vmatpush1.msra.mxu0 0.0
        %763 = vmatprep.subr.mxu0 0.0
        %764 = vmatpush1.msra.mxu0 0.0
        %765 = vmatprep.subr.mxu0 0.0
        %766 = vmatpush1.msra.mxu0 0.0
        %767 = vmatprep.subr.mxu0 0.0
        %768 = vmatpush1.msra.mxu0 0.0
        %769 = vmatprep.subr.mxu0 0.0
        %770 = vmatpush1.msra.mxu0 0.0
        %771 = vmatprep.subr.mxu0 0.0
        %772 = vmatpush1.msra.mxu0 0.0
        %773 = vmatprep.subr.mxu0 0.0
        %774 = vmatpush1.msra.mxu0 0.0
        %775 = vmatprep.subr.mxu0 0.0
        %776 = vmatpush1.msra.mxu0 0.0
        %777 = vmatprep.subr.mxu0 0.0
        %778 = vmatpush1.msra.mxu0 0.0
        %779 = vmatprep.subr.mxu0 0.0
        %780 = vmatpush1.msra.mxu0 0.0
        %781 = vmatprep.subr.mxu0 0.0
        %782 = vmatpush1.msra.mxu0 0.0
        %783 = vmatprep.subr.mxu0 0.0
        %784 = vmatpush1.msra.mxu0 0.0
        %785 = vmatprep.subr.mxu0 0.0
        %786 = vmatpush1.msra.mxu0 0.0
        %787 = vmatprep.subr.mxu0 0.0
        %788 = vmatpush1.msra.mxu0 0.0
        %789 = vmatprep.subr.mxu0 0.0
        %790 = vmatpush1.msra.mxu0 0.0
        %791 = vmatprep.subr.mxu0 0.0
        %792 = vmatpush1.msra.mxu0 0.0
        %793 = vmatprep.subr.mxu0 0.0
        %794 = vmatpush1.msra.mxu0 0.0
        %795 = vmatprep.subr.mxu0 0.0
        %796 = vmatpush1.msra.mxu0 0.0
        %797 = vmatprep.subr.mxu0 0.0
        %798 = vmatpush1.msra.mxu0 0.0
        %799 = vmatprep.subr.mxu0 0.0
        %800 = vmatpush1.msra.mxu0 0.0
        %801 = vmatprep.mubr.f32.mxu0 0.0
        %802 = vmatmul.mubr.f32.gmra.mrb[0].mxu0 %v684
        %v803 = vpop.f32.mrb[0].mxu0
        %v804 = vadd.f32 %v535, %v803
        %v805 = vpop.f32.mrb[0].mxu0
        %v806 = vadd.f32 %v539, %v805
        %807 = vdwg.mxu0
        %808 = vmatprep.subr.mxu0 %v693
        %809 = vmatpush1.msra.mxu0 %v691
        %810 = vmatprep.subr.mxu0 0.0
        %811 = vmatpush1.msra.mxu0 0.0
        %812 = vmatprep.subr.mxu0 0.0
        %813 = vmatpush1.msra.mxu0 0.0
        %814 = vmatprep.subr.mxu0 0.0
        %815 = vmatpush1.msra.mxu0 0.0
        %816 = vmatprep.subr.mxu0 0.0
        %817 = vmatpush1.msra.mxu0 0.0
        %818 = vmatprep.subr.mxu0 0.0
        %819 = vmatpush1.msra.mxu0 0.0
        %820 = vmatprep.subr.mxu0 0.0
        %821 = vmatpush1.msra.mxu0 0.0
        %822 = vmatprep.subr.mxu0 0.0
        %823 = vmatpush1.msra.mxu0 0.0
        %824 = vmatprep.subr.mxu0 0.0
        %825 = vmatpush1.msra.mxu0 0.0
        %826 = vmatprep.subr.mxu0 0.0
        %827 = vmatpush1.msra.mxu0 0.0
        %828 = vmatprep.subr.mxu0 0.0
        %829 = vmatpush1.msra.mxu0 0.0
        %830 = vmatprep.subr.mxu0 0.0
        %831 = vmatpush1.msra.mxu0 0.0
        %832 = vmatprep.subr.mxu0 0.0
        %833 = vmatpush1.msra.mxu0 0.0
        %834 = vmatprep.subr.mxu0 0.0
        %835 = vmatpush1.msra.mxu0 0.0
        %836 = vmatprep.subr.mxu0 0.0
        %837 = vmatpush1.msra.mxu0 0.0
        %838 = vmatprep.subr.mxu0 0.0
        %839 = vmatpush1.msra.mxu0 0.0
        %840 = vmatprep.subr.mxu0 0.0
        %841 = vmatpush1.msra.mxu0 0.0
        %842 = vmatprep.subr.mxu0 0.0
        %843 = vmatpush1.msra.mxu0 0.0
        %844 = vmatprep.subr.mxu0 0.0
        %845 = vmatpush1.msra.mxu0 0.0
        %846 = vmatprep.subr.mxu0 0.0
        %847 = vmatpush1.msra.mxu0 0.0
        %848 = vmatprep.subr.mxu0 0.0
        %849 = vmatpush1.msra.mxu0 0.0
        %850 = vmatprep.subr.mxu0 0.0
        %851 = vmatpush1.msra.mxu0 0.0
        %852 = vmatprep.subr.mxu0 0.0
        %853 = vmatpush1.msra.mxu0 0.0
        %854 = vmatprep.subr.mxu0 0.0
        %855 = vmatpush1.msra.mxu0 0.0
        %856 = vmatprep.subr.mxu0 0.0
        %857 = vmatpush1.msra.mxu0 0.0
        %858 = vmatprep.subr.mxu0 0.0
        %859 = vmatpush1.msra.mxu0 0.0
        %860 = vmatprep.subr.mxu0 0.0
        %861 = vmatpush1.msra.mxu0 0.0
        %862 = vmatprep.subr.mxu0 0.0
        %863 = vmatpush1.msra.mxu0 0.0
        %864 = vmatprep.subr.mxu0 0.0
        %865 = vmatpush1.msra.mxu0 0.0
        %866 = vmatprep.subr.mxu0 0.0
        %867 = vmatpush1.msra.mxu0 0.0
        %868 = vmatprep.subr.mxu0 0.0
        %869 = vmatpush1.msra.mxu0 0.0
        %870 = vmatprep.subr.mxu0 0.0
        %871 = vmatpush1.msra.mxu0 0.0
        %872 = vmatprep.mubr.f32.mxu0 0.0
        %873 = vmatmul.mubr.f32.gmra.mrb[0].mxu0 %v684
        %v874 = vpop.f32.mrb[0].mxu0
        %v875 = vadd.f32 %v543, %v874
        %v876 = vpop.f32.mrb[0].mxu0
        %v877 = vadd.f32 %v547, %v876
        %878 = vdwg.mxu0
        %879 = vmatprep.subr.mxu0 %v697
        %880 = vmatpush1.msra.mxu0 %v695
        %881 = vmatprep.subr.mxu0 0.0
        %882 = vmatpush1.msra.mxu0 0.0
        %883 = vmatprep.subr.mxu0 0.0
        %884 = vmatpush1.msra.mxu0 0.0
        %885 = vmatprep.subr.mxu0 0.0
        %886 = vmatpush1.msra.mxu0 0.0
        %887 = vmatprep.subr.mxu0 0.0
        %888 = vmatpush1.msra.mxu0 0.0
        %889 = vmatprep.subr.mxu0 0.0
        %890 = vmatpush1.msra.mxu0 0.0
        %891 = vmatprep.subr.mxu0 0.0
        %892 = vmatpush1.msra.mxu0 0.0
        %893 = vmatprep.subr.mxu0 0.0
        %894 = vmatpush1.msra.mxu0 0.0
        %895 = vmatprep.subr.mxu0 0.0
        %896 = vmatpush1.msra.mxu0 0.0
        %897 = vmatprep.subr.mxu0 0.0
        %898 = vmatpush1.msra.mxu0 0.0
        %899 = vmatprep.subr.mxu0 0.0
        %900 = vmatpush1.msra.mxu0 0.0
        %901 = vmatprep.subr.mxu0 0.0
        %902 = vmatpush1.msra.mxu0 0.0
        %903 = vmatprep.subr.mxu0 0.0
        %904 = vmatpush1.msra.mxu0 0.0
        %905 = vmatprep.subr.mxu0 0.0
        %906 = vmatpush1.msra.mxu0 0.0
        %907 = vmatprep.subr.mxu0 0.0
        %908 = vmatpush1.msra.mxu0 0.0
        %909 = vmatprep.subr.mxu0 0.0
        %910 = vmatpush1.msra.mxu0 0.0
        %911 = vmatprep.subr.mxu0 0.0
        %912 = vmatpush1.msra.mxu0 0.0
        %913 = vmatprep.subr.mxu0 0.0
        %914 = vmatpush1.msra.mxu0 0.0
        %915 = vmatprep.subr.mxu0 0.0
        %916 = vmatpush1.msra.mxu0 0.0
        %917 = vmatprep.subr.mxu0 0.0
        %918 = vmatpush1.msra.mxu0 0.0
        %919 = vmatprep.subr.mxu0 0.0
        %920 = vmatpush1.msra.mxu0 0.0
        %921 = vmatprep.subr.mxu0 0.0
        %922 = vmatpush1.msra.mxu0 0.0
        %923 = vmatprep.subr.mxu0 0.0
        %924 = vmatpush1.msra.mxu0 0.0
        %925 = vmatprep.subr.mxu0 0.0
        %926 = vmatpush1.msra.mxu0 0.0
        %927 = vmatprep.subr.mxu0 0.0
        %928 = vmatpush1.msra.mxu0 0.0
        %929 = vmatprep.subr.mxu0 0.0
        %930 = vmatpush1.msra.mxu0 0.0
        %931 = vmatprep.subr.mxu0 0.0
        %932 = vmatpush1.msra.mxu0 0.0
        %933 = vmatprep.subr.mxu0 0.0
        %934 = vmatpush1.msra.mxu0 0.0
        %935 = vmatprep.subr.mxu0 0.0
        %936 = vmatpush1.msra.mxu0 0.0
        %937 = vmatprep.subr.mxu0 0.0
        %938 = vmatpush1.msra.mxu0 0.0
        %939 = vmatprep.subr.mxu0 0.0
        %940 = vmatpush1.msra.mxu0 0.0
        %941 = vmatprep.subr.mxu0 0.0
        %942 = vmatpush1.msra.mxu0 0.0
        %943 = vmatprep.mubr.f32.mxu0 0.0
        %944 = vmatmul.mubr.f32.gmra.mrb[0].mxu0 %v684
        %v945 = vpop.f32.mrb[0].mxu0
        %v946 = vadd.f32 %v551, %v945
        %v947 = vpop.f32.mrb[0].mxu0
        %v948 = vadd.f32 %v555, %v947
        %949 = vdwg.mxu0
        %950 = vmatprep.subr.mxu0 %v701
        %951 = vmatpush1.msra.mxu0 %v699
        %952 = vmatprep.subr.mxu0 0.0
        %953 = vmatpush1.msra.mxu0 0.0
        %954 = vmatprep.subr.mxu0 0.0
        %955 = vmatpush1.msra.mxu0 0.0
        %956 = vmatprep.subr.mxu0 0.0
        %957 = vmatpush1.msra.mxu0 0.0
        %958 = vmatprep.subr.mxu0 0.0
        %959 = vmatpush1.msra.mxu0 0.0
        %960 = vmatprep.subr.mxu0 0.0
        %961 = vmatpush1.msra.mxu0 0.0
        %962 = vmatprep.subr.mxu0 0.0
        %963 = vmatpush1.msra.mxu0 0.0
        %964 = vmatprep.subr.mxu0 0.0
        %965 = vmatpush1.msra.mxu0 0.0
        %966 = vmatprep.subr.mxu0 0.0
        %967 = vmatpush1.msra.mxu0 0.0
        %968 = vmatprep.subr.mxu0 0.0
        %969 = vmatpush1.msra.mxu0 0.0
        %970 = vmatprep.subr.mxu0 0.0
        %971 = vmatpush1.msra.mxu0 0.0
        %972 = vmatprep.subr.mxu0 0.0
        %973 = vmatpush1.msra.mxu0 0.0
        %974 = vmatprep.subr.mxu0 0.0
        %975 = vmatpush1.msra.mxu0 0.0
        %976 = vmatprep.subr.mxu0 0.0
        %977 = vmatpush1.msra.mxu0 0.0
        %978 = vmatprep.subr.mxu0 0.0
        %979 = vmatpush1.msra.mxu0 0.0
        %980 = vmatprep.subr.mxu0 0.0
        %981 = vmatpush1.msra.mxu0 0.0
        %982 = vmatprep.subr.mxu0 0.0
        %983 = vmatpush1.msra.mxu0 0.0
        %984 = vmatprep.subr.mxu0 0.0
        %985 = vmatpush1.msra.mxu0 0.0
        %986 = vmatprep.subr.mxu0 0.0
        %987 = vmatpush1.msra.mxu0 0.0
        %988 = vmatprep.subr.mxu0 0.0
        %989 = vmatpush1.msra.mxu0 0.0
        %990 = vmatprep.subr.mxu0 0.0
        %991 = vmatpush1.msra.mxu0 0.0
        %992 = vmatprep.subr.mxu0 0.0
        %993 = vmatpush1.msra.mxu0 0.0
        %994 = vmatprep.subr.mxu0 0.0
        %995 = vmatpush1.msra.mxu0 0.0
        %996 = vmatprep.subr.mxu0 0.0
        %997 = vmatpush1.msra.mxu0 0.0
        %998 = vmatprep.subr.mxu0 0.0
        %999 = vmatpush1.msra.mxu0 0.0
        %1000 = vmatprep.subr.mxu0 0.0
        %1001 = vmatpush1.msra.mxu0 0.0
        %1002 = vmatprep.subr.mxu0 0.0
        %1003 = vmatpush1.msra.mxu0 0.0
        %1004 = vmatprep.subr.mxu0 0.0
        %1005 = vmatpush1.msra.mxu0 0.0
        %1006 = vmatprep.subr.mxu0 0.0
        %1007 = vmatpush1.msra.mxu0 0.0
        %1008 = vmatprep.subr.mxu0 0.0
        %1009 = vmatpush1.msra.mxu0 0.0
        %1010 = vmatprep.subr.mxu0 0.0
        %1011 = vmatpush1.msra.mxu0 0.0
        %1012 = vmatprep.subr.mxu0 0.0
        %1013 = vmatpush1.msra.mxu0 0.0
        %1014 = vmatprep.mubr.f32.mxu0 0.0
        %1015 = vmatmul.mubr.f32.gmra.mrb[0].mxu0 %v684
        %v1016 = vpop.f32.mrb[0].mxu0
        %v1017 = vadd.f32 %v559, %v1016
        %v1018 = vpop.f32.mrb[0].mxu0
        %v1019 = vadd.f32 %v563, %v1018
        %1020 = vdwg.mxu0
        %1021 = vmatprep.subr.mxu0 %v705
        %1022 = vmatpush1.msra.mxu0 %v703
        %1023 = vmatprep.subr.mxu0 0.0
        %1024 = vmatpush1.msra.mxu0 0.0
        %1025 = vmatprep.subr.mxu0 0.0
        %1026 = vmatpush1.msra.mxu0 0.0
        %1027 = vmatprep.subr.mxu0 0.0
        %1028 = vmatpush1.msra.mxu0 0.0
        %1029 = vmatprep.subr.mxu0 0.0
        %1030 = vmatpush1.msra.mxu0 0.0
        %1031 = vmatprep.subr.mxu0 0.0
        %1032 = vmatpush1.msra.mxu0 0.0
        %1033 = vmatprep.subr.mxu0 0.0
        %1034 = vmatpush1.msra.mxu0 0.0
        %1035 = vmatprep.subr.mxu0 0.0
        %1036 = vmatpush1.msra.mxu0 0.0
        %1037 = vmatprep.subr.mxu0 0.0
        %1038 = vmatpush1.msra.mxu0 0.0
        %1039 = vmatprep.subr.mxu0 0.0
        %1040 = vmatpush1.msra.mxu0 0.0
        %1041 = vmatprep.subr.mxu0 0.0
        %1042 = vmatpush1.msra.mxu0 0.0
        %1043 = vmatprep.subr.mxu0 0.0
        %1044 = vmatpush1.msra.mxu0 0.0
        %1045 = vmatprep.subr.mxu0 0.0
        %1046 = vmatpush1.msra.mxu0 0.0
        %1047 = vmatprep.subr.mxu0 0.0
        %1048 = vmatpush1.msra.mxu0 0.0
        %1049 = vmatprep.subr.mxu0 0.0
        %1050 = vmatpush1.msra.mxu0 0.0
        %1051 = vmatprep.subr.mxu0 0.0
        %1052 = vmatpush1.msra.mxu0 0.0
        %1053 = vmatprep.subr.mxu0 0.0
        %1054 = vmatpush1.msra.mxu0 0.0
        %1055 = vmatprep.subr.mxu0 0.0
        %1056 = vmatpush1.msra.mxu0 0.0
        %1057 = vmatprep.subr.mxu0 0.0
        %1058 = vmatpush1.msra.mxu0 0.0
        %1059 = vmatprep.subr.mxu0 0.0
        %1060 = vmatpush1.msra.mxu0 0.0
        %1061 = vmatprep.subr.mxu0 0.0
        %1062 = vmatpush1.msra.mxu0 0.0
        %1063 = vmatprep.subr.mxu0 0.0
        %1064 = vmatpush1.msra.mxu0 0.0
        %1065 = vmatprep.subr.mxu0 0.0
        %1066 = vmatpush1.msra.mxu0 0.0
        %1067 = vmatprep.subr.mxu0 0.0
        %1068 = vmatpush1.msra.mxu0 0.0
        %1069 = vmatprep.subr.mxu0 0.0
        %1070 = vmatpush1.msra.mxu0 0.0
        %1071 = vmatprep.subr.mxu0 0.0
        %1072 = vmatpush1.msra.mxu0 0.0
        %1073 = vmatprep.subr.mxu0 0.0
        %1074 = vmatpush1.msra.mxu0 0.0
        %1075 = vmatprep.subr.mxu0 0.0
        %1076 = vmatpush1.msra.mxu0 0.0
        %1077 = vmatprep.subr.mxu0 0.0
        %1078 = vmatpush1.msra.mxu0 0.0
        %1079 = vmatprep.subr.mxu0 0.0
        %1080 = vmatpush1.msra.mxu0 0.0
        %1081 = vmatprep.subr.mxu0 0.0
        %1082 = vmatpush1.msra.mxu0 0.0
        %1083 = vmatprep.subr.mxu0 0.0
        %1084 = vmatpush1.msra.mxu0 0.0
        %1085 = vmatprep.mubr.f32.mxu0 0.0
        %1086 = vmatmul.mubr.f32.gmra.mrb[0].mxu0 %v684
        %v1087 = vpop.f32.mrb[0].mxu0
        %v1088 = vadd.f32 %v567, %v1087
        %v1089 = vpop.f32.mrb[0].mxu0
        %v1090 = vadd.f32 %v571, %v1089
        %1091 = vdwg.mxu0
        %1092 = vmatprep.subr.mxu0 %v709
        %1093 = vmatpush1.msra.mxu0 %v707
        %1094 = vmatprep.subr.mxu0 0.0
        %1095 = vmatpush1.msra.mxu0 0.0
        %1096 = vmatprep.subr.mxu0 0.0
        %1097 = vmatpush1.msra.mxu0 0.0
        %1098 = vmatprep.subr.mxu0 0.0
        %1099 = vmatpush1.msra.mxu0 0.0
        %1100 = vmatprep.subr.mxu0 0.0
        %1101 = vmatpush1.msra.mxu0 0.0
        %1102 = vmatprep.subr.mxu0 0.0
        %1103 = vmatpush1.msra.mxu0 0.0
        %1104 = vmatprep.subr.mxu0 0.0
        %1105 = vmatpush1.msra.mxu0 0.0
        %1106 = vmatprep.subr.mxu0 0.0
        %1107 = vmatpush1.msra.mxu0 0.0
        %1108 = vmatprep.subr.mxu0 0.0
        %1109 = vmatpush1.msra.mxu0 0.0
        %1110 = vmatprep.subr.mxu0 0.0
        %1111 = vmatpush1.msra.mxu0 0.0
        %1112 = vmatprep.subr.mxu0 0.0
        %1113 = vmatpush1.msra.mxu0 0.0
        %1114 = vmatprep.subr.mxu0 0.0
        %1115 = vmatpush1.msra.mxu0 0.0
        %1116 = vmatprep.subr.mxu0 0.0
        %1117 = vmatpush1.msra.mxu0 0.0
        %1118 = vmatprep.subr.mxu0 0.0
        %1119 = vmatpush1.msra.mxu0 0.0
        %1120 = vmatprep.subr.mxu0 0.0
        %1121 = vmatpush1.msra.mxu0 0.0
        %1122 = vmatprep.subr.mxu0 0.0
        %1123 = vmatpush1.msra.mxu0 0.0
        %1124 = vmatprep.subr.mxu0 0.0
        %1125 = vmatpush1.msra.mxu0 0.0
        %1126 = vmatprep.subr.mxu0 0.0
        %1127 = vmatpush1.msra.mxu0 0.0
        %1128 = vmatprep.subr.mxu0 0.0
        %1129 = vmatpush1.msra.mxu0 0.0
        %1130 = vmatprep.subr.mxu0 0.0
        %1131 = vmatpush1.msra.mxu0 0.0
        %1132 = vmatprep.subr.mxu0 0.0
        %1133 = vmatpush1.msra.mxu0 0.0
        %1134 = vmatprep.subr.mxu0 0.0
        %1135 = vmatpush1.msra.mxu0 0.0
        %1136 = vmatprep.subr.mxu0 0.0
        %1137 = vmatpush1.msra.mxu0 0.0
        %1138 = vmatprep.subr.mxu0 0.0
        %1139 = vmatpush1.msra.mxu0 0.0
        %1140 = vmatprep.subr.mxu0 0.0
        %1141 = vmatpush1.msra.mxu0 0.0
        %1142 = vmatprep.subr.mxu0 0.0
        %1143 = vmatpush1.msra.mxu0 0.0
        %1144 = vmatprep.subr.mxu0 0.0
        %1145 = vmatpush1.msra.mxu0 0.0
        %1146 = vmatprep.subr.mxu0 0.0
        %1147 = vmatpush1.msra.mxu0 0.0
        %1148 = vmatprep.subr.mxu0 0.0
        %1149 = vmatpush1.msra.mxu0 0.0
        %1150 = vmatprep.subr.mxu0 0.0
        %1151 = vmatpush1.msra.mxu0 0.0
        %1152 = vmatprep.subr.mxu0 0.0
        %1153 = vmatpush1.msra.mxu0 0.0
        %1154 = vmatprep.subr.mxu0 0.0
        %1155 = vmatpush1.msra.mxu0 0.0
        %1156 = vmatprep.mubr.f32.mxu0 0.0
        %1157 = vmatmul.mubr.f32.gmra.mrb[0].mxu0 %v684
        %v1158 = vpop.f32.mrb[0].mxu0
        %v1159 = vadd.f32 %v575, %v1158
        %v1160 = vpop.f32.mrb[0].mxu0
        %v1161 = vadd.f32 %v579, %v1160
        %1162 = vdwg.mxu0
        %1163 = vmatprep.subr.mxu0 %v713
        %1164 = vmatpush1.msra.mxu0 %v711
        %1165 = vmatprep.subr.mxu0 0.0
        %1166 = vmatpush1.msra.mxu0 0.0
        %1167 = vmatprep.subr.mxu0 0.0
        %1168 = vmatpush1.msra.mxu0 0.0
        %1169 = vmatprep.subr.mxu0 0.0
        %1170 = vmatpush1.msra.mxu0 0.0
        %1171 = vmatprep.subr.mxu0 0.0
        %1172 = vmatpush1.msra.mxu0 0.0
        %1173 = vmatprep.subr.mxu0 0.0
        %1174 = vmatpush1.msra.mxu0 0.0
        %1175 = vmatprep.subr.mxu0 0.0
        %1176 = vmatpush1.msra.mxu0 0.0
        %1177 = vmatprep.subr.mxu0 0.0
        %1178 = vmatpush1.msra.mxu0 0.0
        %1179 = vmatprep.subr.mxu0 0.0
        %1180 = vmatpush1.msra.mxu0 0.0
        %1181 = vmatprep.subr.mxu0 0.0
        %1182 = vmatpush1.msra.mxu0 0.0
        %1183 = vmatprep.subr.mxu0 0.0
        %1184 = vmatpush1.msra.mxu0 0.0
        %1185 = vmatprep.subr.mxu0 0.0
        %1186 = vmatpush1.msra.mxu0 0.0
        %1187 = vmatprep.subr.mxu0 0.0
        %1188 = vmatpush1.msra.mxu0 0.0
        %1189 = vmatprep.subr.mxu0 0.0
        %1190 = vmatpush1.msra.mxu0 0.0
        %1191 = vmatprep.subr.mxu0 0.0
        %1192 = vmatpush1.msra.mxu0 0.0
        %1193 = vmatprep.subr.mxu0 0.0
        %1194 = vmatpush1.msra.mxu0 0.0
        %1195 = vmatprep.subr.mxu0 0.0
        %1196 = vmatpush1.msra.mxu0 0.0
        %1197 = vmatprep.subr.mxu0 0.0
        %1198 = vmatpush1.msra.mxu0 0.0
        %1199 = vmatprep.subr.mxu0 0.0
        %1200 = vmatpush1.msra.mxu0 0.0
        %1201 = vmatprep.subr.mxu0 0.0
        %1202 = vmatpush1.msra.mxu0 0.0
        %1203 = vmatprep.subr.mxu0 0.0
        %1204 = vmatpush1.msra.mxu0 0.0
        %1205 = vmatprep.subr.mxu0 0.0
        %1206 = vmatpush1.msra.mxu0 0.0
        %1207 = vmatprep.subr.mxu0 0.0
        %1208 = vmatpush1.msra.mxu0 0.0
        %1209 = vmatprep.subr.mxu0 0.0
        %1210 = vmatpush1.msra.mxu0 0.0
        %1211 = vmatprep.subr.mxu0 0.0
        %1212 = vmatpush1.msra.mxu0 0.0
        %1213 = vmatprep.subr.mxu0 0.0
        %1214 = vmatpush1.msra.mxu0 0.0
        %1215 = vmatprep.subr.mxu0 0.0
        %1216 = vmatpush1.msra.mxu0 0.0
        %1217 = vmatprep.subr.mxu0 0.0
        %1218 = vmatpush1.msra.mxu0 0.0
        %1219 = vmatprep.subr.mxu0 0.0
        %1220 = vmatpush1.msra.mxu0 0.0
        %1221 = vmatprep.subr.mxu0 0.0
        %1222 = vmatpush1.msra.mxu0 0.0
        %1223 = vmatprep.subr.mxu0 0.0
        %1224 = vmatpush1.msra.mxu0 0.0
        %1225 = vmatprep.subr.mxu0 0.0
        %1226 = vmatpush1.msra.mxu0 0.0
        %1227 = vmatprep.mubr.f32.mxu0 0.0
        %1228 = vmatmul.mubr.f32.gmra.mrb[0].mxu0 %v684
        %v1229 = vpop.f32.mrb[0].mxu0
        %v1230 = vadd.f32 %v583, %v1229
        %v1231 = vpop.f32.mrb[0].mxu0
        %v1232 = vadd.f32 %v587, %v1231
        %1233 = vdwg.mxu0
        %1234 = vmatprep.subr.mxu0 %v717
        %1235 = vmatpush1.msra.mxu0 %v715
        %1236 = vmatprep.subr.mxu0 0.0
        %1237 = vmatpush1.msra.mxu0 0.0
        %1238 = vmatprep.subr.mxu0 0.0
        %1239 = vmatpush1.msra.mxu0 0.0
        %1240 = vmatprep.subr.mxu0 0.0
        %1241 = vmatpush1.msra.mxu0 0.0
        %1242 = vmatprep.subr.mxu0 0.0
        %1243 = vmatpush1.msra.mxu0 0.0
        %1244 = vmatprep.subr.mxu0 0.0
        %1245 = vmatpush1.msra.mxu0 0.0
        %1246 = vmatprep.subr.mxu0 0.0
        %1247 = vmatpush1.msra.mxu0 0.0
        %1248 = vmatprep.subr.mxu0 0.0
        %1249 = vmatpush1.msra.mxu0 0.0
        %1250 = vmatprep.subr.mxu0 0.0
        %1251 = vmatpush1.msra.mxu0 0.0
        %1252 = vmatprep.subr.mxu0 0.0
        %1253 = vmatpush1.msra.mxu0 0.0
        %1254 = vmatprep.subr.mxu0 0.0
        %1255 = vmatpush1.msra.mxu0 0.0
        %1256 = vmatprep.subr.mxu0 0.0
        %1257 = vmatpush1.msra.mxu0 0.0
        %1258 = vmatprep.subr.mxu0 0.0
        %1259 = vmatpush1.msra.mxu0 0.0
        %1260 = vmatprep.subr.mxu0 0.0
        %1261 = vmatpush1.msra.mxu0 0.0
        %1262 = vmatprep.subr.mxu0 0.0
        %1263 = vmatpush1.msra.mxu0 0.0
        %1264 = vmatprep.subr.mxu0 0.0
        %1265 = vmatpush1.msra.mxu0 0.0
        %1266 = vmatprep.subr.mxu0 0.0
        %1267 = vmatpush1.msra.mxu0 0.0
        %1268 = vmatprep.subr.mxu0 0.0
        %1269 = vmatpush1.msra.mxu0 0.0
        %1270 = vmatprep.subr.mxu0 0.0
        %1271 = vmatpush1.msra.mxu0 0.0
        %1272 = vmatprep.subr.mxu0 0.0
        %1273 = vmatpush1.msra.mxu0 0.0
        %1274 = vmatprep.subr.mxu0 0.0
        %1275 = vmatpush1.msra.mxu0 0.0
        %1276 = vmatprep.subr.mxu0 0.0
        %1277 = vmatpush1.msra.mxu0 0.0
        %1278 = vmatprep.subr.mxu0 0.0
        %1279 = vmatpush1.msra.mxu0 0.0
        %1280 = vmatprep.subr.mxu0 0.0
        %1281 = vmatpush1.msra.mxu0 0.0
        %1282 = vmatprep.subr.mxu0 0.0
        %1283 = vmatpush1.msra.mxu0 0.0
        %1284 = vmatprep.subr.mxu0 0.0
        %1285 = vmatpush1.msra.mxu0 0.0
        %1286 = vmatprep.subr.mxu0 0.0
        %1287 = vmatpush1.msra.mxu0 0.0
        %1288 = vmatprep.subr.mxu0 0.0
        %1289 = vmatpush1.msra.mxu0 0.0
        %1290 = vmatprep.subr.mxu0 0.0
        %1291 = vmatpush1.msra.mxu0 0.0
        %1292 = vmatprep.subr.mxu0 0.0
        %1293 = vmatpush1.msra.mxu0 0.0
        %1294 = vmatprep.subr.mxu0 0.0
        %1295 = vmatpush1.msra.mxu0 0.0
        %1296 = vmatprep.subr.mxu0 0.0
        %1297 = vmatpush1.msra.mxu0 0.0
        %1298 = vmatprep.mubr.f32.mxu0 0.0
        %1299 = vmatmul.mubr.f32.gmra.mrb[0].mxu0 %v684
        %v1300 = vpop.f32.mrb[0].mxu0
        %v1301 = vadd.f32 %v591, %v1300
        %v1302 = vpop.f32.mrb[0].mxu0
        %v1303 = vadd.f32 %v595, %v1302
        %1304 = vdwg.mxu0
        %1305 = vmatprep.subr.mxu0 %v721
        %1306 = vmatpush1.msra.mxu0 %v719
        %1307 = vmatprep.subr.mxu0 0.0
        %1308 = vmatpush1.msra.mxu0 0.0
        %1309 = vmatprep.subr.mxu0 0.0
        %1310 = vmatpush1.msra.mxu0 0.0
        %1311 = vmatprep.subr.mxu0 0.0
        %1312 = vmatpush1.msra.mxu0 0.0
        %1313 = vmatprep.subr.mxu0 0.0
        %1314 = vmatpush1.msra.mxu0 0.0
        %1315 = vmatprep.subr.mxu0 0.0
        %1316 = vmatpush1.msra.mxu0 0.0
        %1317 = vmatprep.subr.mxu0 0.0
        %1318 = vmatpush1.msra.mxu0 0.0
        %1319 = vmatprep.subr.mxu0 0.0
        %1320 = vmatpush1.msra.mxu0 0.0
        %1321 = vmatprep.subr.mxu0 0.0
        %1322 = vmatpush1.msra.mxu0 0.0
        %1323 = vmatprep.subr.mxu0 0.0
        %1324 = vmatpush1.msra.mxu0 0.0
        %1325 = vmatprep.subr.mxu0 0.0
        %1326 = vmatpush1.msra.mxu0 0.0
        %1327 = vmatprep.subr.mxu0 0.0
        %1328 = vmatpush1.msra.mxu0 0.0
        %1329 = vmatprep.subr.mxu0 0.0
        %1330 = vmatpush1.msra.mxu0 0.0
        %1331 = vmatprep.subr.mxu0 0.0
        %1332 = vmatpush1.msra.mxu0 0.0
        %1333 = vmatprep.subr.mxu0 0.0
        %1334 = vmatpush1.msra.mxu0 0.0
        %1335 = vmatprep.subr.mxu0 0.0
        %1336 = vmatpush1.msra.mxu0 0.0
        %1337 = vmatprep.subr.mxu0 0.0
        %1338 = vmatpush1.msra.mxu0 0.0
        %1339 = vmatprep.subr.mxu0 0.0
        %1340 = vmatpush1.msra.mxu0 0.0
        %1341 = vmatprep.subr.mxu0 0.0
        %1342 = vmatpush1.msra.mxu0 0.0
        %1343 = vmatprep.subr.mxu0 0.0
        %1344 = vmatpush1.msra.mxu0 0.0
        %1345 = vmatprep.subr.mxu0 0.0
        %1346 = vmatpush1.msra.mxu0 0.0
        %1347 = vmatprep.subr.mxu0 0.0
        %1348 = vmatpush1.msra.mxu0 0.0
        %1349 = vmatprep.subr.mxu0 0.0
        %1350 = vmatpush1.msra.mxu0 0.0
        %1351 = vmatprep.subr.mxu0 0.0
        %1352 = vmatpush1.msra.mxu0 0.0
        %1353 = vmatprep.subr.mxu0 0.0
        %1354 = vmatpush1.msra.mxu0 0.0
        %1355 = vmatprep.subr.mxu0 0.0
        %1356 = vmatpush1.msra.mxu0 0.0
        %1357 = vmatprep.subr.mxu0 0.0
        %1358 = vmatpush1.msra.mxu0 0.0
        %1359 = vmatprep.subr.mxu0 0.0
        %1360 = vmatpush1.msra.mxu0 0.0
        %1361 = vmatprep.subr.mxu0 0.0
        %1362 = vmatpush1.msra.mxu0 0.0
        %1363 = vmatprep.subr.mxu0 0.0
        %1364 = vmatpush1.msra.mxu0 0.0
        %1365 = vmatprep.subr.mxu0 0.0
        %1366 = vmatpush1.msra.mxu0 0.0
        %1367 = vmatprep.subr.mxu0 0.0
        %1368 = vmatpush1.msra.mxu0 0.0
        %1369 = vmatprep.mubr.f32.mxu0 0.0
        %1370 = vmatmul.mubr.f32.gmra.mrb[0].mxu0 %v684
        %v1371 = vpop.f32.mrb[0].mxu0
        %v1372 = vadd.f32 %v599, %v1371
        %v1373 = vpop.f32.mrb[0].mxu0
        %v1374 = vadd.f32 %v603, %v1373
        %1375 = vdwg.mxu0
        %1376 = vmatprep.subr.mxu0 %v725
        %1377 = vmatpush1.msra.mxu0 %v723
        %1378 = vmatprep.subr.mxu0 0.0
        %1379 = vmatpush1.msra.mxu0 0.0
        %1380 = vmatprep.subr.mxu0 0.0
        %1381 = vmatpush1.msra.mxu0 0.0
        %1382 = vmatprep.subr.mxu0 0.0
        %1383 = vmatpush1.msra.mxu0 0.0
        %1384 = vmatprep.subr.mxu0 0.0
        %1385 = vmatpush1.msra.mxu0 0.0
        %1386 = vmatprep.subr.mxu0 0.0
        %1387 = vmatpush1.msra.mxu0 0.0
        %1388 = vmatprep.subr.mxu0 0.0
        %1389 = vmatpush1.msra.mxu0 0.0
        %1390 = vmatprep.subr.mxu0 0.0
        %1391 = vmatpush1.msra.mxu0 0.0
        %1392 = vmatprep.subr.mxu0 0.0
        %1393 = vmatpush1.msra.mxu0 0.0
        %1394 = vmatprep.subr.mxu0 0.0
        %1395 = vmatpush1.msra.mxu0 0.0
        %1396 = vmatprep.subr.mxu0 0.0
        %1397 = vmatpush1.msra.mxu0 0.0
        %1398 = vmatprep.subr.mxu0 0.0
        %1399 = vmatpush1.msra.mxu0 0.0
        %1400 = vmatprep.subr.mxu0 0.0
        %1401 = vmatpush1.msra.mxu0 0.0
        %1402 = vmatprep.subr.mxu0 0.0
        %1403 = vmatpush1.msra.mxu0 0.0
        %1404 = vmatprep.subr.mxu0 0.0
        %1405 = vmatpush1.msra.mxu0 0.0
        %1406 = vmatprep.subr.mxu0 0.0
        %1407 = vmatpush1.msra.mxu0 0.0
        %1408 = vmatprep.subr.mxu0 0.0
        %1409 = vmatpush1.msra.mxu0 0.0
        %1410 = vmatprep.subr.mxu0 0.0
        %1411 = vmatpush1.msra.mxu0 0.0
        %1412 = vmatprep.subr.mxu0 0.0
        %1413 = vmatpush1.msra.mxu0 0.0
        %1414 = vmatprep.subr.mxu0 0.0
        %1415 = vmatpush1.msra.mxu0 0.0
        %1416 = vmatprep.subr.mxu0 0.0
        %1417 = vmatpush1.msra.mxu0 0.0
        %1418 = vmatprep.subr.mxu0 0.0
        %1419 = vmatpush1.msra.mxu0 0.0
        %1420 = vmatprep.subr.mxu0 0.0
        %1421 = vmatpush1.msra.mxu0 0.0
        %1422 = vmatprep.subr.mxu0 0.0
        %1423 = vmatpush1.msra.mxu0 0.0
        %1424 = vmatprep.subr.mxu0 0.0
        %1425 = vmatpush1.msra.mxu0 0.0
        %1426 = vmatprep.subr.mxu0 0.0
        %1427 = vmatpush1.msra.mxu0 0.0
        %1428 = vmatprep.subr.mxu0 0.0
        %1429 = vmatpush1.msra.mxu0 0.0
        %1430 = vmatprep.subr.mxu0 0.0
        %1431 = vmatpush1.msra.mxu0 0.0
        %1432 = vmatprep.subr.mxu0 0.0
        %1433 = vmatpush1.msra.mxu0 0.0
        %1434 = vmatprep.subr.mxu0 0.0
        %1435 = vmatpush1.msra.mxu0 0.0
        %1436 = vmatprep.subr.mxu0 0.0
        %1437 = vmatpush1.msra.mxu0 0.0
        %1438 = vmatprep.subr.mxu0 0.0
        %1439 = vmatpush1.msra.mxu0 0.0
        %1440 = vmatprep.mubr.f32.mxu0 0.0
        %1441 = vmatmul.mubr.f32.gmra.mrb[0].mxu0 %v684
        %v1442 = vpop.f32.mrb[0].mxu0
        %v1443 = vadd.f32 %v607, %v1442
        %v1444 = vpop.f32.mrb[0].mxu0
        %v1445 = vadd.f32 %v611, %v1444
        %1446 = vdwg.mxu0
        %1447 = vmatprep.subr.mxu0 %v729
        %1448 = vmatpush1.msra.mxu0 %v727
        %1449 = vmatprep.subr.mxu0 0.0
        %1450 = vmatpush1.msra.mxu0 0.0
        %1451 = vmatprep.subr.mxu0 0.0
        %1452 = vmatpush1.msra.mxu0 0.0
        %1453 = vmatprep.subr.mxu0 0.0
        %1454 = vmatpush1.msra.mxu0 0.0
        %1455 = vmatprep.subr.mxu0 0.0
        %1456 = vmatpush1.msra.mxu0 0.0
        %1457 = vmatprep.subr.mxu0 0.0
        %1458 = vmatpush1.msra.mxu0 0.0
        %1459 = vmatprep.subr.mxu0 0.0
        %1460 = vmatpush1.msra.mxu0 0.0
        %1461 = vmatprep.subr.mxu0 0.0
        %1462 = vmatpush1.msra.mxu0 0.0
        %1463 = vmatprep.subr.mxu0 0.0
        %1464 = vmatpush1.msra.mxu0 0.0
        %1465 = vmatprep.subr.mxu0 0.0
        %1466 = vmatpush1.msra.mxu0 0.0
        %1467 = vmatprep.subr.mxu0 0.0
        %1468 = vmatpush1.msra.mxu0 0.0
        %1469 = vmatprep.subr.mxu0 0.0
        %1470 = vmatpush1.msra.mxu0 0.0
        %1471 = vmatprep.subr.mxu0 0.0
        %1472 = vmatpush1.msra.mxu0 0.0
        %1473 = vmatprep.subr.mxu0 0.0
        %1474 = vmatpush1.msra.mxu0 0.0
        %1475 = vmatprep.subr.mxu0 0.0
        %1476 = vmatpush1.msra.mxu0 0.0
        %1477 = vmatprep.subr.mxu0 0.0
        %1478 = vmatpush1.msra.mxu0 0.0
        %1479 = vmatprep.subr.mxu0 0.0
        %1480 = vmatpush1.msra.mxu0 0.0
        %1481 = vmatprep.subr.mxu0 0.0
        %1482 = vmatpush1.msra.mxu0 0.0
        %1483 = vmatprep.subr.mxu0 0.0
        %1484 = vmatpush1.msra.mxu0 0.0
        %1485 = vmatprep.subr.mxu0 0.0
        %1486 = vmatpush1.msra.mxu0 0.0
        %1487 = vmatprep.subr.mxu0 0.0
        %1488 = vmatpush1.msra.mxu0 0.0
        %1489 = vmatprep.subr.mxu0 0.0
        %1490 = vmatpush1.msra.mxu0 0.0
        %1491 = vmatprep.subr.mxu0 0.0
        %1492 = vmatpush1.msra.mxu0 0.0
        %1493 = vmatprep.subr.mxu0 0.0
        %1494 = vmatpush1.msra.mxu0 0.0
        %1495 = vmatprep.subr.mxu0 0.0
        %1496 = vmatpush1.msra.mxu0 0.0
        %1497 = vmatprep.subr.mxu0 0.0
        %1498 = vmatpush1.msra.mxu0 0.0
        %1499 = vmatprep.subr.mxu0 0.0
        %1500 = vmatpush1.msra.mxu0 0.0
        %1501 = vmatprep.subr.mxu0 0.0
        %1502 = vmatpush1.msra.mxu0 0.0
        %1503 = vmatprep.subr.mxu0 0.0
        %1504 = vmatpush1.msra.mxu0 0.0
        %1505 = vmatprep.subr.mxu0 0.0
        %1506 = vmatpush1.msra.mxu0 0.0
        %1507 = vmatprep.subr.mxu0 0.0
        %1508 = vmatpush1.msra.mxu0 0.0
        %1509 = vmatprep.subr.mxu0 0.0
        %1510 = vmatpush1.msra.mxu0 0.0
        %1511 = vmatprep.mubr.f32.mxu0 0.0
        %1512 = vmatmul.mubr.f32.gmra.mrb[0].mxu0 %v684
        %v1513 = vpop.f32.mrb[0].mxu0
        %v1514 = vadd.f32 %v615, %v1513
        %v1515 = vpop.f32.mrb[0].mxu0
        %v1516 = vadd.f32 %v619, %v1515
        %1517 = vdwg.mxu0
        %1518 = vmatprep.subr.mxu0 %v733
        %1519 = vmatpush1.msra.mxu0 %v731
        %1520 = vmatprep.subr.mxu0 0.0
        %1521 = vmatpush1.msra.mxu0 0.0
        %1522 = vmatprep.subr.mxu0 0.0
        %1523 = vmatpush1.msra.mxu0 0.0
        %1524 = vmatprep.subr.mxu0 0.0
        %1525 = vmatpush1.msra.mxu0 0.0
        %1526 = vmatprep.subr.mxu0 0.0
        %1527 = vmatpush1.msra.mxu0 0.0
        %1528 = vmatprep.subr.mxu0 0.0
        %1529 = vmatpush1.msra.mxu0 0.0
        %1530 = vmatprep.subr.mxu0 0.0
        %1531 = vmatpush1.msra.mxu0 0.0
        %1532 = vmatprep.subr.mxu0 0.0
        %1533 = vmatpush1.msra.mxu0 0.0
        %1534 = vmatprep.subr.mxu0 0.0
        %1535 = vmatpush1.msra.mxu0 0.0
        %1536 = vmatprep.subr.mxu0 0.0
        %1537 = vmatpush1.msra.mxu0 0.0
        %1538 = vmatprep.subr.mxu0 0.0
        %1539 = vmatpush1.msra.mxu0 0.0
        %1540 = vmatprep.subr.mxu0 0.0
        %1541 = vmatpush1.msra.mxu0 0.0
        %1542 = vmatprep.subr.mxu0 0.0
        %1543 = vmatpush1.msra.mxu0 0.0
        %1544 = vmatprep.subr.mxu0 0.0
        %1545 = vmatpush1.msra.mxu0 0.0
        %1546 = vmatprep.subr.mxu0 0.0
        %1547 = vmatpush1.msra.mxu0 0.0
        %1548 = vmatprep.subr.mxu0 0.0
        %1549 = vmatpush1.msra.mxu0 0.0
        %1550 = vmatprep.subr.mxu0 0.0
        %1551 = vmatpush1.msra.mxu0 0.0
        %1552 = vmatprep.subr.mxu0 0.0
        %1553 = vmatpush1.msra.mxu0 0.0
        %1554 = vmatprep.subr.mxu0 0.0
        %1555 = vmatpush1.msra.mxu0 0.0
        %1556 = vmatprep.subr.mxu0 0.0
        %1557 = vmatpush1.msra.mxu0 0.0
        %1558 = vmatprep.subr.mxu0 0.0
        %1559 = vmatpush1.msra.mxu0 0.0
        %1560 = vmatprep.subr.mxu0 0.0
        %1561 = vmatpush1.msra.mxu0 0.0
        %1562 = vmatprep.subr.mxu0 0.0
        %1563 = vmatpush1.msra.mxu0 0.0
        %1564 = vmatprep.subr.mxu0 0.0
        %1565 = vmatpush1.msra.mxu0 0.0
        %1566 = vmatprep.subr.mxu0 0.0
        %1567 = vmatpush1.msra.mxu0 0.0
        %1568 = vmatprep.subr.mxu0 0.0
        %1569 = vmatpush1.msra.mxu0 0.0
        %1570 = vmatprep.subr.mxu0 0.0
        %1571 = vmatpush1.msra.mxu0 0.0
        %1572 = vmatprep.subr.mxu0 0.0
        %1573 = vmatpush1.msra.mxu0 0.0
        %1574 = vmatprep.subr.mxu0 0.0
        %1575 = vmatpush1.msra.mxu0 0.0
        %1576 = vmatprep.subr.mxu0 0.0
        %1577 = vmatpush1.msra.mxu0 0.0
        %1578 = vmatprep.subr.mxu0 0.0
        %1579 = vmatpush1.msra.mxu0 0.0
        %1580 = vmatprep.subr.mxu0 0.0
        %1581 = vmatpush1.msra.mxu0 0.0
        %1582 = vmatprep.mubr.f32.mxu0 0.0
        %1583 = vmatmul.mubr.f32.gmra.mrb[0].mxu0 %v684
        %v1584 = vpop.f32.mrb[0].mxu0
        %v1585 = vadd.f32 %v623, %v1584
        %v1586 = vpop.f32.mrb[0].mxu0
        %v1587 = vadd.f32 %v627, %v1586
        %1588 = vdwg.mxu0
        %1589 = vmatprep.subr.mxu0 0.0
        %1590 = vmatpush1.msra.mxu0 %v735
        %1591 = vmatprep.subr.mxu0 0.0
        %1592 = vmatpush1.msra.mxu0 0.0
        %1593 = vmatprep.subr.mxu0 0.0
        %1594 = vmatpush1.msra.mxu0 0.0
        %1595 = vmatprep.subr.mxu0 0.0
        %1596 = vmatpush1.msra.mxu0 0.0
        %1597 = vmatprep.subr.mxu0 0.0
        %1598 = vmatpush1.msra.mxu0 0.0
        %1599 = vmatprep.subr.mxu0 0.0
        %1600 = vmatpush1.msra.mxu0 0.0
        %1601 = vmatprep.subr.mxu0 0.0
        %1602 = vmatpush1.msra.mxu0 0.0
        %1603 = vmatprep.subr.mxu0 0.0
        %1604 = vmatpush1.msra.mxu0 0.0
        %1605 = vmatprep.subr.mxu0 0.0
        %1606 = vmatpush1.msra.mxu0 0.0
        %1607 = vmatprep.subr.mxu0 0.0
        %1608 = vmatpush1.msra.mxu0 0.0
        %1609 = vmatprep.subr.mxu0 0.0
        %1610 = vmatpush1.msra.mxu0 0.0
        %1611 = vmatprep.subr.mxu0 0.0
        %1612 = vmatpush1.msra.mxu0 0.0
        %1613 = vmatprep.subr.mxu0 0.0
        %1614 = vmatpush1.msra.mxu0 0.0
        %1615 = vmatprep.subr.mxu0 0.0
        %1616 = vmatpush1.msra.mxu0 0.0
        %1617 = vmatprep.subr.mxu0 0.0
        %1618 = vmatpush1.msra.mxu0 0.0
        %1619 = vmatprep.subr.mxu0 0.0
        %1620 = vmatpush1.msra.mxu0 0.0
        %1621 = vmatprep.subr.mxu0 0.0
        %1622 = vmatpush1.msra.mxu0 0.0
        %1623 = vmatprep.subr.mxu0 0.0
        %1624 = vmatpush1.msra.mxu0 0.0
        %1625 = vmatprep.subr.mxu0 0.0
        %1626 = vmatpush1.msra.mxu0 0.0
        %1627 = vmatprep.subr.mxu0 0.0
        %1628 = vmatpush1.msra.mxu0 0.0
        %1629 = vmatprep.subr.mxu0 0.0
        %1630 = vmatpush1.msra.mxu0 0.0
        %1631 = vmatprep.subr.mxu0 0.0
        %1632 = vmatpush1.msra.mxu0 0.0
        %1633 = vmatprep.subr.mxu0 0.0
        %1634 = vmatpush1.msra.mxu0 0.0
        %1635 = vmatprep.subr.mxu0 0.0
        %1636 = vmatpush1.msra.mxu0 0.0
        %1637 = vmatprep.subr.mxu0 0.0
        %1638 = vmatpush1.msra.mxu0 0.0
        %1639 = vmatprep.subr.mxu0 0.0
        %1640 = vmatpush1.msra.mxu0 0.0
        %1641 = vmatprep.subr.mxu0 0.0
        %1642 = vmatpush1.msra.mxu0 0.0
        %1643 = vmatprep.subr.mxu0 0.0
        %1644 = vmatpush1.msra.mxu0 0.0
        %1645 = vmatprep.subr.mxu0 0.0
        %1646 = vmatpush1.msra.mxu0 0.0
        %1647 = vmatprep.subr.mxu0 0.0
        %1648 = vmatpush1.msra.mxu0 0.0
        %1649 = vmatprep.subr.mxu0 0.0
        %1650 = vmatpush1.msra.mxu0 0.0
        %1651 = vmatprep.subr.mxu0 0.0
        %1652 = vmatpush1.msra.mxu0 0.0
        %1653 = vmatprep.mubr.f32.mxu0 0.0
        %1654 = vmatmul.mubr.f32.gmra.mrb[0].mxu0 %v684
        %v1655 = vpop.f32.mrb[0].mxu0
        %v1656 = vadd.f32 %v631, %v1655
        %v1657 = vpop.f32.mrb[0].mxu0
        %1658 = vdwg.mxu0
        %v1659 = vpack.c.bf16 %v804, %v804
        %v1660 = vpack.c.bf16 %v806, %v806
        %v1661 = vpack.c.bf16 %v875, %v875
        %v1662 = vpack.c.bf16 %v877, %v877
        %v1663 = vpack.c.bf16 %v946, %v946
        %v1664 = vpack.c.bf16 %v948, %v948
        %v1665 = vpack.c.bf16 %v1017, %v1017
        %v1666 = vpack.c.bf16 %v1019, %v1019
        %v1667 = vpack.c.bf16 %v1088, %v1088
        %v1668 = vpack.c.bf16 %v1090, %v1090
        %v1669 = vpack.c.bf16 %v1159, %v1159
        %v1670 = vpack.c.bf16 %v1161, %v1161
        %v1671 = vpack.c.bf16 %v1230, %v1230
        %v1672 = vpack.c.bf16 %v1232, %v1232
        %v1673 = vpack.c.bf16 %v1301, %v1301
        %v1674 = vpack.c.bf16 %v1303, %v1303
        %v1675 = vpack.c.bf16 %v1372, %v1372
        %v1676 = vpack.c.bf16 %v1374, %v1374
        %v1677 = vpack.c.bf16 %v1443, %v1443
        %v1678 = vpack.c.bf16 %v1445, %v1445
        %v1679 = vpack.c.bf16 %v1514, %v1514
        %v1680 = vpack.c.bf16 %v1516, %v1516
        %v1681 = vpack.c.bf16 %v1585, %v1585
        %v1682 = vpack.c.bf16 %v1587, %v1587
        %v1683 = vpack.c.bf16 %v1656, %v1656
        %v1684 = vld [vmem:[%s416] sm:$0xff]
        %v1685 = vld [vmem:[%s416 + $0x8] sm:$0xff]
        %v1686 = vld [vmem:[%s416 + $0x10] sm:$0xff]
        %v1687 = vld [vmem:[%s416 + $0x18] sm:$0xff]
        %v1688 = vld [vmem:[%s416 + $0x20] sm:$0xff]
        %v1689 = vld [vmem:[%s416 + $0x28] sm:$0xff]
        %v1690 = vld [vmem:[%s416 + $0x30] sm:$0xff]
        %v1691 = vld [vmem:[%s416 + $0x38] sm:$0xff]
        %v1692 = vld [vmem:[%s416 + $0x40] sm:$0xff]
        %v1693 = vld [vmem:[%s416 + $0x48] sm:$0xff]
        %v1694 = vld [vmem:[%s416 + $0x50] sm:$0xff]
        %v1695 = vld [vmem:[%s416 + $0x58] sm:$0xff]
        %v1696 = vld [vmem:[%s416 + $0x60] sm:$0xff]
        %v1697 = vld [vmem:[%s416 + $0x68] sm:$0xff]
        %v1698 = vld [vmem:[%s416 + $0x70] sm:$0xff]
        %v1699 = vld [vmem:[%s416 + $0x78] sm:$0xff]
        %v1700 = vld [vmem:[%s416 + $0x80] sm:$0xff]
        %v1701 = vld [vmem:[%s416 + $0x88] sm:$0xff]
        %v1702 = vld [vmem:[%s416 + $0x90] sm:$0xff]
        %v1703 = vld [vmem:[%s416 + $0x98] sm:$0xff]
        %v1704 = vld [vmem:[%s416 + $0xa0] sm:$0xff]
        %v1705 = vld [vmem:[%s416 + $0xa8] sm:$0xff]
        %v1706 = vld [vmem:[%s416 + $0xb0] sm:$0xff]
        %v1707 = vld [vmem:[%s416 + $0xb8] sm:$0xff]
        %v1708 = vld [vmem:[%s416 + $0xc0] sm:$0xff]
        %v1709 = vld [vmem:[%s416 + $0xc8] sm:$0xff]
        %v1710 = vld [vmem:[%s416 + $0xd0] sm:$0xff]
        %v1711 = vld [vmem:[%s416 + $0xd8] sm:$0xff]
        %v1712 = vld [vmem:[%s416 + $0xe0] sm:$0xff]
        %v1713 = vld [vmem:[%s416 + $0xe8] sm:$0xff]
        %v1714 = vld [vmem:[%s416 + $0xf0] sm:$0xff]
        %v1715 = vld [vmem:[%s416 + $0xf8] sm:$0xff]
        %v1716 = vld [vmem:[%s416 + $0x100] sm:$0xff]
        %v1717 = vld [vmem:[%s416 + $0x108] sm:$0xff]
        %v1718 = vld [vmem:[%s416 + $0x110] sm:$0xff]
        %v1719 = vld [vmem:[%s416 + $0x118] sm:$0xff]
        %v1720 = vld [vmem:[%s416 + $0x120] sm:$0xff]
        %v1721 = vld [vmem:[%s416 + $0x128] sm:$0xff]
        %v1722 = vld [vmem:[%s416 + $0x130] sm:$0xff]
        %v1723 = vld [vmem:[%s416 + $0x138] sm:$0xff]
        %v1724 = vld [vmem:[%s416 + $0x140] sm:$0xff]
        %v1725 = vld [vmem:[%s416 + $0x148] sm:$0xff]
        %v1726 = vld [vmem:[%s416 + $0x150] sm:$0xff]
        %v1727 = vld [vmem:[%s416 + $0x158] sm:$0xff]
        %v1728 = vld [vmem:[%s416 + $0x160] sm:$0xff]
        %v1729 = vld [vmem:[%s416 + $0x168] sm:$0xff]
        %v1730 = vld [vmem:[%s416 + $0x170] sm:$0xff]
        %v1731 = vld [vmem:[%s416 + $0x178] sm:$0xff]
        %v1732 = vld [vmem:[%s416 + $0x180] sm:$0xff]
        %v1733 = vld [vmem:[%s416 + $0x188] sm:$0xff]
        %v1734 = vld [vmem:[%s416 + $0x190] sm:$0xff]
        %v1735 = vld [vmem:[%s416 + $0x198] sm:$0xff]
        %v1736 = vld [vmem:[%s416 + $0x1a0] sm:$0xff]
        %v1737 = vld [vmem:[%s416 + $0x1a8] sm:$0xff]
        %v1738 = vld [vmem:[%s416 + $0x1b0] sm:$0xff]
        %v1739 = vld [vmem:[%s416 + $0x1b8] sm:$0xff]
        %v1740 = vld [vmem:[%s416 + $0x1c0] sm:$0xff]
        %v1741 = vld [vmem:[%s416 + $0x1c8] sm:$0xff]
        %v1742 = vld [vmem:[%s416 + $0x1d0] sm:$0xff]
        %v1743 = vld [vmem:[%s416 + $0x1d8] sm:$0xff]
        %v1744 = vld [vmem:[%s416 + $0x1e0] sm:$0xff]
        %v1745 = vld [vmem:[%s416 + $0x1e8] sm:$0xff]
        %v1746 = vld [vmem:[%s416 + $0x1f0] sm:$0xff]
        %v1747 = vld [vmem:[%s416 + $0x1f8] sm:$0xff]
        %v1748 = vld [vmem:[%s416 + $0x200] sm:$0xff]
        %v1749 = vld [vmem:[%s416 + $0x208] sm:$0xff]
        %v1750 = vld [vmem:[%s416 + $0x210] sm:$0xff]
        %v1751 = vld [vmem:[%s416 + $0x218] sm:$0xff]
        %v1752 = vld [vmem:[%s416 + $0x220] sm:$0xff]
        %v1753 = vld [vmem:[%s416 + $0x228] sm:$0xff]
        %v1754 = vld [vmem:[%s416 + $0x230] sm:$0xff]
        %v1755 = vld [vmem:[%s416 + $0x238] sm:$0xff]
        %v1756 = vld [vmem:[%s416 + $0x240] sm:$0xff]
        %v1757 = vld [vmem:[%s416 + $0x248] sm:$0xff]
        %v1758 = vld [vmem:[%s416 + $0x250] sm:$0xff]
        %v1759 = vld [vmem:[%s416 + $0x258] sm:$0xff]
        %v1760 = vld [vmem:[%s416 + $0x260] sm:$0xff]
        %v1761 = vld [vmem:[%s416 + $0x268] sm:$0xff]
        %v1762 = vld [vmem:[%s416 + $0x270] sm:$0xff]
        %v1763 = vld [vmem:[%s416 + $0x278] sm:$0xff]
        %v1764 = vld [vmem:[%s416 + $0x280] sm:$0xff]
        %v1765 = vld [vmem:[%s416 + $0x288] sm:$0xff]
        %v1766 = vld [vmem:[%s416 + $0x290] sm:$0xff]
        %v1767 = vld [vmem:[%s416 + $0x298] sm:$0xff]
        %v1768 = vld [vmem:[%s416 + $0x2a0] sm:$0xff]
        %v1769 = vld [vmem:[%s416 + $0x2a8] sm:$0xff]
        %v1770 = vld [vmem:[%s416 + $0x2b0] sm:$0xff]
        %v1771 = vld [vmem:[%s416 + $0x2b8] sm:$0xff]
        %v1772 = vld [vmem:[%s416 + $0x2c0] sm:$0xff]
        %v1773 = vld [vmem:[%s416 + $0x2c8] sm:$0xff]
        %v1774 = vld [vmem:[%s416 + $0x2d0] sm:$0xff]
        %v1775 = vld [vmem:[%s416 + $0x2d8] sm:$0xff]
        %v1776 = vld [vmem:[%s416 + $0x2e0] sm:$0xff]
        %v1777 = vld [vmem:[%s416 + $0x2e8] sm:$0xff]
        %v1778 = vld [vmem:[%s416 + $0x2f0] sm:$0xff]
        %v1779 = vld [vmem:[%s416 + $0x2f8] sm:$0xff]
        %v1780 = vld [vmem:[%s416 + $0x300] sm:$0xff]
        %v1781 = vld [vmem:[%s416 + $0x308] sm:$0xff]
        %v1782 = vld [vmem:[%s416 + $0x310] sm:$0xff]
        %v1783 = vld [vmem:[%s416 + $0x318] sm:$0xff]
        %v1784 = vld [vmem:[%s416 + $0x320] sm:$0xff]
        %v1785 = vld [vmem:[%s416 + $0x328] sm:$0xff]
        %v1786 = vld [vmem:[%s416 + $0x330] sm:$0xff]
        %v1787 = vld [vmem:[%s416 + $0x338] sm:$0xff]
        %v1788 = vld [vmem:[%s416 + $0x340] sm:$0xff]
        %v1789 = vld [vmem:[%s416 + $0x348] sm:$0xff]
        %v1790 = vld [vmem:[%s416 + $0x350] sm:$0xff]
        %v1791 = vld [vmem:[%s416 + $0x358] sm:$0xff]
        %v1792 = vld [vmem:[%s416 + $0x360] sm:$0xff]
        %v1793 = vld [vmem:[%s416 + $0x368] sm:$0xff]
        %v1794 = vld [vmem:[%s416 + $0x370] sm:$0xff]
        %v1795 = vld [vmem:[%s416 + $0x378] sm:$0xff]
        %v1796 = vld [vmem:[%s416 + $0x380] sm:$0xff]
        %v1797 = vld [vmem:[%s416 + $0x388] sm:$0xff]
        %v1798 = vld [vmem:[%s416 + $0x390] sm:$0xff]
        %v1799 = vld [vmem:[%s416 + $0x398] sm:$0xff]
        %v1800 = vld [vmem:[%s416 + $0x3a0] sm:$0xff]
        %v1801 = vld [vmem:[%s416 + $0x3a8] sm:$0xff]
        %v1802 = vld [vmem:[%s416 + $0x3b0] sm:$0xff]
        %v1803 = vld [vmem:[%s416 + $0x3b8] sm:$0xff]
        %v1804 = vld [vmem:[%s416 + $0x3c0] sm:$0xff]
        %v1805 = vld [vmem:[%s416 + $0x3c8] sm:$0xff]
        %v1806 = vld [vmem:[%s416 + $0x3d0] sm:$0xff]
        %v1807 = vld [vmem:[%s416 + $0x3d8] sm:$0xff]
        %v1808 = vld [vmem:[%s416 + $0x3e0] sm:$0xff]
        %v1809 = vld [vmem:[%s416 + $0x3e8] sm:$0xff]
        %v1810 = vld [vmem:[%s416 + $0x3f0] sm:$0xff]
        %v1811 = vld [vmem:[%s416 + $0x3f8] sm:$0xff]
        %v1812 = vld [vmem:[%s416 + $0x400] sm:$0xff]
        %v1813 = vld [vmem:[%s416 + $0x408] sm:$0xff]
        %v1814 = vld [vmem:[%s416 + $0x410] sm:$0xff]
        %v1815 = vld [vmem:[%s416 + $0x418] sm:$0xff]
        %v1816 = vld [vmem:[%s416 + $0x420] sm:$0xff]
        %v1817 = vld [vmem:[%s416 + $0x428] sm:$0xff]
        %v1818 = vld [vmem:[%s416 + $0x430] sm:$0xff]
        %v1819 = vld [vmem:[%s416 + $0x438] sm:$0xff]
        %v1820 = vld [vmem:[%s416 + $0x440] sm:$0xff]
        %v1821 = vld [vmem:[%s416 + $0x448] sm:$0xff]
        %v1822 = vld [vmem:[%s416 + $0x450] sm:$0xff]
        %v1823 = vld [vmem:[%s416 + $0x458] sm:$0xff]
        %v1824 = vld [vmem:[%s416 + $0x460] sm:$0xff]
        %v1825 = vld [vmem:[%s416 + $0x468] sm:$0xff]
        %v1826 = vld [vmem:[%s416 + $0x470] sm:$0xff]
        %v1827 = vld [vmem:[%s416 + $0x478] sm:$0xff]
        %v1828 = vld [vmem:[%s416 + $0x480] sm:$0xff]
        %v1829 = vld [vmem:[%s416 + $0x488] sm:$0xff]
        %v1830 = vld [vmem:[%s416 + $0x490] sm:$0xff]
        %v1831 = vld [vmem:[%s416 + $0x498] sm:$0xff]
        %v1832 = vld [vmem:[%s416 + $0x4a0] sm:$0xff]
        %v1833 = vld [vmem:[%s416 + $0x4a8] sm:$0xff]
        %v1834 = vld [vmem:[%s416 + $0x4b0] sm:$0xff]
        %v1835 = vld [vmem:[%s416 + $0x4b8] sm:$0xff]
        %v1836 = vld [vmem:[%s416 + $0x4c0] sm:$0xff]
        %v1837 = vld [vmem:[%s416 + $0x4c8] sm:$0xff]
        %v1838 = vld [vmem:[%s416 + $0x4d0] sm:$0xff]
        %v1839 = vld [vmem:[%s416 + $0x4d8] sm:$0xff]
        %v1840 = vld [vmem:[%s416 + $0x4e0] sm:$0xff]
        %v1841 = vld [vmem:[%s416 + $0x4e8] sm:$0xff]
        %v1842 = vld [vmem:[%s416 + $0x4f0] sm:$0xff]
        %v1843 = vld [vmem:[%s416 + $0x4f8] sm:$0xff]
        %v1844 = vld [vmem:[%s416 + $0x500] sm:$0xff]
        %v1845 = vld [vmem:[%s416 + $0x508] sm:$0xff]
        %v1846 = vld [vmem:[%s416 + $0x510] sm:$0xff]
        %v1847 = vld [vmem:[%s416 + $0x518] sm:$0xff]
        %v1848 = vld [vmem:[%s416 + $0x520] sm:$0xff]
        %v1849 = vld [vmem:[%s416 + $0x528] sm:$0xff]
        %v1850 = vld [vmem:[%s416 + $0x530] sm:$0xff]
        %v1851 = vld [vmem:[%s416 + $0x538] sm:$0xff]
        %v1852 = vld [vmem:[%s416 + $0x540] sm:$0xff]
        %v1853 = vld [vmem:[%s416 + $0x548] sm:$0xff]
        %v1854 = vld [vmem:[%s416 + $0x550] sm:$0xff]
        %v1855 = vld [vmem:[%s416 + $0x558] sm:$0xff]
        %v1856 = vld [vmem:[%s416 + $0x560] sm:$0xff]
        %v1857 = vld [vmem:[%s416 + $0x568] sm:$0xff]
        %v1858 = vld [vmem:[%s416 + $0x570] sm:$0xff]
        %v1859 = vld [vmem:[%s416 + $0x578] sm:$0xff]
        %v1860 = vld [vmem:[%s416 + $0x580] sm:$0xff]
        %v1861 = vld [vmem:[%s416 + $0x588] sm:$0xff]
        %v1862 = vld [vmem:[%s416 + $0x590] sm:$0xff]
        %v1863 = vld [vmem:[%s416 + $0x598] sm:$0xff]
        %v1864 = vld [vmem:[%s416 + $0x5a0] sm:$0xff]
        %v1865 = vld [vmem:[%s416 + $0x5a8] sm:$0xff]
        %v1866 = vld [vmem:[%s416 + $0x5b0] sm:$0xff]
        %v1867 = vld [vmem:[%s416 + $0x5b8] sm:$0xff]
        %v1868 = vld [vmem:[%s416 + $0x5c0] sm:$0xff]
        %v1869 = vld [vmem:[%s416 + $0x5c8] sm:$0xff]
        %v1870 = vld [vmem:[%s416 + $0x5d0] sm:$0xff]
        %v1871 = vld [vmem:[%s416 + $0x5d8] sm:$0xff]
        %v1872 = vld [vmem:[%s416 + $0x5e0] sm:$0xff]
        %v1873 = vld [vmem:[%s416 + $0x5e8] sm:$0xff]
        %v1874 = vld [vmem:[%s416 + $0x5f0] sm:$0xff]
        %v1875 = vld [vmem:[%s416 + $0x5f8] sm:$0xff]
        %v1876 = vld [vmem:[%s416 + $0x600] sm:$0xff]
        %v1877 = vld [vmem:[%s416 + $0x608] sm:$0xff]
        %v1878 = vld [vmem:[%s416 + $0x610] sm:$0xff]
        %v1879 = vld [vmem:[%s416 + $0x618] sm:$0xff]
        %v1880 = vld [vmem:[%s416 + $0x620] sm:$0xff]
        %v1881 = vld [vmem:[%s416 + $0x628] sm:$0xff]
        %v1882 = vld [vmem:[%s416 + $0x630] sm:$0xff]
        %v1883 = vld [vmem:[%s416 + $0x638] sm:$0xff]
        %v1884 = vld [vmem:[%s416 + $0x640] sm:$0xff]
        %v1885 = vld [vmem:[%s416 + $0x648] sm:$0xff]
        %v1886 = vld [vmem:[%s416 + $0x650] sm:$0xff]
        %v1887 = vld [vmem:[%s416 + $0x658] sm:$0xff]
        %v1888 = vld [vmem:[%s416 + $0x660] sm:$0xff]
        %v1889 = vld [vmem:[%s416 + $0x668] sm:$0xff]
        %v1890 = vld [vmem:[%s416 + $0x670] sm:$0xff]
        %v1891 = vld [vmem:[%s416 + $0x678] sm:$0xff]
        %v1892 = vld [vmem:[%s416 + $0x680] sm:$0xff]
        %v1893 = vld [vmem:[%s416 + $0x688] sm:$0xff]
        %v1894 = vld [vmem:[%s416 + $0x690] sm:$0xff]
        %v1895 = vld [vmem:[%s416 + $0x698] sm:$0xff]
        %v1896 = vld [vmem:[%s416 + $0x6a0] sm:$0xff]
        %v1897 = vld [vmem:[%s416 + $0x6a8] sm:$0xff]
        %v1898 = vld [vmem:[%s416 + $0x6b0] sm:$0xff]
        %v1899 = vld [vmem:[%s416 + $0x6b8] sm:$0xff]
        %v1900 = vld [vmem:[%s416 + $0x6c0] sm:$0xff]
        %v1901 = vld [vmem:[%s416 + $0x6c8] sm:$0xff]
        %v1902 = vld [vmem:[%s416 + $0x6d0] sm:$0xff]
        %v1903 = vld [vmem:[%s416 + $0x6d8] sm:$0xff]
        %v1904 = vld [vmem:[%s416 + $0x6e0] sm:$0xff]
        %v1905 = vld [vmem:[%s416 + $0x6e8] sm:$0xff]
        %v1906 = vld [vmem:[%s416 + $0x6f0] sm:$0xff]
        %v1907 = vld [vmem:[%s416 + $0x6f8] sm:$0xff]
        %v1908 = vld [vmem:[%s416 + $0x700] sm:$0xff]
        %v1909 = vld [vmem:[%s416 + $0x708] sm:$0xff]
        %v1910 = vld [vmem:[%s416 + $0x710] sm:$0xff]
        %v1911 = vld [vmem:[%s416 + $0x718] sm:$0xff]
        %v1912 = vld [vmem:[%s416 + $0x720] sm:$0xff]
        %v1913 = vld [vmem:[%s416 + $0x728] sm:$0xff]
        %v1914 = vld [vmem:[%s416 + $0x730] sm:$0xff]
        %v1915 = vld [vmem:[%s416 + $0x738] sm:$0xff]
        %v1916 = vld [vmem:[%s416 + $0x740] sm:$0xff]
        %v1917 = vld [vmem:[%s416 + $0x748] sm:$0xff]
        %v1918 = vld [vmem:[%s416 + $0x750] sm:$0xff]
        %v1919 = vld [vmem:[%s416 + $0x758] sm:$0xff]
        %v1920 = vld [vmem:[%s416 + $0x760] sm:$0xff]
        %v1921 = vld [vmem:[%s416 + $0x768] sm:$0xff]
        %v1922 = vld [vmem:[%s416 + $0x770] sm:$0xff]
        %v1923 = vld [vmem:[%s416 + $0x778] sm:$0xff]
        %v1924 = vld [vmem:[%s416 + $0x780] sm:$0xff]
        %v1925 = vld [vmem:[%s416 + $0x788] sm:$0xff]
        %v1926 = vld [vmem:[%s416 + $0x790] sm:$0xff]
        %v1927 = vld [vmem:[%s416 + $0x798] sm:$0xff]
        %v1928 = vld [vmem:[%s416 + $0x7a0] sm:$0xff]
        %v1929 = vld [vmem:[%s416 + $0x7a8] sm:$0xff]
        %v1930 = vld [vmem:[%s416 + $0x7b0] sm:$0xff]
        %v1931 = vld [vmem:[%s416 + $0x7b8] sm:$0xff]
        %v1932 = vld [vmem:[%s416 + $0x7c0] sm:$0xff]
        %v1933 = vld [vmem:[%s416 + $0x7c8] sm:$0xff]
        %v1934 = vld [vmem:[%s416 + $0x7d0] sm:$0xff]
        %v1935 = vld [vmem:[%s416 + $0x7d8] sm:$0xff]
        %v1936 = vld [vmem:[%s416 + $0x7e0] sm:$0xff]
        %v1937 = vld [vmem:[%s416 + $0x7e8] sm:$0xff]
        %v1938 = vld [vmem:[%s416 + $0x7f0] sm:$0xff]
        %v1939 = vld [vmem:[%s416 + $0x7f8] sm:$0xff]
        %v1940 = vld [vmem:[%s416 + $0x800] sm:$0xff]
        %v1941 = vld [vmem:[%s416 + $0x808] sm:$0xff]
        %v1942 = vld [vmem:[%s416 + $0x810] sm:$0xff]
        %v1943 = vld [vmem:[%s416 + $0x818] sm:$0xff]
        %v1944 = vld [vmem:[%s416 + $0x820] sm:$0xff]
        %v1945 = vld [vmem:[%s416 + $0x828] sm:$0xff]
        %v1946 = vld [vmem:[%s416 + $0x830] sm:$0xff]
        %v1947 = vld [vmem:[%s416 + $0x838] sm:$0xff]
        %v1948 = vld [vmem:[%s416 + $0x840] sm:$0xff]
        %v1949 = vld [vmem:[%s416 + $0x848] sm:$0xff]
        %v1950 = vld [vmem:[%s416 + $0x850] sm:$0xff]
        %v1951 = vld [vmem:[%s416 + $0x858] sm:$0xff]
        %v1952 = vld [vmem:[%s416 + $0x860] sm:$0xff]
        %v1953 = vld [vmem:[%s416 + $0x868] sm:$0xff]
        %v1954 = vld [vmem:[%s416 + $0x870] sm:$0xff]
        %v1955 = vld [vmem:[%s416 + $0x878] sm:$0xff]
        %v1956 = vld [vmem:[%s416 + $0x880] sm:$0xff]
        %v1957 = vld [vmem:[%s416 + $0x888] sm:$0xff]
        %v1958 = vld [vmem:[%s416 + $0x890] sm:$0xff]
        %v1959 = vld [vmem:[%s416 + $0x898] sm:$0xff]
        %v1960 = vld [vmem:[%s416 + $0x8a0] sm:$0xff]
        %v1961 = vld [vmem:[%s416 + $0x8a8] sm:$0xff]
        %v1962 = vld [vmem:[%s416 + $0x8b0] sm:$0xff]
        %v1963 = vld [vmem:[%s416 + $0x8b8] sm:$0xff]
        %v1964 = vld [vmem:[%s416 + $0x8c0] sm:$0xff]
        %v1965 = vld [vmem:[%s416 + $0x8c8] sm:$0xff]
        %v1966 = vld [vmem:[%s416 + $0x8d0] sm:$0xff]
        %v1967 = vld [vmem:[%s416 + $0x8d8] sm:$0xff]
        %v1968 = vld [vmem:[%s416 + $0x8e0] sm:$0xff]
        %v1969 = vld [vmem:[%s416 + $0x8e8] sm:$0xff]
        %v1970 = vld [vmem:[%s416 + $0x8f0] sm:$0xff]
        %v1971 = vld [vmem:[%s416 + $0x8f8] sm:$0xff]
        %v1972 = vld [vmem:[%s416 + $0x900] sm:$0xff]
        %v1973 = vld [vmem:[%s416 + $0x908] sm:$0xff]
        %v1974 = vld [vmem:[%s416 + $0x910] sm:$0xff]
        %v1975 = vld [vmem:[%s416 + $0x918] sm:$0xff]
        %v1976 = vld [vmem:[%s416 + $0x920] sm:$0xff]
        %v1977 = vld [vmem:[%s416 + $0x928] sm:$0xff]
        %v1978 = vld [vmem:[%s416 + $0x930] sm:$0xff]
        %v1979 = vld [vmem:[%s416 + $0x938] sm:$0xff]
        %v1980 = vld [vmem:[%s416 + $0x940] sm:$0xff]
        %v1981 = vld [vmem:[%s416 + $0x948] sm:$0xff]
        %v1982 = vld [vmem:[%s416 + $0x950] sm:$0xff]
        %v1983 = vld [vmem:[%s416 + $0x958] sm:$0xff]
        %v1984 = vld [vmem:[%s416 + $0x960] sm:$0xff]
        %v1985 = vld [vmem:[%s416 + $0x968] sm:$0xff]
        %v1986 = vld [vmem:[%s416 + $0x970] sm:$0xff]
        %v1987 = vld [vmem:[%s416 + $0x978] sm:$0xff]
        %v1988 = vld [vmem:[%s416 + $0x980] sm:$0xff]
        %v1989 = vld [vmem:[%s416 + $0x988] sm:$0xff]
        %v1990 = vld [vmem:[%s416 + $0x990] sm:$0xff]
        %v1991 = vld [vmem:[%s416 + $0x998] sm:$0xff]
        %v1992 = vld [vmem:[%s416 + $0x9a0] sm:$0xff]
        %v1993 = vld [vmem:[%s416 + $0x9a8] sm:$0xff]
        %v1994 = vld [vmem:[%s416 + $0x9b0] sm:$0xff]
        %v1995 = vld [vmem:[%s416 + $0x9b8] sm:$0xff]
        %v1996 = vld [vmem:[%s416 + $0x9c0] sm:$0xff]
        %v1997 = vld [vmem:[%s416 + $0x9c8] sm:$0xff]
        %v1998 = vld [vmem:[%s416 + $0x9d0] sm:$0xff]
        %v1999 = vld [vmem:[%s416 + $0x9d8] sm:$0xff]
        %v2000 = vld [vmem:[%s416 + $0x9e0] sm:$0xff]
        %v2001 = vld [vmem:[%s416 + $0x9e8] sm:$0xff]
        %v2002 = vld [vmem:[%s416 + $0x9f0] sm:$0xff]
        %v2003 = vld [vmem:[%s416 + $0x9f8] sm:$0xff]
        %v2004 = vld [vmem:[%s416 + $0xa00] sm:$0xff]
        %v2005 = vld [vmem:[%s416 + $0xa08] sm:$0xff]
        %v2006 = vld [vmem:[%s416 + $0xa10] sm:$0xff]
        %v2007 = vld [vmem:[%s416 + $0xa18] sm:$0xff]
        %v2008 = vld [vmem:[%s416 + $0xa20] sm:$0xff]
        %v2009 = vld [vmem:[%s416 + $0xa28] sm:$0xff]
        %v2010 = vld [vmem:[%s416 + $0xa30] sm:$0xff]
        %v2011 = vld [vmem:[%s416 + $0xa38] sm:$0xff]
        %v2012 = vld [vmem:[%s416 + $0xa40] sm:$0xff]
        %v2013 = vld [vmem:[%s416 + $0xa48] sm:$0xff]
        %v2014 = vld [vmem:[%s416 + $0xa50] sm:$0xff]
        %v2015 = vld [vmem:[%s416 + $0xa58] sm:$0xff]
        %v2016 = vld [vmem:[%s416 + $0xa60] sm:$0xff]
        %v2017 = vld [vmem:[%s416 + $0xa68] sm:$0xff]
        %v2018 = vld [vmem:[%s416 + $0xa70] sm:$0xff]
        %v2019 = vld [vmem:[%s416 + $0xa78] sm:$0xff]
        %v2020 = vld [vmem:[%s416 + $0xa80] sm:$0xff]
        %v2021 = vld [vmem:[%s416 + $0xa88] sm:$0xff]
        %v2022 = vld [vmem:[%s416 + $0xa90] sm:$0xff]
        %v2023 = vld [vmem:[%s416 + $0xa98] sm:$0xff]
        %v2024 = vld [vmem:[%s416 + $0xaa0] sm:$0xff]
        %v2025 = vld [vmem:[%s416 + $0xaa8] sm:$0xff]
        %v2026 = vld [vmem:[%s416 + $0xab0] sm:$0xff]
        %v2027 = vld [vmem:[%s416 + $0xab8] sm:$0xff]
        %v2028 = vld [vmem:[%s416 + $0xac0] sm:$0xff]
        %v2029 = vld [vmem:[%s416 + $0xac8] sm:$0xff]
        %v2030 = vld [vmem:[%s416 + $0xad0] sm:$0xff]
        %v2031 = vld [vmem:[%s416 + $0xad8] sm:$0xff]
        %v2032 = vld [vmem:[%s416 + $0xae0] sm:$0xff]
        %v2033 = vld [vmem:[%s416 + $0xae8] sm:$0xff]
        %v2034 = vld [vmem:[%s416 + $0xaf0] sm:$0xff]
        %v2035 = vld [vmem:[%s416 + $0xaf8] sm:$0xff]
        %v2036 = vld [vmem:[%s416 + $0xb00] sm:$0xff]
        %v2037 = vld [vmem:[%s416 + $0xb08] sm:$0xff]
        %v2038 = vld [vmem:[%s416 + $0xb10] sm:$0xff]
        %v2039 = vld [vmem:[%s416 + $0xb18] sm:$0xff]
        %v2040 = vld [vmem:[%s416 + $0xb20] sm:$0xff]
        %v2041 = vld [vmem:[%s416 + $0xb28] sm:$0xff]
        %v2042 = vld [vmem:[%s416 + $0xb30] sm:$0xff]
        %v2043 = vld [vmem:[%s416 + $0xb38] sm:$0xff]
        %v2044 = vld [vmem:[%s416 + $0xb40] sm:$0xff]
        %v2045 = vld [vmem:[%s416 + $0xb48] sm:$0xff]
        %v2046 = vld [vmem:[%s416 + $0xb50] sm:$0xff]
        %v2047 = vld [vmem:[%s416 + $0xb58] sm:$0xff]
        %v2048 = vld [vmem:[%s416 + $0xb60] sm:$0xff]
        %v2049 = vld [vmem:[%s416 + $0xb68] sm:$0xff]
        %v2050 = vld [vmem:[%s416 + $0xb70] sm:$0xff]
        %v2051 = vld [vmem:[%s416 + $0xb78] sm:$0xff]
        %v2052 = vld [vmem:[%s416 + $0xb80] sm:$0xff]
        %v2053 = vld [vmem:[%s416 + $0xb88] sm:$0xff]
        %v2054 = vld [vmem:[%s416 + $0xb90] sm:$0xff]
        %v2055 = vld [vmem:[%s416 + $0xb98] sm:$0xff]
        %v2056 = vld [vmem:[%s416 + $0xba0] sm:$0xff]
        %v2057 = vld [vmem:[%s416 + $0xba8] sm:$0xff]
        %v2058 = vld [vmem:[%s416 + $0xbb0] sm:$0xff]
        %v2059 = vld [vmem:[%s416 + $0xbb8] sm:$0xff]
        %v2060 = vld [vmem:[%s416 + $0xbc0] sm:$0xff]
        %v2061 = vld [vmem:[%s416 + $0xbc8] sm:$0xff]
        %v2062 = vld [vmem:[%s416 + $0xbd0] sm:$0xff]
        %v2063 = vld [vmem:[%s416 + $0xbd8] sm:$0xff]
        %v2064 = vld [vmem:[%s416 + $0xbe0] sm:$0xff]
        %v2065 = vld [vmem:[%s416 + $0xbe8] sm:$0xff]
        %v2066 = vld [vmem:[%s416 + $0xbf0] sm:$0xff]
        %v2067 = vld [vmem:[%s416 + $0xbf8] sm:$0xff]
        %v2068 = vld [vmem:[%s416 + $0xc00] sm:$0xff]
        %v2069 = vld [vmem:[%s416 + $0xc08] sm:$0xff]
        %v2070 = vld [vmem:[%s416 + $0xc10] sm:$0xff]
        %v2071 = vld [vmem:[%s416 + $0xc18] sm:$0xff]
        %v2072 = vld [vmem:[%s416 + $0xc20] sm:$0xff]
        %v2073 = vld [vmem:[%s416 + $0xc28] sm:$0xff]
        %v2074 = vld [vmem:[%s416 + $0xc30] sm:$0xff]
        %v2075 = vld [vmem:[%s416 + $0xc38] sm:$0xff]
        %v2076 = vld [vmem:[%s416 + $0xc40] sm:$0xff]
        %v2077 = vld [vmem:[%s416 + $0xc48] sm:$0xff]
        %v2078 = vld [vmem:[%s416 + $0xc50] sm:$0xff]
        %v2079 = vld [vmem:[%s416 + $0xc58] sm:$0xff]
        %v2080 = vld [vmem:[%s416 + $0xc60] sm:$0xff]
        %v2081 = vld [vmem:[%s416 + $0xc68] sm:$0xff]
        %v2082 = vld [vmem:[%s416 + $0xc70] sm:$0xff]
        %v2083 = vld [vmem:[%s416 + $0xc78] sm:$0xff]
        %v2084 = vunpack.c.l.s8.bf16 %v1684
        %v2085 = vunpack.c.l.s8.bf16 %v1685
        %v2086 = vunpack.c.l.s8.bf16 %v1686
        %v2087 = vunpack.c.l.s8.bf16 %v1687
        %v2088 = vunpack.c.h.s8.bf16 %v1684
        %v2089 = vunpack.c.h.s8.bf16 %v1685
        %v2090 = vunpack.c.h.s8.bf16 %v1686
        %v2091 = vunpack.c.h.s8.bf16 %v1687
        %v2092 = vunpack.c.l.s8.bf16 %v1688
        %v2093 = vunpack.c.l.s8.bf16 %v1689
        %v2094 = vunpack.c.l.s8.bf16 %v1690
        %v2095 = vunpack.c.l.s8.bf16 %v1691
        %v2096 = vunpack.c.h.s8.bf16 %v1688
        %v2097 = vunpack.c.h.s8.bf16 %v1689
        %v2098 = vunpack.c.h.s8.bf16 %v1690
        %v2099 = vunpack.c.h.s8.bf16 %v1691
        %v2100 = vunpack.c.l.s8.bf16 %v1692
        %v2101 = vunpack.c.l.s8.bf16 %v1693
        %v2102 = vunpack.c.l.s8.bf16 %v1694
        %v2103 = vunpack.c.l.s8.bf16 %v1695
        %v2104 = vunpack.c.h.s8.bf16 %v1692
        %v2105 = vunpack.c.h.s8.bf16 %v1693
        %v2106 = vunpack.c.h.s8.bf16 %v1694
        %v2107 = vunpack.c.h.s8.bf16 %v1695
        %v2108 = vunpack.c.l.s8.bf16 %v1696
        %v2109 = vunpack.c.l.s8.bf16 %v1697
        %v2110 = vunpack.c.l.s8.bf16 %v1698
        %v2111 = vunpack.c.l.s8.bf16 %v1699
        %v2112 = vunpack.c.h.s8.bf16 %v1696
        %v2113 = vunpack.c.h.s8.bf16 %v1697
        %v2114 = vunpack.c.h.s8.bf16 %v1698
        %v2115 = vunpack.c.h.s8.bf16 %v1699
        %v2116 = vunpack.c.l.s8.bf16 %v1700
        %v2117 = vunpack.c.l.s8.bf16 %v1701
        %v2118 = vunpack.c.l.s8.bf16 %v1702
        %v2119 = vunpack.c.l.s8.bf16 %v1703
        %v2120 = vunpack.c.h.s8.bf16 %v1700
        %v2121 = vunpack.c.h.s8.bf16 %v1701
        %v2122 = vunpack.c.h.s8.bf16 %v1702
        %v2123 = vunpack.c.h.s8.bf16 %v1703
        %v2124 = vunpack.c.l.s8.bf16 %v1704
        %v2125 = vunpack.c.l.s8.bf16 %v1705
        %v2126 = vunpack.c.l.s8.bf16 %v1706
        %v2127 = vunpack.c.l.s8.bf16 %v1707
        %v2128 = vunpack.c.h.s8.bf16 %v1704
        %v2129 = vunpack.c.h.s8.bf16 %v1705
        %v2130 = vunpack.c.h.s8.bf16 %v1706
        %v2131 = vunpack.c.h.s8.bf16 %v1707
        %v2132 = vunpack.c.l.s8.bf16 %v1708
        %v2133 = vunpack.c.l.s8.bf16 %v1709
        %v2134 = vunpack.c.l.s8.bf16 %v1710
        %v2135 = vunpack.c.l.s8.bf16 %v1711
        %v2136 = vunpack.c.h.s8.bf16 %v1708
        %v2137 = vunpack.c.h.s8.bf16 %v1709
        %v2138 = vunpack.c.h.s8.bf16 %v1710
        %v2139 = vunpack.c.h.s8.bf16 %v1711
        %v2140 = vunpack.c.l.s8.bf16 %v1712
        %v2141 = vunpack.c.l.s8.bf16 %v1713
        %v2142 = vunpack.c.l.s8.bf16 %v1714
        %v2143 = vunpack.c.l.s8.bf16 %v1715
        %v2144 = vunpack.c.h.s8.bf16 %v1712
        %v2145 = vunpack.c.h.s8.bf16 %v1713
        %v2146 = vunpack.c.h.s8.bf16 %v1714
        %v2147 = vunpack.c.h.s8.bf16 %v1715
        %v2148 = vunpack.c.l.s8.bf16 %v1716
        %v2149 = vunpack.c.l.s8.bf16 %v1717
        %v2150 = vunpack.c.l.s8.bf16 %v1718
        %v2151 = vunpack.c.l.s8.bf16 %v1719
        %v2152 = vunpack.c.h.s8.bf16 %v1716
        %v2153 = vunpack.c.h.s8.bf16 %v1717
        %v2154 = vunpack.c.h.s8.bf16 %v1718
        %v2155 = vunpack.c.h.s8.bf16 %v1719
        %v2156 = vunpack.c.l.s8.bf16 %v1720
        %v2157 = vunpack.c.l.s8.bf16 %v1721
        %v2158 = vunpack.c.l.s8.bf16 %v1722
        %v2159 = vunpack.c.l.s8.bf16 %v1723
        %v2160 = vunpack.c.h.s8.bf16 %v1720
        %v2161 = vunpack.c.h.s8.bf16 %v1721
        %v2162 = vunpack.c.h.s8.bf16 %v1722
        %v2163 = vunpack.c.h.s8.bf16 %v1723
        %v2164 = vunpack.c.l.s8.bf16 %v1724
        %v2165 = vunpack.c.l.s8.bf16 %v1725
        %v2166 = vunpack.c.l.s8.bf16 %v1726
        %v2167 = vunpack.c.l.s8.bf16 %v1727
        %v2168 = vunpack.c.h.s8.bf16 %v1724
        %v2169 = vunpack.c.h.s8.bf16 %v1725
        %v2170 = vunpack.c.h.s8.bf16 %v1726
        %v2171 = vunpack.c.h.s8.bf16 %v1727
        %v2172 = vunpack.c.l.s8.bf16 %v1728
        %v2173 = vunpack.c.l.s8.bf16 %v1729
        %v2174 = vunpack.c.l.s8.bf16 %v1730
        %v2175 = vunpack.c.l.s8.bf16 %v1731
        %v2176 = vunpack.c.h.s8.bf16 %v1728
        %v2177 = vunpack.c.h.s8.bf16 %v1729
        %v2178 = vunpack.c.h.s8.bf16 %v1730
        %v2179 = vunpack.c.h.s8.bf16 %v1731
        %v2180 = vunpack.c.l.s8.bf16 %v1732
        %v2181 = vunpack.c.l.s8.bf16 %v1733
        %v2182 = vunpack.c.l.s8.bf16 %v1734
        %v2183 = vunpack.c.l.s8.bf16 %v1735
        %v2184 = vunpack.c.h.s8.bf16 %v1732
        %v2185 = vunpack.c.h.s8.bf16 %v1733
        %v2186 = vunpack.c.h.s8.bf16 %v1734
        %v2187 = vunpack.c.h.s8.bf16 %v1735
        %v2188 = vunpack.c.l.s8.bf16 %v1736
        %v2189 = vunpack.c.l.s8.bf16 %v1737
        %v2190 = vunpack.c.l.s8.bf16 %v1738
        %v2191 = vunpack.c.l.s8.bf16 %v1739
        %v2192 = vunpack.c.h.s8.bf16 %v1736
        %v2193 = vunpack.c.h.s8.bf16 %v1737
        %v2194 = vunpack.c.h.s8.bf16 %v1738
        %v2195 = vunpack.c.h.s8.bf16 %v1739
        %v2196 = vunpack.c.l.s8.bf16 %v1740
        %v2197 = vunpack.c.l.s8.bf16 %v1741
        %v2198 = vunpack.c.l.s8.bf16 %v1742
        %v2199 = vunpack.c.l.s8.bf16 %v1743
        %v2200 = vunpack.c.h.s8.bf16 %v1740
        %v2201 = vunpack.c.h.s8.bf16 %v1741
        %v2202 = vunpack.c.h.s8.bf16 %v1742
        %v2203 = vunpack.c.h.s8.bf16 %v1743
        %v2204 = vunpack.c.l.s8.bf16 %v1744
        %v2205 = vunpack.c.l.s8.bf16 %v1745
        %v2206 = vunpack.c.l.s8.bf16 %v1746
        %v2207 = vunpack.c.l.s8.bf16 %v1747
        %v2208 = vunpack.c.h.s8.bf16 %v1744
        %v2209 = vunpack.c.h.s8.bf16 %v1745
        %v2210 = vunpack.c.h.s8.bf16 %v1746
        %v2211 = vunpack.c.h.s8.bf16 %v1747
        %v2212 = vunpack.c.l.s8.bf16 %v1748
        %v2213 = vunpack.c.l.s8.bf16 %v1749
        %v2214 = vunpack.c.l.s8.bf16 %v1750
        %v2215 = vunpack.c.l.s8.bf16 %v1751
        %v2216 = vunpack.c.h.s8.bf16 %v1748
        %v2217 = vunpack.c.h.s8.bf16 %v1749
        %v2218 = vunpack.c.h.s8.bf16 %v1750
        %v2219 = vunpack.c.h.s8.bf16 %v1751
        %v2220 = vunpack.c.l.s8.bf16 %v1752
        %v2221 = vunpack.c.l.s8.bf16 %v1753
        %v2222 = vunpack.c.l.s8.bf16 %v1754
        %v2223 = vunpack.c.l.s8.bf16 %v1755
        %v2224 = vunpack.c.h.s8.bf16 %v1752
        %v2225 = vunpack.c.h.s8.bf16 %v1753
        %v2226 = vunpack.c.h.s8.bf16 %v1754
        %v2227 = vunpack.c.h.s8.bf16 %v1755
        %v2228 = vunpack.c.l.s8.bf16 %v1756
        %v2229 = vunpack.c.l.s8.bf16 %v1757
        %v2230 = vunpack.c.l.s8.bf16 %v1758
        %v2231 = vunpack.c.l.s8.bf16 %v1759
        %v2232 = vunpack.c.h.s8.bf16 %v1756
        %v2233 = vunpack.c.h.s8.bf16 %v1757
        %v2234 = vunpack.c.h.s8.bf16 %v1758
        %v2235 = vunpack.c.h.s8.bf16 %v1759
        %v2236 = vunpack.c.l.s8.bf16 %v1760
        %v2237 = vunpack.c.l.s8.bf16 %v1761
        %v2238 = vunpack.c.l.s8.bf16 %v1762
        %v2239 = vunpack.c.l.s8.bf16 %v1763
        %v2240 = vunpack.c.h.s8.bf16 %v1760
        %v2241 = vunpack.c.h.s8.bf16 %v1761
        %v2242 = vunpack.c.h.s8.bf16 %v1762
        %v2243 = vunpack.c.h.s8.bf16 %v1763
        %v2244 = vunpack.c.l.s8.bf16 %v1764
        %v2245 = vunpack.c.l.s8.bf16 %v1765
        %v2246 = vunpack.c.l.s8.bf16 %v1766
        %v2247 = vunpack.c.l.s8.bf16 %v1767
        %v2248 = vunpack.c.h.s8.bf16 %v1764
        %v2249 = vunpack.c.h.s8.bf16 %v1765
        %v2250 = vunpack.c.h.s8.bf16 %v1766
        %v2251 = vunpack.c.h.s8.bf16 %v1767
        %v2252 = vunpack.c.l.s8.bf16 %v1768
        %v2253 = vunpack.c.l.s8.bf16 %v1769
        %v2254 = vunpack.c.l.s8.bf16 %v1770
        %v2255 = vunpack.c.l.s8.bf16 %v1771
        %v2256 = vunpack.c.h.s8.bf16 %v1768
        %v2257 = vunpack.c.h.s8.bf16 %v1769
        %v2258 = vunpack.c.h.s8.bf16 %v1770
        %v2259 = vunpack.c.h.s8.bf16 %v1771
        %v2260 = vunpack.c.l.s8.bf16 %v1772
        %v2261 = vunpack.c.l.s8.bf16 %v1773
        %v2262 = vunpack.c.l.s8.bf16 %v1774
        %v2263 = vunpack.c.l.s8.bf16 %v1775
        %v2264 = vunpack.c.h.s8.bf16 %v1772
        %v2265 = vunpack.c.h.s8.bf16 %v1773
        %v2266 = vunpack.c.h.s8.bf16 %v1774
        %v2267 = vunpack.c.h.s8.bf16 %v1775
        %v2268 = vunpack.c.l.s8.bf16 %v1776
        %v2269 = vunpack.c.l.s8.bf16 %v1777
        %v2270 = vunpack.c.l.s8.bf16 %v1778
        %v2271 = vunpack.c.l.s8.bf16 %v1779
        %v2272 = vunpack.c.h.s8.bf16 %v1776
        %v2273 = vunpack.c.h.s8.bf16 %v1777
        %v2274 = vunpack.c.h.s8.bf16 %v1778
        %v2275 = vunpack.c.h.s8.bf16 %v1779
        %v2276 = vunpack.c.l.s8.bf16 %v1780
        %v2277 = vunpack.c.l.s8.bf16 %v1781
        %v2278 = vunpack.c.l.s8.bf16 %v1782
        %v2279 = vunpack.c.l.s8.bf16 %v1783
        %v2280 = vunpack.c.h.s8.bf16 %v1780
        %v2281 = vunpack.c.h.s8.bf16 %v1781
        %v2282 = vunpack.c.h.s8.bf16 %v1782
        %v2283 = vunpack.c.h.s8.bf16 %v1783
        %v2284 = vunpack.c.l.s8.bf16 %v1784
        %v2285 = vunpack.c.l.s8.bf16 %v1785
        %v2286 = vunpack.c.l.s8.bf16 %v1786
        %v2287 = vunpack.c.l.s8.bf16 %v1787
        %v2288 = vunpack.c.h.s8.bf16 %v1784
        %v2289 = vunpack.c.h.s8.bf16 %v1785
        %v2290 = vunpack.c.h.s8.bf16 %v1786
        %v2291 = vunpack.c.h.s8.bf16 %v1787
        %v2292 = vunpack.c.l.s8.bf16 %v1788
        %v2293 = vunpack.c.l.s8.bf16 %v1789
        %v2294 = vunpack.c.l.s8.bf16 %v1790
        %v2295 = vunpack.c.l.s8.bf16 %v1791
        %v2296 = vunpack.c.h.s8.bf16 %v1788
        %v2297 = vunpack.c.h.s8.bf16 %v1789
        %v2298 = vunpack.c.h.s8.bf16 %v1790
        %v2299 = vunpack.c.h.s8.bf16 %v1791
        %v2300 = vunpack.c.l.s8.bf16 %v1792
        %v2301 = vunpack.c.l.s8.bf16 %v1793
        %v2302 = vunpack.c.l.s8.bf16 %v1794
        %v2303 = vunpack.c.l.s8.bf16 %v1795
        %v2304 = vunpack.c.h.s8.bf16 %v1792
        %v2305 = vunpack.c.h.s8.bf16 %v1793
        %v2306 = vunpack.c.h.s8.bf16 %v1794
        %v2307 = vunpack.c.h.s8.bf16 %v1795
        %v2308 = vunpack.c.l.s8.bf16 %v1796
        %v2309 = vunpack.c.l.s8.bf16 %v1797
        %v2310 = vunpack.c.l.s8.bf16 %v1798
        %v2311 = vunpack.c.l.s8.bf16 %v1799
        %v2312 = vunpack.c.h.s8.bf16 %v1796
        %v2313 = vunpack.c.h.s8.bf16 %v1797
        %v2314 = vunpack.c.h.s8.bf16 %v1798
        %v2315 = vunpack.c.h.s8.bf16 %v1799
        %v2316 = vunpack.c.l.s8.bf16 %v1800
        %v2317 = vunpack.c.l.s8.bf16 %v1801
        %v2318 = vunpack.c.l.s8.bf16 %v1802
        %v2319 = vunpack.c.l.s8.bf16 %v1803
        %v2320 = vunpack.c.h.s8.bf16 %v1800
        %v2321 = vunpack.c.h.s8.bf16 %v1801
        %v2322 = vunpack.c.h.s8.bf16 %v1802
        %v2323 = vunpack.c.h.s8.bf16 %v1803
        %v2324 = vunpack.c.l.s8.bf16 %v1804
        %v2325 = vunpack.c.l.s8.bf16 %v1805
        %v2326 = vunpack.c.l.s8.bf16 %v1806
        %v2327 = vunpack.c.l.s8.bf16 %v1807
        %v2328 = vunpack.c.h.s8.bf16 %v1804
        %v2329 = vunpack.c.h.s8.bf16 %v1805
        %v2330 = vunpack.c.h.s8.bf16 %v1806
        %v2331 = vunpack.c.h.s8.bf16 %v1807
        %v2332 = vunpack.c.l.s8.bf16 %v1808
        %v2333 = vunpack.c.l.s8.bf16 %v1809
        %v2334 = vunpack.c.l.s8.bf16 %v1810
        %v2335 = vunpack.c.l.s8.bf16 %v1811
        %v2336 = vunpack.c.h.s8.bf16 %v1808
        %v2337 = vunpack.c.h.s8.bf16 %v1809
        %v2338 = vunpack.c.h.s8.bf16 %v1810
        %v2339 = vunpack.c.h.s8.bf16 %v1811
        %v2340 = vunpack.c.l.s8.bf16 %v1812
        %v2341 = vunpack.c.l.s8.bf16 %v1813
        %v2342 = vunpack.c.l.s8.bf16 %v1814
        %v2343 = vunpack.c.l.s8.bf16 %v1815
        %v2344 = vunpack.c.h.s8.bf16 %v1812
        %v2345 = vunpack.c.h.s8.bf16 %v1813
        %v2346 = vunpack.c.h.s8.bf16 %v1814
        %v2347 = vunpack.c.h.s8.bf16 %v1815
        %v2348 = vunpack.c.l.s8.bf16 %v1816
        %v2349 = vunpack.c.l.s8.bf16 %v1817
        %v2350 = vunpack.c.l.s8.bf16 %v1818
        %v2351 = vunpack.c.l.s8.bf16 %v1819
        %v2352 = vunpack.c.h.s8.bf16 %v1816
        %v2353 = vunpack.c.h.s8.bf16 %v1817
        %v2354 = vunpack.c.h.s8.bf16 %v1818
        %v2355 = vunpack.c.h.s8.bf16 %v1819
        %v2356 = vunpack.c.l.s8.bf16 %v1820
        %v2357 = vunpack.c.l.s8.bf16 %v1821
        %v2358 = vunpack.c.l.s8.bf16 %v1822
        %v2359 = vunpack.c.l.s8.bf16 %v1823
        %v2360 = vunpack.c.h.s8.bf16 %v1820
        %v2361 = vunpack.c.h.s8.bf16 %v1821
        %v2362 = vunpack.c.h.s8.bf16 %v1822
        %v2363 = vunpack.c.h.s8.bf16 %v1823
        %v2364 = vunpack.c.l.s8.bf16 %v1824
        %v2365 = vunpack.c.l.s8.bf16 %v1825
        %v2366 = vunpack.c.l.s8.bf16 %v1826
        %v2367 = vunpack.c.l.s8.bf16 %v1827
        %v2368 = vunpack.c.h.s8.bf16 %v1824
        %v2369 = vunpack.c.h.s8.bf16 %v1825
        %v2370 = vunpack.c.h.s8.bf16 %v1826
        %v2371 = vunpack.c.h.s8.bf16 %v1827
        %v2372 = vunpack.c.l.s8.bf16 %v1828
        %v2373 = vunpack.c.l.s8.bf16 %v1829
        %v2374 = vunpack.c.l.s8.bf16 %v1830
        %v2375 = vunpack.c.l.s8.bf16 %v1831
        %v2376 = vunpack.c.h.s8.bf16 %v1828
        %v2377 = vunpack.c.h.s8.bf16 %v1829
        %v2378 = vunpack.c.h.s8.bf16 %v1830
        %v2379 = vunpack.c.h.s8.bf16 %v1831
        %v2380 = vunpack.c.l.s8.bf16 %v1832
        %v2381 = vunpack.c.l.s8.bf16 %v1833
        %v2382 = vunpack.c.l.s8.bf16 %v1834
        %v2383 = vunpack.c.l.s8.bf16 %v1835
        %v2384 = vunpack.c.h.s8.bf16 %v1832
        %v2385 = vunpack.c.h.s8.bf16 %v1833
        %v2386 = vunpack.c.h.s8.bf16 %v1834
        %v2387 = vunpack.c.h.s8.bf16 %v1835
        %v2388 = vunpack.c.l.s8.bf16 %v1836
        %v2389 = vunpack.c.l.s8.bf16 %v1837
        %v2390 = vunpack.c.l.s8.bf16 %v1838
        %v2391 = vunpack.c.l.s8.bf16 %v1839
        %v2392 = vunpack.c.h.s8.bf16 %v1836
        %v2393 = vunpack.c.h.s8.bf16 %v1837
        %v2394 = vunpack.c.h.s8.bf16 %v1838
        %v2395 = vunpack.c.h.s8.bf16 %v1839
        %v2396 = vunpack.c.l.s8.bf16 %v1840
        %v2397 = vunpack.c.l.s8.bf16 %v1841
        %v2398 = vunpack.c.l.s8.bf16 %v1842
        %v2399 = vunpack.c.l.s8.bf16 %v1843
        %v2400 = vunpack.c.h.s8.bf16 %v1840
        %v2401 = vunpack.c.h.s8.bf16 %v1841
        %v2402 = vunpack.c.h.s8.bf16 %v1842
        %v2403 = vunpack.c.h.s8.bf16 %v1843
        %v2404 = vunpack.c.l.s8.bf16 %v1844
        %v2405 = vunpack.c.l.s8.bf16 %v1845
        %v2406 = vunpack.c.l.s8.bf16 %v1846
        %v2407 = vunpack.c.l.s8.bf16 %v1847
        %v2408 = vunpack.c.h.s8.bf16 %v1844
        %v2409 = vunpack.c.h.s8.bf16 %v1845
        %v2410 = vunpack.c.h.s8.bf16 %v1846
        %v2411 = vunpack.c.h.s8.bf16 %v1847
        %v2412 = vunpack.c.l.s8.bf16 %v1848
        %v2413 = vunpack.c.l.s8.bf16 %v1849
        %v2414 = vunpack.c.l.s8.bf16 %v1850
        %v2415 = vunpack.c.l.s8.bf16 %v1851
        %v2416 = vunpack.c.h.s8.bf16 %v1848
        %v2417 = vunpack.c.h.s8.bf16 %v1849
        %v2418 = vunpack.c.h.s8.bf16 %v1850
        %v2419 = vunpack.c.h.s8.bf16 %v1851
        %v2420 = vunpack.c.l.s8.bf16 %v1852
        %v2421 = vunpack.c.l.s8.bf16 %v1853
        %v2422 = vunpack.c.l.s8.bf16 %v1854
        %v2423 = vunpack.c.l.s8.bf16 %v1855
        %v2424 = vunpack.c.h.s8.bf16 %v1852
        %v2425 = vunpack.c.h.s8.bf16 %v1853
        %v2426 = vunpack.c.h.s8.bf16 %v1854
        %v2427 = vunpack.c.h.s8.bf16 %v1855
        %v2428 = vunpack.c.l.s8.bf16 %v1856
        %v2429 = vunpack.c.l.s8.bf16 %v1857
        %v2430 = vunpack.c.l.s8.bf16 %v1858
        %v2431 = vunpack.c.l.s8.bf16 %v1859
        %v2432 = vunpack.c.h.s8.bf16 %v1856
        %v2433 = vunpack.c.h.s8.bf16 %v1857
        %v2434 = vunpack.c.h.s8.bf16 %v1858
        %v2435 = vunpack.c.h.s8.bf16 %v1859
        %v2436 = vunpack.c.l.s8.bf16 %v1860
        %v2437 = vunpack.c.l.s8.bf16 %v1861
        %v2438 = vunpack.c.l.s8.bf16 %v1862
        %v2439 = vunpack.c.l.s8.bf16 %v1863
        %v2440 = vunpack.c.h.s8.bf16 %v1860
        %v2441 = vunpack.c.h.s8.bf16 %v1861
        %v2442 = vunpack.c.h.s8.bf16 %v1862
        %v2443 = vunpack.c.h.s8.bf16 %v1863
        %v2444 = vunpack.c.l.s8.bf16 %v1864
        %v2445 = vunpack.c.l.s8.bf16 %v1865
        %v2446 = vunpack.c.l.s8.bf16 %v1866
        %v2447 = vunpack.c.l.s8.bf16 %v1867
        %v2448 = vunpack.c.h.s8.bf16 %v1864
        %v2449 = vunpack.c.h.s8.bf16 %v1865
        %v2450 = vunpack.c.h.s8.bf16 %v1866
        %v2451 = vunpack.c.h.s8.bf16 %v1867
        %v2452 = vunpack.c.l.s8.bf16 %v1868
        %v2453 = vunpack.c.l.s8.bf16 %v1869
        %v2454 = vunpack.c.l.s8.bf16 %v1870
        %v2455 = vunpack.c.l.s8.bf16 %v1871
        %v2456 = vunpack.c.h.s8.bf16 %v1868
        %v2457 = vunpack.c.h.s8.bf16 %v1869
        %v2458 = vunpack.c.h.s8.bf16 %v1870
        %v2459 = vunpack.c.h.s8.bf16 %v1871
        %v2460 = vunpack.c.l.s8.bf16 %v1872
        %v2461 = vunpack.c.l.s8.bf16 %v1873
        %v2462 = vunpack.c.l.s8.bf16 %v1874
        %v2463 = vunpack.c.l.s8.bf16 %v1875
        %v2464 = vunpack.c.h.s8.bf16 %v1872
        %v2465 = vunpack.c.h.s8.bf16 %v1873
        %v2466 = vunpack.c.h.s8.bf16 %v1874
        %v2467 = vunpack.c.h.s8.bf16 %v1875
        %v2468 = vunpack.c.l.s8.bf16 %v1876
        %v2469 = vunpack.c.l.s8.bf16 %v1877
        %v2470 = vunpack.c.l.s8.bf16 %v1878
        %v2471 = vunpack.c.l.s8.bf16 %v1879
        %v2472 = vunpack.c.h.s8.bf16 %v1876
        %v2473 = vunpack.c.h.s8.bf16 %v1877
        %v2474 = vunpack.c.h.s8.bf16 %v1878
        %v2475 = vunpack.c.h.s8.bf16 %v1879
        %v2476 = vunpack.c.l.s8.bf16 %v1880
        %v2477 = vunpack.c.l.s8.bf16 %v1881
        %v2478 = vunpack.c.l.s8.bf16 %v1882
        %v2479 = vunpack.c.l.s8.bf16 %v1883
        %v2480 = vunpack.c.h.s8.bf16 %v1880
        %v2481 = vunpack.c.h.s8.bf16 %v1881
        %v2482 = vunpack.c.h.s8.bf16 %v1882
        %v2483 = vunpack.c.h.s8.bf16 %v1883
        %v2484 = vunpack.c.l.s8.bf16 %v1884
        %v2485 = vunpack.c.l.s8.bf16 %v1885
        %v2486 = vunpack.c.l.s8.bf16 %v1886
        %v2487 = vunpack.c.l.s8.bf16 %v1887
        %v2488 = vunpack.c.h.s8.bf16 %v1884
        %v2489 = vunpack.c.h.s8.bf16 %v1885
        %v2490 = vunpack.c.h.s8.bf16 %v1886
        %v2491 = vunpack.c.h.s8.bf16 %v1887
        %v2492 = vunpack.c.l.s8.bf16 %v1888
        %v2493 = vunpack.c.l.s8.bf16 %v1889
        %v2494 = vunpack.c.l.s8.bf16 %v1890
        %v2495 = vunpack.c.l.s8.bf16 %v1891
        %v2496 = vunpack.c.h.s8.bf16 %v1888
        %v2497 = vunpack.c.h.s8.bf16 %v1889
        %v2498 = vunpack.c.h.s8.bf16 %v1890
        %v2499 = vunpack.c.h.s8.bf16 %v1891
        %v2500 = vunpack.c.l.s8.bf16 %v1892
        %v2501 = vunpack.c.l.s8.bf16 %v1893
        %v2502 = vunpack.c.l.s8.bf16 %v1894
        %v2503 = vunpack.c.l.s8.bf16 %v1895
        %v2504 = vunpack.c.h.s8.bf16 %v1892
        %v2505 = vunpack.c.h.s8.bf16 %v1893
        %v2506 = vunpack.c.h.s8.bf16 %v1894
        %v2507 = vunpack.c.h.s8.bf16 %v1895
        %v2508 = vunpack.c.l.s8.bf16 %v1896
        %v2509 = vunpack.c.l.s8.bf16 %v1897
        %v2510 = vunpack.c.l.s8.bf16 %v1898
        %v2511 = vunpack.c.l.s8.bf16 %v1899
        %v2512 = vunpack.c.h.s8.bf16 %v1896
        %v2513 = vunpack.c.h.s8.bf16 %v1897
        %v2514 = vunpack.c.h.s8.bf16 %v1898
        %v2515 = vunpack.c.h.s8.bf16 %v1899
        %v2516 = vunpack.c.l.s8.bf16 %v1900
        %v2517 = vunpack.c.l.s8.bf16 %v1901
        %v2518 = vunpack.c.l.s8.bf16 %v1902
        %v2519 = vunpack.c.l.s8.bf16 %v1903
        %v2520 = vunpack.c.h.s8.bf16 %v1900
        %v2521 = vunpack.c.h.s8.bf16 %v1901
        %v2522 = vunpack.c.h.s8.bf16 %v1902
        %v2523 = vunpack.c.h.s8.bf16 %v1903
        %v2524 = vunpack.c.l.s8.bf16 %v1904
        %v2525 = vunpack.c.l.s8.bf16 %v1905
        %v2526 = vunpack.c.l.s8.bf16 %v1906
        %v2527 = vunpack.c.l.s8.bf16 %v1907
        %v2528 = vunpack.c.h.s8.bf16 %v1904
        %v2529 = vunpack.c.h.s8.bf16 %v1905
        %v2530 = vunpack.c.h.s8.bf16 %v1906
        %v2531 = vunpack.c.h.s8.bf16 %v1907
        %v2532 = vunpack.c.l.s8.bf16 %v1908
        %v2533 = vunpack.c.l.s8.bf16 %v1909
        %v2534 = vunpack.c.l.s8.bf16 %v1910
        %v2535 = vunpack.c.l.s8.bf16 %v1911
        %v2536 = vunpack.c.h.s8.bf16 %v1908
        %v2537 = vunpack.c.h.s8.bf16 %v1909
        %v2538 = vunpack.c.h.s8.bf16 %v1910
        %v2539 = vunpack.c.h.s8.bf16 %v1911
        %v2540 = vunpack.c.l.s8.bf16 %v1912
        %v2541 = vunpack.c.l.s8.bf16 %v1913
        %v2542 = vunpack.c.l.s8.bf16 %v1914
        %v2543 = vunpack.c.l.s8.bf16 %v1915
        %v2544 = vunpack.c.h.s8.bf16 %v1912
        %v2545 = vunpack.c.h.s8.bf16 %v1913
        %v2546 = vunpack.c.h.s8.bf16 %v1914
        %v2547 = vunpack.c.h.s8.bf16 %v1915
        %v2548 = vunpack.c.l.s8.bf16 %v1916
        %v2549 = vunpack.c.l.s8.bf16 %v1917
        %v2550 = vunpack.c.l.s8.bf16 %v1918
        %v2551 = vunpack.c.l.s8.bf16 %v1919
        %v2552 = vunpack.c.h.s8.bf16 %v1916
        %v2553 = vunpack.c.h.s8.bf16 %v1917
        %v2554 = vunpack.c.h.s8.bf16 %v1918
        %v2555 = vunpack.c.h.s8.bf16 %v1919
        %v2556 = vunpack.c.l.s8.bf16 %v1920
        %v2557 = vunpack.c.l.s8.bf16 %v1921
        %v2558 = vunpack.c.l.s8.bf16 %v1922
        %v2559 = vunpack.c.l.s8.bf16 %v1923
        %v2560 = vunpack.c.h.s8.bf16 %v1920
        %v2561 = vunpack.c.h.s8.bf16 %v1921
        %v2562 = vunpack.c.h.s8.bf16 %v1922
        %v2563 = vunpack.c.h.s8.bf16 %v1923
        %v2564 = vunpack.c.l.s8.bf16 %v1924
        %v2565 = vunpack.c.l.s8.bf16 %v1925
        %v2566 = vunpack.c.l.s8.bf16 %v1926
        %v2567 = vunpack.c.l.s8.bf16 %v1927
        %v2568 = vunpack.c.h.s8.bf16 %v1924
        %v2569 = vunpack.c.h.s8.bf16 %v1925
        %v2570 = vunpack.c.h.s8.bf16 %v1926
        %v2571 = vunpack.c.h.s8.bf16 %v1927
        %v2572 = vunpack.c.l.s8.bf16 %v1928
        %v2573 = vunpack.c.l.s8.bf16 %v1929
        %v2574 = vunpack.c.l.s8.bf16 %v1930
        %v2575 = vunpack.c.l.s8.bf16 %v1931
        %v2576 = vunpack.c.h.s8.bf16 %v1928
        %v2577 = vunpack.c.h.s8.bf16 %v1929
        %v2578 = vunpack.c.h.s8.bf16 %v1930
        %v2579 = vunpack.c.h.s8.bf16 %v1931
        %v2580 = vunpack.c.l.s8.bf16 %v1932
        %v2581 = vunpack.c.l.s8.bf16 %v1933
        %v2582 = vunpack.c.l.s8.bf16 %v1934
        %v2583 = vunpack.c.l.s8.bf16 %v1935
        %v2584 = vunpack.c.h.s8.bf16 %v1932
        %v2585 = vunpack.c.h.s8.bf16 %v1933
        %v2586 = vunpack.c.h.s8.bf16 %v1934
        %v2587 = vunpack.c.h.s8.bf16 %v1935
        %v2588 = vunpack.c.l.s8.bf16 %v1936
        %v2589 = vunpack.c.l.s8.bf16 %v1937
        %v2590 = vunpack.c.l.s8.bf16 %v1938
        %v2591 = vunpack.c.l.s8.bf16 %v1939
        %v2592 = vunpack.c.h.s8.bf16 %v1936
        %v2593 = vunpack.c.h.s8.bf16 %v1937
        %v2594 = vunpack.c.h.s8.bf16 %v1938
        %v2595 = vunpack.c.h.s8.bf16 %v1939
        %v2596 = vunpack.c.l.s8.bf16 %v1940
        %v2597 = vunpack.c.l.s8.bf16 %v1941
        %v2598 = vunpack.c.l.s8.bf16 %v1942
        %v2599 = vunpack.c.l.s8.bf16 %v1943
        %v2600 = vunpack.c.h.s8.bf16 %v1940
        %v2601 = vunpack.c.h.s8.bf16 %v1941
        %v2602 = vunpack.c.h.s8.bf16 %v1942
        %v2603 = vunpack.c.h.s8.bf16 %v1943
        %v2604 = vunpack.c.l.s8.bf16 %v1944
        %v2605 = vunpack.c.l.s8.bf16 %v1945
        %v2606 = vunpack.c.l.s8.bf16 %v1946
        %v2607 = vunpack.c.l.s8.bf16 %v1947
        %v2608 = vunpack.c.h.s8.bf16 %v1944
        %v2609 = vunpack.c.h.s8.bf16 %v1945
        %v2610 = vunpack.c.h.s8.bf16 %v1946
        %v2611 = vunpack.c.h.s8.bf16 %v1947
        %v2612 = vunpack.c.l.s8.bf16 %v1948
        %v2613 = vunpack.c.l.s8.bf16 %v1949
        %v2614 = vunpack.c.l.s8.bf16 %v1950
        %v2615 = vunpack.c.l.s8.bf16 %v1951
        %v2616 = vunpack.c.h.s8.bf16 %v1948
        %v2617 = vunpack.c.h.s8.bf16 %v1949
        %v2618 = vunpack.c.h.s8.bf16 %v1950
        %v2619 = vunpack.c.h.s8.bf16 %v1951
        %v2620 = vunpack.c.l.s8.bf16 %v1952
        %v2621 = vunpack.c.l.s8.bf16 %v1953
        %v2622 = vunpack.c.l.s8.bf16 %v1954
        %v2623 = vunpack.c.l.s8.bf16 %v1955
        %v2624 = vunpack.c.h.s8.bf16 %v1952
        %v2625 = vunpack.c.h.s8.bf16 %v1953
        %v2626 = vunpack.c.h.s8.bf16 %v1954
        %v2627 = vunpack.c.h.s8.bf16 %v1955
        %v2628 = vunpack.c.l.s8.bf16 %v1956
        %v2629 = vunpack.c.l.s8.bf16 %v1957
        %v2630 = vunpack.c.l.s8.bf16 %v1958
        %v2631 = vunpack.c.l.s8.bf16 %v1959
        %v2632 = vunpack.c.h.s8.bf16 %v1956
        %v2633 = vunpack.c.h.s8.bf16 %v1957
        %v2634 = vunpack.c.h.s8.bf16 %v1958
        %v2635 = vunpack.c.h.s8.bf16 %v1959
        %v2636 = vunpack.c.l.s8.bf16 %v1960
        %v2637 = vunpack.c.l.s8.bf16 %v1961
        %v2638 = vunpack.c.l.s8.bf16 %v1962
        %v2639 = vunpack.c.l.s8.bf16 %v1963
        %v2640 = vunpack.c.h.s8.bf16 %v1960
        %v2641 = vunpack.c.h.s8.bf16 %v1961
        %v2642 = vunpack.c.h.s8.bf16 %v1962
        %v2643 = vunpack.c.h.s8.bf16 %v1963
        %v2644 = vunpack.c.l.s8.bf16 %v1964
        %v2645 = vunpack.c.l.s8.bf16 %v1965
        %v2646 = vunpack.c.l.s8.bf16 %v1966
        %v2647 = vunpack.c.l.s8.bf16 %v1967
        %v2648 = vunpack.c.h.s8.bf16 %v1964
        %v2649 = vunpack.c.h.s8.bf16 %v1965
        %v2650 = vunpack.c.h.s8.bf16 %v1966
        %v2651 = vunpack.c.h.s8.bf16 %v1967
        %v2652 = vunpack.c.l.s8.bf16 %v1968
        %v2653 = vunpack.c.l.s8.bf16 %v1969
        %v2654 = vunpack.c.l.s8.bf16 %v1970
        %v2655 = vunpack.c.l.s8.bf16 %v1971
        %v2656 = vunpack.c.h.s8.bf16 %v1968
        %v2657 = vunpack.c.h.s8.bf16 %v1969
        %v2658 = vunpack.c.h.s8.bf16 %v1970
        %v2659 = vunpack.c.h.s8.bf16 %v1971
        %v2660 = vunpack.c.l.s8.bf16 %v1972
        %v2661 = vunpack.c.l.s8.bf16 %v1973
        %v2662 = vunpack.c.l.s8.bf16 %v1974
        %v2663 = vunpack.c.l.s8.bf16 %v1975
        %v2664 = vunpack.c.h.s8.bf16 %v1972
        %v2665 = vunpack.c.h.s8.bf16 %v1973
        %v2666 = vunpack.c.h.s8.bf16 %v1974
        %v2667 = vunpack.c.h.s8.bf16 %v1975
        %v2668 = vunpack.c.l.s8.bf16 %v1976
        %v2669 = vunpack.c.l.s8.bf16 %v1977
        %v2670 = vunpack.c.l.s8.bf16 %v1978
        %v2671 = vunpack.c.l.s8.bf16 %v1979
        %v2672 = vunpack.c.h.s8.bf16 %v1976
        %v2673 = vunpack.c.h.s8.bf16 %v1977
        %v2674 = vunpack.c.h.s8.bf16 %v1978
        %v2675 = vunpack.c.h.s8.bf16 %v1979
        %v2676 = vunpack.c.l.s8.bf16 %v1980
        %v2677 = vunpack.c.l.s8.bf16 %v1981
        %v2678 = vunpack.c.l.s8.bf16 %v1982
        %v2679 = vunpack.c.l.s8.bf16 %v1983
        %v2680 = vunpack.c.h.s8.bf16 %v1980
        %v2681 = vunpack.c.h.s8.bf16 %v1981
        %v2682 = vunpack.c.h.s8.bf16 %v1982
        %v2683 = vunpack.c.h.s8.bf16 %v1983
        %v2684 = vunpack.c.l.s8.bf16 %v1984
        %v2685 = vunpack.c.l.s8.bf16 %v1985
        %v2686 = vunpack.c.l.s8.bf16 %v1986
        %v2687 = vunpack.c.l.s8.bf16 %v1987
        %v2688 = vunpack.c.h.s8.bf16 %v1984
        %v2689 = vunpack.c.h.s8.bf16 %v1985
        %v2690 = vunpack.c.h.s8.bf16 %v1986
        %v2691 = vunpack.c.h.s8.bf16 %v1987
        %v2692 = vunpack.c.l.s8.bf16 %v1988
        %v2693 = vunpack.c.l.s8.bf16 %v1989
        %v2694 = vunpack.c.l.s8.bf16 %v1990
        %v2695 = vunpack.c.l.s8.bf16 %v1991
        %v2696 = vunpack.c.h.s8.bf16 %v1988
        %v2697 = vunpack.c.h.s8.bf16 %v1989
        %v2698 = vunpack.c.h.s8.bf16 %v1990
        %v2699 = vunpack.c.h.s8.bf16 %v1991
        %v2700 = vunpack.c.l.s8.bf16 %v1992
        %v2701 = vunpack.c.l.s8.bf16 %v1993
        %v2702 = vunpack.c.l.s8.bf16 %v1994
        %v2703 = vunpack.c.l.s8.bf16 %v1995
        %v2704 = vunpack.c.h.s8.bf16 %v1992
        %v2705 = vunpack.c.h.s8.bf16 %v1993
        %v2706 = vunpack.c.h.s8.bf16 %v1994
        %v2707 = vunpack.c.h.s8.bf16 %v1995
        %v2708 = vunpack.c.l.s8.bf16 %v1996
        %v2709 = vunpack.c.l.s8.bf16 %v1997
        %v2710 = vunpack.c.l.s8.bf16 %v1998
        %v2711 = vunpack.c.l.s8.bf16 %v1999
        %v2712 = vunpack.c.h.s8.bf16 %v1996
        %v2713 = vunpack.c.h.s8.bf16 %v1997
        %v2714 = vunpack.c.h.s8.bf16 %v1998
        %v2715 = vunpack.c.h.s8.bf16 %v1999
        %v2716 = vunpack.c.l.s8.bf16 %v2000
        %v2717 = vunpack.c.l.s8.bf16 %v2001
        %v2718 = vunpack.c.l.s8.bf16 %v2002
        %v2719 = vunpack.c.l.s8.bf16 %v2003
        %v2720 = vunpack.c.h.s8.bf16 %v2000
        %v2721 = vunpack.c.h.s8.bf16 %v2001
        %v2722 = vunpack.c.h.s8.bf16 %v2002
        %v2723 = vunpack.c.h.s8.bf16 %v2003
        %v2724 = vunpack.c.l.s8.bf16 %v2004
        %v2725 = vunpack.c.l.s8.bf16 %v2005
        %v2726 = vunpack.c.l.s8.bf16 %v2006
        %v2727 = vunpack.c.l.s8.bf16 %v2007
        %v2728 = vunpack.c.h.s8.bf16 %v2004
        %v2729 = vunpack.c.h.s8.bf16 %v2005
        %v2730 = vunpack.c.h.s8.bf16 %v2006
        %v2731 = vunpack.c.h.s8.bf16 %v2007
        %v2732 = vunpack.c.l.s8.bf16 %v2008
        %v2733 = vunpack.c.l.s8.bf16 %v2009
        %v2734 = vunpack.c.l.s8.bf16 %v2010
        %v2735 = vunpack.c.l.s8.bf16 %v2011
        %v2736 = vunpack.c.h.s8.bf16 %v2008
        %v2737 = vunpack.c.h.s8.bf16 %v2009
        %v2738 = vunpack.c.h.s8.bf16 %v2010
        %v2739 = vunpack.c.h.s8.bf16 %v2011
        %v2740 = vunpack.c.l.s8.bf16 %v2012
        %v2741 = vunpack.c.l.s8.bf16 %v2013
        %v2742 = vunpack.c.l.s8.bf16 %v2014
        %v2743 = vunpack.c.l.s8.bf16 %v2015
        %v2744 = vunpack.c.h.s8.bf16 %v2012
        %v2745 = vunpack.c.h.s8.bf16 %v2013
        %v2746 = vunpack.c.h.s8.bf16 %v2014
        %v2747 = vunpack.c.h.s8.bf16 %v2015
        %v2748 = vunpack.c.l.s8.bf16 %v2016
        %v2749 = vunpack.c.l.s8.bf16 %v2017
        %v2750 = vunpack.c.l.s8.bf16 %v2018
        %v2751 = vunpack.c.l.s8.bf16 %v2019
        %v2752 = vunpack.c.h.s8.bf16 %v2016
        %v2753 = vunpack.c.h.s8.bf16 %v2017
        %v2754 = vunpack.c.h.s8.bf16 %v2018
        %v2755 = vunpack.c.h.s8.bf16 %v2019
        %v2756 = vunpack.c.l.s8.bf16 %v2020
        %v2757 = vunpack.c.l.s8.bf16 %v2021
        %v2758 = vunpack.c.l.s8.bf16 %v2022
        %v2759 = vunpack.c.l.s8.bf16 %v2023
        %v2760 = vunpack.c.h.s8.bf16 %v2020
        %v2761 = vunpack.c.h.s8.bf16 %v2021
        %v2762 = vunpack.c.h.s8.bf16 %v2022
        %v2763 = vunpack.c.h.s8.bf16 %v2023
        %v2764 = vunpack.c.l.s8.bf16 %v2024
        %v2765 = vunpack.c.l.s8.bf16 %v2025
        %v2766 = vunpack.c.l.s8.bf16 %v2026
        %v2767 = vunpack.c.l.s8.bf16 %v2027
        %v2768 = vunpack.c.h.s8.bf16 %v2024
        %v2769 = vunpack.c.h.s8.bf16 %v2025
        %v2770 = vunpack.c.h.s8.bf16 %v2026
        %v2771 = vunpack.c.h.s8.bf16 %v2027
        %v2772 = vunpack.c.l.s8.bf16 %v2028
        %v2773 = vunpack.c.l.s8.bf16 %v2029
        %v2774 = vunpack.c.l.s8.bf16 %v2030
        %v2775 = vunpack.c.l.s8.bf16 %v2031
        %v2776 = vunpack.c.h.s8.bf16 %v2028
        %v2777 = vunpack.c.h.s8.bf16 %v2029
        %v2778 = vunpack.c.h.s8.bf16 %v2030
        %v2779 = vunpack.c.h.s8.bf16 %v2031
        %v2780 = vunpack.c.l.s8.bf16 %v2032
        %v2781 = vunpack.c.l.s8.bf16 %v2033
        %v2782 = vunpack.c.l.s8.bf16 %v2034
        %v2783 = vunpack.c.l.s8.bf16 %v2035
        %v2784 = vunpack.c.h.s8.bf16 %v2032
        %v2785 = vunpack.c.h.s8.bf16 %v2033
        %v2786 = vunpack.c.h.s8.bf16 %v2034
        %v2787 = vunpack.c.h.s8.bf16 %v2035
        %v2788 = vunpack.c.l.s8.bf16 %v2036
        %v2789 = vunpack.c.l.s8.bf16 %v2037
        %v2790 = vunpack.c.l.s8.bf16 %v2038
        %v2791 = vunpack.c.l.s8.bf16 %v2039
        %v2792 = vunpack.c.h.s8.bf16 %v2036
        %v2793 = vunpack.c.h.s8.bf16 %v2037
        %v2794 = vunpack.c.h.s8.bf16 %v2038
        %v2795 = vunpack.c.h.s8.bf16 %v2039
        %v2796 = vunpack.c.l.s8.bf16 %v2040
        %v2797 = vunpack.c.l.s8.bf16 %v2041
        %v2798 = vunpack.c.l.s8.bf16 %v2042
        %v2799 = vunpack.c.l.s8.bf16 %v2043
        %v2800 = vunpack.c.h.s8.bf16 %v2040
        %v2801 = vunpack.c.h.s8.bf16 %v2041
        %v2802 = vunpack.c.h.s8.bf16 %v2042
        %v2803 = vunpack.c.h.s8.bf16 %v2043
        %v2804 = vunpack.c.l.s8.bf16 %v2044
        %v2805 = vunpack.c.l.s8.bf16 %v2045
        %v2806 = vunpack.c.l.s8.bf16 %v2046
        %v2807 = vunpack.c.l.s8.bf16 %v2047
        %v2808 = vunpack.c.h.s8.bf16 %v2044
        %v2809 = vunpack.c.h.s8.bf16 %v2045
        %v2810 = vunpack.c.h.s8.bf16 %v2046
        %v2811 = vunpack.c.h.s8.bf16 %v2047
        %v2812 = vunpack.c.l.s8.bf16 %v2048
        %v2813 = vunpack.c.l.s8.bf16 %v2049
        %v2814 = vunpack.c.l.s8.bf16 %v2050
        %v2815 = vunpack.c.l.s8.bf16 %v2051
        %v2816 = vunpack.c.h.s8.bf16 %v2048
        %v2817 = vunpack.c.h.s8.bf16 %v2049
        %v2818 = vunpack.c.h.s8.bf16 %v2050
        %v2819 = vunpack.c.h.s8.bf16 %v2051
        %v2820 = vunpack.c.l.s8.bf16 %v2052
        %v2821 = vunpack.c.l.s8.bf16 %v2053
        %v2822 = vunpack.c.l.s8.bf16 %v2054
        %v2823 = vunpack.c.l.s8.bf16 %v2055
        %v2824 = vunpack.c.h.s8.bf16 %v2052
        %v2825 = vunpack.c.h.s8.bf16 %v2053
        %v2826 = vunpack.c.h.s8.bf16 %v2054
        %v2827 = vunpack.c.h.s8.bf16 %v2055
        %v2828 = vunpack.c.l.s8.bf16 %v2056
        %v2829 = vunpack.c.l.s8.bf16 %v2057
        %v2830 = vunpack.c.l.s8.bf16 %v2058
        %v2831 = vunpack.c.l.s8.bf16 %v2059
        %v2832 = vunpack.c.h.s8.bf16 %v2056
        %v2833 = vunpack.c.h.s8.bf16 %v2057
        %v2834 = vunpack.c.h.s8.bf16 %v2058
        %v2835 = vunpack.c.h.s8.bf16 %v2059
        %v2836 = vunpack.c.l.s8.bf16 %v2060
        %v2837 = vunpack.c.l.s8.bf16 %v2061
        %v2838 = vunpack.c.l.s8.bf16 %v2062
        %v2839 = vunpack.c.l.s8.bf16 %v2063
        %v2840 = vunpack.c.h.s8.bf16 %v2060
        %v2841 = vunpack.c.h.s8.bf16 %v2061
        %v2842 = vunpack.c.h.s8.bf16 %v2062
        %v2843 = vunpack.c.h.s8.bf16 %v2063
        %v2844 = vunpack.c.l.s8.bf16 %v2064
        %v2845 = vunpack.c.l.s8.bf16 %v2065
        %v2846 = vunpack.c.l.s8.bf16 %v2066
        %v2847 = vunpack.c.l.s8.bf16 %v2067
        %v2848 = vunpack.c.h.s8.bf16 %v2064
        %v2849 = vunpack.c.h.s8.bf16 %v2065
        %v2850 = vunpack.c.h.s8.bf16 %v2066
        %v2851 = vunpack.c.h.s8.bf16 %v2067
        %v2852 = vunpack.c.l.s8.bf16 %v2068
        %v2853 = vunpack.c.l.s8.bf16 %v2069
        %v2854 = vunpack.c.l.s8.bf16 %v2070
        %v2855 = vunpack.c.l.s8.bf16 %v2071
        %v2856 = vunpack.c.h.s8.bf16 %v2068
        %v2857 = vunpack.c.h.s8.bf16 %v2069
        %v2858 = vunpack.c.h.s8.bf16 %v2070
        %v2859 = vunpack.c.h.s8.bf16 %v2071
        %v2860 = vunpack.c.l.s8.bf16 %v2072
        %v2861 = vunpack.c.l.s8.bf16 %v2073
        %v2862 = vunpack.c.l.s8.bf16 %v2074
        %v2863 = vunpack.c.l.s8.bf16 %v2075
        %v2864 = vunpack.c.h.s8.bf16 %v2072
        %v2865 = vunpack.c.h.s8.bf16 %v2073
        %v2866 = vunpack.c.h.s8.bf16 %v2074
        %v2867 = vunpack.c.h.s8.bf16 %v2075
        %v2868 = vunpack.c.l.s8.bf16 %v2076
        %v2869 = vunpack.c.l.s8.bf16 %v2077
        %v2870 = vunpack.c.l.s8.bf16 %v2078
        %v2871 = vunpack.c.l.s8.bf16 %v2079
        %v2872 = vunpack.c.h.s8.bf16 %v2076
        %v2873 = vunpack.c.h.s8.bf16 %v2077
        %v2874 = vunpack.c.h.s8.bf16 %v2078
        %v2875 = vunpack.c.h.s8.bf16 %v2079
        %v2876 = vunpack.c.l.s8.bf16 %v2080
        %v2877 = vunpack.c.l.s8.bf16 %v2081
        %v2878 = vunpack.c.l.s8.bf16 %v2082
        %v2879 = vunpack.c.l.s8.bf16 %v2083
        %v2880 = vunpack.c.h.s8.bf16 %v2080
        %v2881 = vunpack.c.h.s8.bf16 %v2081
        %v2882 = vunpack.c.h.s8.bf16 %v2082
        %v2883 = vunpack.c.h.s8.bf16 %v2083
        %2884 = vmatprep.subr.bf16.mxu0 %v2085
        %2885 = vmatpush1.bf16.msra.mxu0 %v2084
        %2886 = vmatprep.subr.bf16.mxu0 %v2089
        %2887 = vmatpush1.bf16.msra.mxu0 %v2088
        %2888 = vmatprep.subr.bf16.mxu0 %v2093
        %2889 = vmatpush1.bf16.msra.mxu0 %v2092
        %2890 = vmatprep.subr.bf16.mxu0 %v2097
        %2891 = vmatpush1.bf16.msra.mxu0 %v2096
        %2892 = vmatprep.subr.bf16.mxu0 %v2101
        %2893 = vmatpush1.bf16.msra.mxu0 %v2100
        %2894 = vmatprep.subr.bf16.mxu0 %v2105
        %2895 = vmatpush1.bf16.msra.mxu0 %v2104
        %2896 = vmatprep.subr.bf16.mxu0 %v2109
        %2897 = vmatpush1.bf16.msra.mxu0 %v2108
        %2898 = vmatprep.subr.bf16.mxu0 %v2113
        %2899 = vmatpush1.bf16.msra.mxu0 %v2112
        %2900 = vmatprep.subr.bf16.mxu0 %v2117
        %2901 = vmatpush1.bf16.msra.mxu0 %v2116
        %2902 = vmatprep.subr.bf16.mxu0 %v2121
        %2903 = vmatpush1.bf16.msra.mxu0 %v2120
        %2904 = vmatprep.subr.bf16.mxu0 %v2125
        %2905 = vmatpush1.bf16.msra.mxu0 %v2124
        %2906 = vmatprep.subr.bf16.mxu0 %v2129
        %2907 = vmatpush1.bf16.msra.mxu0 %v2128
        %2908 = vmatprep.subr.bf16.mxu0 %v2133
        %2909 = vmatpush1.bf16.msra.mxu0 %v2132
        %2910 = vmatprep.subr.bf16.mxu0 %v2137
        %2911 = vmatpush1.bf16.msra.mxu0 %v2136
        %2912 = vmatprep.subr.bf16.mxu0 %v2141
        %2913 = vmatpush1.bf16.msra.mxu0 %v2140
        %2914 = vmatprep.subr.bf16.mxu0 %v2145
        %2915 = vmatpush1.bf16.msra.mxu0 %v2144
        %2916 = vmatprep.mubr.bf16.mxu0 %v1660
        %2917 = vmatmul.mubr.bf16.gmra.mrb[0].mxu0 %v1659
        %v2918 = vpop.f32.mrb[0].mxu0
        %v2919 = vadd.f32 0.0, %v2918
        %v2920 = vpop.f32.mrb[0].mxu0
        %v2921 = vadd.f32 0.0, %v2920
        %v2922 = vpop.f32.mrb[0].mxu0
        %v2923 = vpop.f32.mrb[0].mxu0
        %2924 = vdwg.mxu0
        %2925 = vmatprep.subr.bf16.mxu0 %v2149
        %2926 = vmatpush1.bf16.msra.mxu0 %v2148
        %2927 = vmatprep.subr.bf16.mxu0 %v2153
        %2928 = vmatpush1.bf16.msra.mxu0 %v2152
        %2929 = vmatprep.subr.bf16.mxu0 %v2157
        %2930 = vmatpush1.bf16.msra.mxu0 %v2156
        %2931 = vmatprep.subr.bf16.mxu0 %v2161
        %2932 = vmatpush1.bf16.msra.mxu0 %v2160
        %2933 = vmatprep.subr.bf16.mxu0 %v2165
        %2934 = vmatpush1.bf16.msra.mxu0 %v2164
        %2935 = vmatprep.subr.bf16.mxu0 %v2169
        %2936 = vmatpush1.bf16.msra.mxu0 %v2168
        %2937 = vmatprep.subr.bf16.mxu0 %v2173
        %2938 = vmatpush1.bf16.msra.mxu0 %v2172
        %2939 = vmatprep.subr.bf16.mxu0 %v2177
        %2940 = vmatpush1.bf16.msra.mxu0 %v2176
        %2941 = vmatprep.subr.bf16.mxu0 %v2181
        %2942 = vmatpush1.bf16.msra.mxu0 %v2180
        %2943 = vmatprep.subr.bf16.mxu0 %v2185
        %2944 = vmatpush1.bf16.msra.mxu0 %v2184
        %2945 = vmatprep.subr.bf16.mxu0 %v2189
        %2946 = vmatpush1.bf16.msra.mxu0 %v2188
        %2947 = vmatprep.subr.bf16.mxu0 %v2193
        %2948 = vmatpush1.bf16.msra.mxu0 %v2192
        %2949 = vmatprep.subr.bf16.mxu0 %v2197
        %2950 = vmatpush1.bf16.msra.mxu0 %v2196
        %2951 = vmatprep.subr.bf16.mxu0 %v2201
        %2952 = vmatpush1.bf16.msra.mxu0 %v2200
        %2953 = vmatprep.subr.bf16.mxu0 %v2205
        %2954 = vmatpush1.bf16.msra.mxu0 %v2204
        %2955 = vmatprep.subr.bf16.mxu0 %v2209
        %2956 = vmatpush1.bf16.msra.mxu0 %v2208
        %2957 = vmatprep.mubr.bf16.mxu0 %v1662
        %2958 = vmatmul.mubr.bf16.gmra.mrb[0].mxu0 %v1661
        %v2959 = vpop.f32.mrb[0].mxu0
        %v2960 = vadd.f32 %v2919, %v2959
        %v2961 = vpop.f32.mrb[0].mxu0
        %v2962 = vadd.f32 %v2921, %v2961
        %v2963 = vpop.f32.mrb[0].mxu0
        %v2964 = vpop.f32.mrb[0].mxu0
        %2965 = vdwg.mxu0
        %2966 = vmatprep.subr.bf16.mxu0 %v2213
        %2967 = vmatpush1.bf16.msra.mxu0 %v2212
        %2968 = vmatprep.subr.bf16.mxu0 %v2217
        %2969 = vmatpush1.bf16.msra.mxu0 %v2216
        %2970 = vmatprep.subr.bf16.mxu0 %v2221
        %2971 = vmatpush1.bf16.msra.mxu0 %v2220
        %2972 = vmatprep.subr.bf16.mxu0 %v2225
        %2973 = vmatpush1.bf16.msra.mxu0 %v2224
        %2974 = vmatprep.subr.bf16.mxu0 %v2229
        %2975 = vmatpush1.bf16.msra.mxu0 %v2228
        %2976 = vmatprep.subr.bf16.mxu0 %v2233
        %2977 = vmatpush1.bf16.msra.mxu0 %v2232
        %2978 = vmatprep.subr.bf16.mxu0 %v2237
        %2979 = vmatpush1.bf16.msra.mxu0 %v2236
        %2980 = vmatprep.subr.bf16.mxu0 %v2241
        %2981 = vmatpush1.bf16.msra.mxu0 %v2240
        %2982 = vmatprep.subr.bf16.mxu0 %v2245
        %2983 = vmatpush1.bf16.msra.mxu0 %v2244
        %2984 = vmatprep.subr.bf16.mxu0 %v2249
        %2985 = vmatpush1.bf16.msra.mxu0 %v2248
        %2986 = vmatprep.subr.bf16.mxu0 %v2253
        %2987 = vmatpush1.bf16.msra.mxu0 %v2252
        %2988 = vmatprep.subr.bf16.mxu0 %v2257
        %2989 = vmatpush1.bf16.msra.mxu0 %v2256
        %2990 = vmatprep.subr.bf16.mxu0 %v2261
        %2991 = vmatpush1.bf16.msra.mxu0 %v2260
        %2992 = vmatprep.subr.bf16.mxu0 %v2265
        %2993 = vmatpush1.bf16.msra.mxu0 %v2264
        %2994 = vmatprep.subr.bf16.mxu0 %v2269
        %2995 = vmatpush1.bf16.msra.mxu0 %v2268
        %2996 = vmatprep.subr.bf16.mxu0 %v2273
        %2997 = vmatpush1.bf16.msra.mxu0 %v2272
        %2998 = vmatprep.mubr.bf16.mxu0 %v1664
        %2999 = vmatmul.mubr.bf16.gmra.mrb[0].mxu0 %v1663
        %v3000 = vpop.f32.mrb[0].mxu0
        %v3001 = vadd.f32 %v2960, %v3000
        %v3002 = vpop.f32.mrb[0].mxu0
        %v3003 = vadd.f32 %v2962, %v3002
        %v3004 = vpop.f32.mrb[0].mxu0
        %v3005 = vpop.f32.mrb[0].mxu0
        %3006 = vdwg.mxu0
        %3007 = vmatprep.subr.bf16.mxu0 %v2277
        %3008 = vmatpush1.bf16.msra.mxu0 %v2276
        %3009 = vmatprep.subr.bf16.mxu0 %v2281
        %3010 = vmatpush1.bf16.msra.mxu0 %v2280
        %3011 = vmatprep.subr.bf16.mxu0 %v2285
        %3012 = vmatpush1.bf16.msra.mxu0 %v2284
        %3013 = vmatprep.subr.bf16.mxu0 %v2289
        %3014 = vmatpush1.bf16.msra.mxu0 %v2288
        %3015 = vmatprep.subr.bf16.mxu0 %v2293
        %3016 = vmatpush1.bf16.msra.mxu0 %v2292
        %3017 = vmatprep.subr.bf16.mxu0 %v2297
        %3018 = vmatpush1.bf16.msra.mxu0 %v2296
        %3019 = vmatprep.subr.bf16.mxu0 %v2301
        %3020 = vmatpush1.bf16.msra.mxu0 %v2300
        %3021 = vmatprep.subr.bf16.mxu0 %v2305
        %3022 = vmatpush1.bf16.msra.mxu0 %v2304
        %3023 = vmatprep.subr.bf16.mxu0 %v2309
        %3024 = vmatpush1.bf16.msra.mxu0 %v2308
        %3025 = vmatprep.subr.bf16.mxu0 %v2313
        %3026 = vmatpush1.bf16.msra.mxu0 %v2312
        %3027 = vmatprep.subr.bf16.mxu0 %v2317
        %3028 = vmatpush1.bf16.msra.mxu0 %v2316
        %3029 = vmatprep.subr.bf16.mxu0 %v2321
        %3030 = vmatpush1.bf16.msra.mxu0 %v2320
        %3031 = vmatprep.subr.bf16.mxu0 %v2325
        %3032 = vmatpush1.bf16.msra.mxu0 %v2324
        %3033 = vmatprep.subr.bf16.mxu0 %v2329
        %3034 = vmatpush1.bf16.msra.mxu0 %v2328
        %3035 = vmatprep.subr.bf16.mxu0 %v2333
        %3036 = vmatpush1.bf16.msra.mxu0 %v2332
        %3037 = vmatprep.subr.bf16.mxu0 %v2337
        %3038 = vmatpush1.bf16.msra.mxu0 %v2336
        %3039 = vmatprep.mubr.bf16.mxu0 %v1666
        %3040 = vmatmul.mubr.bf16.gmra.mrb[0].mxu0 %v1665
        %v3041 = vpop.f32.mrb[0].mxu0
        %v3042 = vadd.f32 %v3001, %v3041
        %v3043 = vpop.f32.mrb[0].mxu0
        %v3044 = vadd.f32 %v3003, %v3043
        %v3045 = vpop.f32.mrb[0].mxu0
        %v3046 = vpop.f32.mrb[0].mxu0
        %3047 = vdwg.mxu0
        %3048 = vmatprep.subr.bf16.mxu0 %v2341
        %3049 = vmatpush1.bf16.msra.mxu0 %v2340
        %3050 = vmatprep.subr.bf16.mxu0 %v2345
        %3051 = vmatpush1.bf16.msra.mxu0 %v2344
        %3052 = vmatprep.subr.bf16.mxu0 %v2349
        %3053 = vmatpush1.bf16.msra.mxu0 %v2348
        %3054 = vmatprep.subr.bf16.mxu0 %v2353
        %3055 = vmatpush1.bf16.msra.mxu0 %v2352
        %3056 = vmatprep.subr.bf16.mxu0 %v2357
        %3057 = vmatpush1.bf16.msra.mxu0 %v2356
        %3058 = vmatprep.subr.bf16.mxu0 %v2361
        %3059 = vmatpush1.bf16.msra.mxu0 %v2360
        %3060 = vmatprep.subr.bf16.mxu0 %v2365
        %3061 = vmatpush1.bf16.msra.mxu0 %v2364
        %3062 = vmatprep.subr.bf16.mxu0 %v2369
        %3063 = vmatpush1.bf16.msra.mxu0 %v2368
        %3064 = vmatprep.subr.bf16.mxu0 %v2373
        %3065 = vmatpush1.bf16.msra.mxu0 %v2372
        %3066 = vmatprep.subr.bf16.mxu0 %v2377
        %3067 = vmatpush1.bf16.msra.mxu0 %v2376
        %3068 = vmatprep.subr.bf16.mxu0 %v2381
        %3069 = vmatpush1.bf16.msra.mxu0 %v2380
        %3070 = vmatprep.subr.bf16.mxu0 %v2385
        %3071 = vmatpush1.bf16.msra.mxu0 %v2384
        %3072 = vmatprep.subr.bf16.mxu0 %v2389
        %3073 = vmatpush1.bf16.msra.mxu0 %v2388
        %3074 = vmatprep.subr.bf16.mxu0 %v2393
        %3075 = vmatpush1.bf16.msra.mxu0 %v2392
        %3076 = vmatprep.subr.bf16.mxu0 %v2397
        %3077 = vmatpush1.bf16.msra.mxu0 %v2396
        %3078 = vmatprep.subr.bf16.mxu0 %v2401
        %3079 = vmatpush1.bf16.msra.mxu0 %v2400
        %3080 = vmatprep.mubr.bf16.mxu0 %v1668
        %3081 = vmatmul.mubr.bf16.gmra.mrb[0].mxu0 %v1667
        %v3082 = vpop.f32.mrb[0].mxu0
        %v3083 = vadd.f32 %v3042, %v3082
        %v3084 = vpop.f32.mrb[0].mxu0
        %v3085 = vadd.f32 %v3044, %v3084
        %v3086 = vpop.f32.mrb[0].mxu0
        %v3087 = vpop.f32.mrb[0].mxu0
        %3088 = vdwg.mxu0
        %3089 = vmatprep.subr.bf16.mxu0 %v2405
        %3090 = vmatpush1.bf16.msra.mxu0 %v2404
        %3091 = vmatprep.subr.bf16.mxu0 %v2409
        %3092 = vmatpush1.bf16.msra.mxu0 %v2408
        %3093 = vmatprep.subr.bf16.mxu0 %v2413
        %3094 = vmatpush1.bf16.msra.mxu0 %v2412
        %3095 = vmatprep.subr.bf16.mxu0 %v2417
        %3096 = vmatpush1.bf16.msra.mxu0 %v2416
        %3097 = vmatprep.subr.bf16.mxu0 %v2421
        %3098 = vmatpush1.bf16.msra.mxu0 %v2420
        %3099 = vmatprep.subr.bf16.mxu0 %v2425
        %3100 = vmatpush1.bf16.msra.mxu0 %v2424
        %3101 = vmatprep.subr.bf16.mxu0 %v2429
        %3102 = vmatpush1.bf16.msra.mxu0 %v2428
        %3103 = vmatprep.subr.bf16.mxu0 %v2433
        %3104 = vmatpush1.bf16.msra.mxu0 %v2432
        %3105 = vmatprep.subr.bf16.mxu0 %v2437
        %3106 = vmatpush1.bf16.msra.mxu0 %v2436
        %3107 = vmatprep.subr.bf16.mxu0 %v2441
        %3108 = vmatpush1.bf16.msra.mxu0 %v2440
        %3109 = vmatprep.subr.bf16.mxu0 %v2445
        %3110 = vmatpush1.bf16.msra.mxu0 %v2444
        %3111 = vmatprep.subr.bf16.mxu0 %v2449
        %3112 = vmatpush1.bf16.msra.mxu0 %v2448
        %3113 = vmatprep.subr.bf16.mxu0 %v2453
        %3114 = vmatpush1.bf16.msra.mxu0 %v2452
        %3115 = vmatprep.subr.bf16.mxu0 %v2457
        %3116 = vmatpush1.bf16.msra.mxu0 %v2456
        %3117 = vmatprep.subr.bf16.mxu0 %v2461
        %3118 = vmatpush1.bf16.msra.mxu0 %v2460
        %3119 = vmatprep.subr.bf16.mxu0 %v2465
        %3120 = vmatpush1.bf16.msra.mxu0 %v2464
        %3121 = vmatprep.mubr.bf16.mxu0 %v1670
        %3122 = vmatmul.mubr.bf16.gmra.mrb[0].mxu0 %v1669
        %v3123 = vpop.f32.mrb[0].mxu0
        %v3124 = vadd.f32 %v3083, %v3123
        %v3125 = vpop.f32.mrb[0].mxu0
        %v3126 = vadd.f32 %v3085, %v3125
        %v3127 = vpop.f32.mrb[0].mxu0
        %v3128 = vpop.f32.mrb[0].mxu0
        %3129 = vdwg.mxu0
        %3130 = vmatprep.subr.bf16.mxu0 %v2469
        %3131 = vmatpush1.bf16.msra.mxu0 %v2468
        %3132 = vmatprep.subr.bf16.mxu0 %v2473
        %3133 = vmatpush1.bf16.msra.mxu0 %v2472
        %3134 = vmatprep.subr.bf16.mxu0 %v2477
        %3135 = vmatpush1.bf16.msra.mxu0 %v2476
        %3136 = vmatprep.subr.bf16.mxu0 %v2481
        %3137 = vmatpush1.bf16.msra.mxu0 %v2480
        %3138 = vmatprep.subr.bf16.mxu0 %v2485
        %3139 = vmatpush1.bf16.msra.mxu0 %v2484
        %3140 = vmatprep.subr.bf16.mxu0 %v2489
        %3141 = vmatpush1.bf16.msra.mxu0 %v2488
        %3142 = vmatprep.subr.bf16.mxu0 %v2493
        %3143 = vmatpush1.bf16.msra.mxu0 %v2492
        %3144 = vmatprep.subr.bf16.mxu0 %v2497
        %3145 = vmatpush1.bf16.msra.mxu0 %v2496
        %3146 = vmatprep.subr.bf16.mxu0 %v2501
        %3147 = vmatpush1.bf16.msra.mxu0 %v2500
        %3148 = vmatprep.subr.bf16.mxu0 %v2505
        %3149 = vmatpush1.bf16.msra.mxu0 %v2504
        %3150 = vmatprep.subr.bf16.mxu0 %v2509
        %3151 = vmatpush1.bf16.msra.mxu0 %v2508
        %3152 = vmatprep.subr.bf16.mxu0 %v2513
        %3153 = vmatpush1.bf16.msra.mxu0 %v2512
        %3154 = vmatprep.subr.bf16.mxu0 %v2517
        %3155 = vmatpush1.bf16.msra.mxu0 %v2516
        %3156 = vmatprep.subr.bf16.mxu0 %v2521
        %3157 = vmatpush1.bf16.msra.mxu0 %v2520
        %3158 = vmatprep.subr.bf16.mxu0 %v2525
        %3159 = vmatpush1.bf16.msra.mxu0 %v2524
        %3160 = vmatprep.subr.bf16.mxu0 %v2529
        %3161 = vmatpush1.bf16.msra.mxu0 %v2528
        %3162 = vmatprep.mubr.bf16.mxu0 %v1672
        %3163 = vmatmul.mubr.bf16.gmra.mrb[0].mxu0 %v1671
        %v3164 = vpop.f32.mrb[0].mxu0
        %v3165 = vadd.f32 %v3124, %v3164
        %v3166 = vpop.f32.mrb[0].mxu0
        %v3167 = vadd.f32 %v3126, %v3166
        %v3168 = vpop.f32.mrb[0].mxu0
        %v3169 = vpop.f32.mrb[0].mxu0
        %3170 = vdwg.mxu0
        %3171 = vmatprep.subr.bf16.mxu0 %v2533
        %3172 = vmatpush1.bf16.msra.mxu0 %v2532
        %3173 = vmatprep.subr.bf16.mxu0 %v2537
        %3174 = vmatpush1.bf16.msra.mxu0 %v2536
        %3175 = vmatprep.subr.bf16.mxu0 %v2541
        %3176 = vmatpush1.bf16.msra.mxu0 %v2540
        %3177 = vmatprep.subr.bf16.mxu0 %v2545
        %3178 = vmatpush1.bf16.msra.mxu0 %v2544
        %3179 = vmatprep.subr.bf16.mxu0 %v2549
        %3180 = vmatpush1.bf16.msra.mxu0 %v2548
        %3181 = vmatprep.subr.bf16.mxu0 %v2553
        %3182 = vmatpush1.bf16.msra.mxu0 %v2552
        %3183 = vmatprep.subr.bf16.mxu0 %v2557
        %3184 = vmatpush1.bf16.msra.mxu0 %v2556
        %3185 = vmatprep.subr.bf16.mxu0 %v2561
        %3186 = vmatpush1.bf16.msra.mxu0 %v2560
        %3187 = vmatprep.subr.bf16.mxu0 %v2565
        %3188 = vmatpush1.bf16.msra.mxu0 %v2564
        %3189 = vmatprep.subr.bf16.mxu0 %v2569
        %3190 = vmatpush1.bf16.msra.mxu0 %v2568
        %3191 = vmatprep.subr.bf16.mxu0 %v2573
        %3192 = vmatpush1.bf16.msra.mxu0 %v2572
        %3193 = vmatprep.subr.bf16.mxu0 %v2577
        %3194 = vmatpush1.bf16.msra.mxu0 %v2576
        %3195 = vmatprep.subr.bf16.mxu0 %v2581
        %3196 = vmatpush1.bf16.msra.mxu0 %v2580
        %3197 = vmatprep.subr.bf16.mxu0 %v2585
        %3198 = vmatpush1.bf16.msra.mxu0 %v2584
        %3199 = vmatprep.subr.bf16.mxu0 %v2589
        %3200 = vmatpush1.bf16.msra.mxu0 %v2588
        %3201 = vmatprep.subr.bf16.mxu0 %v2593
        %3202 = vmatpush1.bf16.msra.mxu0 %v2592
        %3203 = vmatprep.mubr.bf16.mxu0 %v1674
        %3204 = vmatmul.mubr.bf16.gmra.mrb[0].mxu0 %v1673
        %v3205 = vpop.f32.mrb[0].mxu0
        %v3206 = vadd.f32 %v3165, %v3205
        %v3207 = vpop.f32.mrb[0].mxu0
        %v3208 = vadd.f32 %v3167, %v3207
        %v3209 = vpop.f32.mrb[0].mxu0
        %v3210 = vpop.f32.mrb[0].mxu0
        %3211 = vdwg.mxu0
        %3212 = vmatprep.subr.bf16.mxu0 %v2597
        %3213 = vmatpush1.bf16.msra.mxu0 %v2596
        %3214 = vmatprep.subr.bf16.mxu0 %v2601
        %3215 = vmatpush1.bf16.msra.mxu0 %v2600
        %3216 = vmatprep.subr.bf16.mxu0 %v2605
        %3217 = vmatpush1.bf16.msra.mxu0 %v2604
        %3218 = vmatprep.subr.bf16.mxu0 %v2609
        %3219 = vmatpush1.bf16.msra.mxu0 %v2608
        %3220 = vmatprep.subr.bf16.mxu0 %v2613
        %3221 = vmatpush1.bf16.msra.mxu0 %v2612
        %3222 = vmatprep.subr.bf16.mxu0 %v2617
        %3223 = vmatpush1.bf16.msra.mxu0 %v2616
        %3224 = vmatprep.subr.bf16.mxu0 %v2621
        %3225 = vmatpush1.bf16.msra.mxu0 %v2620
        %3226 = vmatprep.subr.bf16.mxu0 %v2625
        %3227 = vmatpush1.bf16.msra.mxu0 %v2624
        %3228 = vmatprep.subr.bf16.mxu0 %v2629
        %3229 = vmatpush1.bf16.msra.mxu0 %v2628
        %3230 = vmatprep.subr.bf16.mxu0 %v2633
        %3231 = vmatpush1.bf16.msra.mxu0 %v2632
        %3232 = vmatprep.subr.bf16.mxu0 %v2637
        %3233 = vmatpush1.bf16.msra.mxu0 %v2636
        %3234 = vmatprep.subr.bf16.mxu0 %v2641
        %3235 = vmatpush1.bf16.msra.mxu0 %v2640
        %3236 = vmatprep.subr.bf16.mxu0 %v2645
        %3237 = vmatpush1.bf16.msra.mxu0 %v2644
        %3238 = vmatprep.subr.bf16.mxu0 %v2649
        %3239 = vmatpush1.bf16.msra.mxu0 %v2648
        %3240 = vmatprep.subr.bf16.mxu0 %v2653
        %3241 = vmatpush1.bf16.msra.mxu0 %v2652
        %3242 = vmatprep.subr.bf16.mxu0 %v2657
        %3243 = vmatpush1.bf16.msra.mxu0 %v2656
        %3244 = vmatprep.mubr.bf16.mxu0 %v1676
        %3245 = vmatmul.mubr.bf16.gmra.mrb[0].mxu0 %v1675
        %v3246 = vpop.f32.mrb[0].mxu0
        %v3247 = vadd.f32 %v3206, %v3246
        %v3248 = vpop.f32.mrb[0].mxu0
        %v3249 = vadd.f32 %v3208, %v3248
        %v3250 = vpop.f32.mrb[0].mxu0
        %v3251 = vpop.f32.mrb[0].mxu0
        %3252 = vdwg.mxu0
        %3253 = vmatprep.subr.bf16.mxu0 %v2661
        %3254 = vmatpush1.bf16.msra.mxu0 %v2660
        %3255 = vmatprep.subr.bf16.mxu0 %v2665
        %3256 = vmatpush1.bf16.msra.mxu0 %v2664
        %3257 = vmatprep.subr.bf16.mxu0 %v2669
        %3258 = vmatpush1.bf16.msra.mxu0 %v2668
        %3259 = vmatprep.subr.bf16.mxu0 %v2673
        %3260 = vmatpush1.bf16.msra.mxu0 %v2672
        %3261 = vmatprep.subr.bf16.mxu0 %v2677
        %3262 = vmatpush1.bf16.msra.mxu0 %v2676
        %3263 = vmatprep.subr.bf16.mxu0 %v2681
        %3264 = vmatpush1.bf16.msra.mxu0 %v2680
        %3265 = vmatprep.subr.bf16.mxu0 %v2685
        %3266 = vmatpush1.bf16.msra.mxu0 %v2684
        %3267 = vmatprep.subr.bf16.mxu0 %v2689
        %3268 = vmatpush1.bf16.msra.mxu0 %v2688
        %3269 = vmatprep.subr.bf16.mxu0 %v2693
        %3270 = vmatpush1.bf16.msra.mxu0 %v2692
        %3271 = vmatprep.subr.bf16.mxu0 %v2697
        %3272 = vmatpush1.bf16.msra.mxu0 %v2696
        %3273 = vmatprep.subr.bf16.mxu0 %v2701
        %3274 = vmatpush1.bf16.msra.mxu0 %v2700
        %3275 = vmatprep.subr.bf16.mxu0 %v2705
        %3276 = vmatpush1.bf16.msra.mxu0 %v2704
        %3277 = vmatprep.subr.bf16.mxu0 %v2709
        %3278 = vmatpush1.bf16.msra.mxu0 %v2708
        %3279 = vmatprep.subr.bf16.mxu0 %v2713
        %3280 = vmatpush1.bf16.msra.mxu0 %v2712
        %3281 = vmatprep.subr.bf16.mxu0 %v2717
        %3282 = vmatpush1.bf16.msra.mxu0 %v2716
        %3283 = vmatprep.subr.bf16.mxu0 %v2721
        %3284 = vmatpush1.bf16.msra.mxu0 %v2720
        %3285 = vmatprep.mubr.bf16.mxu0 %v1678
        %3286 = vmatmul.mubr.bf16.gmra.mrb[0].mxu0 %v1677
        %v3287 = vpop.f32.mrb[0].mxu0
        %v3288 = vadd.f32 %v3247, %v3287
        %v3289 = vpop.f32.mrb[0].mxu0
        %v3290 = vadd.f32 %v3249, %v3289
        %v3291 = vpop.f32.mrb[0].mxu0
        %v3292 = vpop.f32.mrb[0].mxu0
        %3293 = vdwg.mxu0
        %3294 = vmatprep.subr.bf16.mxu0 %v2725
        %3295 = vmatpush1.bf16.msra.mxu0 %v2724
        %3296 = vmatprep.subr.bf16.mxu0 %v2729
        %3297 = vmatpush1.bf16.msra.mxu0 %v2728
        %3298 = vmatprep.subr.bf16.mxu0 %v2733
        %3299 = vmatpush1.bf16.msra.mxu0 %v2732
        %3300 = vmatprep.subr.bf16.mxu0 %v2737
        %3301 = vmatpush1.bf16.msra.mxu0 %v2736
        %3302 = vmatprep.subr.bf16.mxu0 %v2741
        %3303 = vmatpush1.bf16.msra.mxu0 %v2740
        %3304 = vmatprep.subr.bf16.mxu0 %v2745
        %3305 = vmatpush1.bf16.msra.mxu0 %v2744
        %3306 = vmatprep.subr.bf16.mxu0 %v2749
        %3307 = vmatpush1.bf16.msra.mxu0 %v2748
        %3308 = vmatprep.subr.bf16.mxu0 %v2753
        %3309 = vmatpush1.bf16.msra.mxu0 %v2752
        %3310 = vmatprep.subr.bf16.mxu0 %v2757
        %3311 = vmatpush1.bf16.msra.mxu0 %v2756
        %3312 = vmatprep.subr.bf16.mxu0 %v2761
        %3313 = vmatpush1.bf16.msra.mxu0 %v2760
        %3314 = vmatprep.subr.bf16.mxu0 %v2765
        %3315 = vmatpush1.bf16.msra.mxu0 %v2764
        %3316 = vmatprep.subr.bf16.mxu0 %v2769
        %3317 = vmatpush1.bf16.msra.mxu0 %v2768
        %3318 = vmatprep.subr.bf16.mxu0 %v2773
        %3319 = vmatpush1.bf16.msra.mxu0 %v2772
        %3320 = vmatprep.subr.bf16.mxu0 %v2777
        %3321 = vmatpush1.bf16.msra.mxu0 %v2776
        %3322 = vmatprep.subr.bf16.mxu0 %v2781
        %3323 = vmatpush1.bf16.msra.mxu0 %v2780
        %3324 = vmatprep.subr.bf16.mxu0 %v2785
        %3325 = vmatpush1.bf16.msra.mxu0 %v2784
        %3326 = vmatprep.mubr.bf16.mxu0 %v1680
        %3327 = vmatmul.mubr.bf16.gmra.mrb[0].mxu0 %v1679
        %v3328 = vpop.f32.mrb[0].mxu0
        %v3329 = vadd.f32 %v3288, %v3328
        %v3330 = vpop.f32.mrb[0].mxu0
        %v3331 = vadd.f32 %v3290, %v3330
        %v3332 = vpop.f32.mrb[0].mxu0
        %v3333 = vpop.f32.mrb[0].mxu0
        %3334 = vdwg.mxu0
        %3335 = vmatprep.subr.bf16.mxu0 %v2789
        %3336 = vmatpush1.bf16.msra.mxu0 %v2788
        %3337 = vmatprep.subr.bf16.mxu0 %v2793
        %3338 = vmatpush1.bf16.msra.mxu0 %v2792
        %3339 = vmatprep.subr.bf16.mxu0 %v2797
        %3340 = vmatpush1.bf16.msra.mxu0 %v2796
        %3341 = vmatprep.subr.bf16.mxu0 %v2801
        %3342 = vmatpush1.bf16.msra.mxu0 %v2800
        %3343 = vmatprep.subr.bf16.mxu0 %v2805
        %3344 = vmatpush1.bf16.msra.mxu0 %v2804
        %3345 = vmatprep.subr.bf16.mxu0 %v2809
        %3346 = vmatpush1.bf16.msra.mxu0 %v2808
        %3347 = vmatprep.subr.bf16.mxu0 %v2813
        %3348 = vmatpush1.bf16.msra.mxu0 %v2812
        %3349 = vmatprep.subr.bf16.mxu0 %v2817
        %3350 = vmatpush1.bf16.msra.mxu0 %v2816
        %3351 = vmatprep.subr.bf16.mxu0 %v2821
        %3352 = vmatpush1.bf16.msra.mxu0 %v2820
        %3353 = vmatprep.subr.bf16.mxu0 %v2825
        %3354 = vmatpush1.bf16.msra.mxu0 %v2824
        %3355 = vmatprep.subr.bf16.mxu0 %v2829
        %3356 = vmatpush1.bf16.msra.mxu0 %v2828
        %3357 = vmatprep.subr.bf16.mxu0 %v2833
        %3358 = vmatpush1.bf16.msra.mxu0 %v2832
        %3359 = vmatprep.subr.bf16.mxu0 %v2837
        %3360 = vmatpush1.bf16.msra.mxu0 %v2836
        %3361 = vmatprep.subr.bf16.mxu0 %v2841
        %3362 = vmatpush1.bf16.msra.mxu0 %v2840
        %3363 = vmatprep.subr.bf16.mxu0 %v2845
        %3364 = vmatpush1.bf16.msra.mxu0 %v2844
        %3365 = vmatprep.subr.bf16.mxu0 %v2849
        %3366 = vmatpush1.bf16.msra.mxu0 %v2848
        %3367 = vmatprep.mubr.bf16.mxu0 %v1682
        %3368 = vmatmul.mubr.bf16.gmra.mrb[0].mxu0 %v1681
        %v3369 = vpop.f32.mrb[0].mxu0
        %v3370 = vadd.f32 %v3329, %v3369
        %v3371 = vpop.f32.mrb[0].mxu0
        %v3372 = vadd.f32 %v3331, %v3371
        %v3373 = vpop.f32.mrb[0].mxu0
        %v3374 = vpop.f32.mrb[0].mxu0
        %3375 = vdwg.mxu0
        %3376 = vmatprep.subr.bf16.mxu0 %v2853
        %3377 = vmatpush1.bf16.msra.mxu0 %v2852
        %3378 = vmatprep.subr.bf16.mxu0 %v2857
        %3379 = vmatpush1.bf16.msra.mxu0 %v2856
        %3380 = vmatprep.subr.bf16.mxu0 %v2861
        %3381 = vmatpush1.bf16.msra.mxu0 %v2860
        %3382 = vmatprep.subr.bf16.mxu0 %v2865
        %3383 = vmatpush1.bf16.msra.mxu0 %v2864
        %3384 = vmatprep.subr.bf16.mxu0 %v2869
        %3385 = vmatpush1.bf16.msra.mxu0 %v2868
        %3386 = vmatprep.subr.bf16.mxu0 %v2873
        %3387 = vmatpush1.bf16.msra.mxu0 %v2872
        %3388 = vmatprep.subr.bf16.mxu0 %v2877
        %3389 = vmatpush1.bf16.msra.mxu0 %v2876
        %3390 = vmatprep.subr.bf16.mxu0 %v2881
        %3391 = vmatpush1.bf16.msra.mxu0 %v2880
        %3392 = vmatprep.subr.bf16.mxu0 0
        %3393 = vmatpush1.bf16.msra.mxu0 0
        %3394 = vmatprep.subr.bf16.mxu0 0
        %3395 = vmatpush1.bf16.msra.mxu0 0
        %3396 = vmatprep.subr.bf16.mxu0 0
        %3397 = vmatpush1.bf16.msra.mxu0 0
        %3398 = vmatprep.subr.bf16.mxu0 0
        %3399 = vmatpush1.bf16.msra.mxu0 0
        %3400 = vmatprep.subr.bf16.mxu0 0
        %3401 = vmatpush1.bf16.msra.mxu0 0
        %3402 = vmatprep.subr.bf16.mxu0 0
        %3403 = vmatpush1.bf16.msra.mxu0 0
        %3404 = vmatprep.subr.bf16.mxu0 0
        %3405 = vmatpush1.bf16.msra.mxu0 0
        %3406 = vmatprep.subr.bf16.mxu0 0
        %3407 = vmatpush1.bf16.msra.mxu0 0
        %3408 = vmatprep.mubr.bf16.mxu0 0
        %3409 = vmatmul.mubr.bf16.gmra.mrb[0].mxu0 %v1683
        %v3410 = vpop.f32.mrb[0].mxu0
        %v3411 = vadd.f32 %v3370, %v3410
        %v3412 = vpop.f32.mrb[0].mxu0
        %v3413 = vadd.f32 %v3372, %v3412
        %v3414 = vpop.f32.mrb[0].mxu0
        %v3415 = vpop.f32.mrb[0].mxu0
        %3416 = vdwg.mxu0
        %3417 = vmatprep.subr.bf16.mxu0 %v2087
        %3418 = vmatpush1.bf16.msra.mxu0 %v2086
        %3419 = vmatprep.subr.bf16.mxu0 %v2091
        %3420 = vmatpush1.bf16.msra.mxu0 %v2090
        %3421 = vmatprep.subr.bf16.mxu0 %v2095
        %3422 = vmatpush1.bf16.msra.mxu0 %v2094
        %3423 = vmatprep.subr.bf16.mxu0 %v2099
        %3424 = vmatpush1.bf16.msra.mxu0 %v2098
        %3425 = vmatprep.subr.bf16.mxu0 %v2103
        %3426 = vmatpush1.bf16.msra.mxu0 %v2102
        %3427 = vmatprep.subr.bf16.mxu0 %v2107
        %3428 = vmatpush1.bf16.msra.mxu0 %v2106
        %3429 = vmatprep.subr.bf16.mxu0 %v2111
        %3430 = vmatpush1.bf16.msra.mxu0 %v2110
        %3431 = vmatprep.subr.bf16.mxu0 %v2115
        %3432 = vmatpush1.bf16.msra.mxu0 %v2114
        %3433 = vmatprep.subr.bf16.mxu0 %v2119
        %3434 = vmatpush1.bf16.msra.mxu0 %v2118
        %3435 = vmatprep.subr.bf16.mxu0 %v2123
        %3436 = vmatpush1.bf16.msra.mxu0 %v2122
        %3437 = vmatprep.subr.bf16.mxu0 %v2127
        %3438 = vmatpush1.bf16.msra.mxu0 %v2126
        %3439 = vmatprep.subr.bf16.mxu0 %v2131
        %3440 = vmatpush1.bf16.msra.mxu0 %v2130
        %3441 = vmatprep.subr.bf16.mxu0 %v2135
        %3442 = vmatpush1.bf16.msra.mxu0 %v2134
        %3443 = vmatprep.subr.bf16.mxu0 %v2139
        %3444 = vmatpush1.bf16.msra.mxu0 %v2138
        %3445 = vmatprep.subr.bf16.mxu0 %v2143
        %3446 = vmatpush1.bf16.msra.mxu0 %v2142
        %3447 = vmatprep.subr.bf16.mxu0 %v2147
        %3448 = vmatpush1.bf16.msra.mxu0 %v2146
        %3449 = vmatprep.mubr.bf16.mxu0 %v1660
        %3450 = vmatmul.mubr.bf16.gmra.mrb[0].mxu0 %v1659
        %v3451 = vpop.f32.mrb[0].mxu0
        %v3452 = vadd.f32 0.0, %v3451
        %v3453 = vpop.f32.mrb[0].mxu0
        %v3454 = vadd.f32 0.0, %v3453
        %v3455 = vpop.f32.mrb[0].mxu0
        %v3456 = vpop.f32.mrb[0].mxu0
        %3457 = vdwg.mxu0
        %3458 = vmatprep.subr.bf16.mxu0 %v2151
        %3459 = vmatpush1.bf16.msra.mxu0 %v2150
        %3460 = vmatprep.subr.bf16.mxu0 %v2155
        %3461 = vmatpush1.bf16.msra.mxu0 %v2154
        %3462 = vmatprep.subr.bf16.mxu0 %v2159
        %3463 = vmatpush1.bf16.msra.mxu0 %v2158
        %3464 = vmatprep.subr.bf16.mxu0 %v2163
        %3465 = vmatpush1.bf16.msra.mxu0 %v2162
        %3466 = vmatprep.subr.bf16.mxu0 %v2167
        %3467 = vmatpush1.bf16.msra.mxu0 %v2166
        %3468 = vmatprep.subr.bf16.mxu0 %v2171
        %3469 = vmatpush1.bf16.msra.mxu0 %v2170
        %3470 = vmatprep.subr.bf16.mxu0 %v2175
        %3471 = vmatpush1.bf16.msra.mxu0 %v2174
        %3472 = vmatprep.subr.bf16.mxu0 %v2179
        %3473 = vmatpush1.bf16.msra.mxu0 %v2178
        %3474 = vmatprep.subr.bf16.mxu0 %v2183
        %3475 = vmatpush1.bf16.msra.mxu0 %v2182
        %3476 = vmatprep.subr.bf16.mxu0 %v2187
        %3477 = vmatpush1.bf16.msra.mxu0 %v2186
        %3478 = vmatprep.subr.bf16.mxu0 %v2191
        %3479 = vmatpush1.bf16.msra.mxu0 %v2190
        %3480 = vmatprep.subr.bf16.mxu0 %v2195
        %3481 = vmatpush1.bf16.msra.mxu0 %v2194
        %3482 = vmatprep.subr.bf16.mxu0 %v2199
        %3483 = vmatpush1.bf16.msra.mxu0 %v2198
        %3484 = vmatprep.subr.bf16.mxu0 %v2203
        %3485 = vmatpush1.bf16.msra.mxu0 %v2202
        %3486 = vmatprep.subr.bf16.mxu0 %v2207
        %3487 = vmatpush1.bf16.msra.mxu0 %v2206
        %3488 = vmatprep.subr.bf16.mxu0 %v2211
        %3489 = vmatpush1.bf16.msra.mxu0 %v2210
        %3490 = vmatprep.mubr.bf16.mxu0 %v1662
        %3491 = vmatmul.mubr.bf16.gmra.mrb[0].mxu0 %v1661
        %v3492 = vpop.f32.mrb[0].mxu0
        %v3493 = vadd.f32 %v3452, %v3492
        %v3494 = vpop.f32.mrb[0].mxu0
        %v3495 = vadd.f32 %v3454, %v3494
        %v3496 = vpop.f32.mrb[0].mxu0
        %v3497 = vpop.f32.mrb[0].mxu0
        %3498 = vdwg.mxu0
        %3499 = vmatprep.subr.bf16.mxu0 %v2215
        %3500 = vmatpush1.bf16.msra.mxu0 %v2214
        %3501 = vmatprep.subr.bf16.mxu0 %v2219
        %3502 = vmatpush1.bf16.msra.mxu0 %v2218
        %3503 = vmatprep.subr.bf16.mxu0 %v2223
        %3504 = vmatpush1.bf16.msra.mxu0 %v2222
        %3505 = vmatprep.subr.bf16.mxu0 %v2227
        %3506 = vmatpush1.bf16.msra.mxu0 %v2226
        %3507 = vmatprep.subr.bf16.mxu0 %v2231
        %3508 = vmatpush1.bf16.msra.mxu0 %v2230
        %3509 = vmatprep.subr.bf16.mxu0 %v2235
        %3510 = vmatpush1.bf16.msra.mxu0 %v2234
        %3511 = vmatprep.subr.bf16.mxu0 %v2239
        %3512 = vmatpush1.bf16.msra.mxu0 %v2238
        %3513 = vmatprep.subr.bf16.mxu0 %v2243
        %3514 = vmatpush1.bf16.msra.mxu0 %v2242
        %3515 = vmatprep.subr.bf16.mxu0 %v2247
        %3516 = vmatpush1.bf16.msra.mxu0 %v2246
        %3517 = vmatprep.subr.bf16.mxu0 %v2251
        %3518 = vmatpush1.bf16.msra.mxu0 %v2250
        %3519 = vmatprep.subr.bf16.mxu0 %v2255
        %3520 = vmatpush1.bf16.msra.mxu0 %v2254
        %3521 = vmatprep.subr.bf16.mxu0 %v2259
        %3522 = vmatpush1.bf16.msra.mxu0 %v2258
        %3523 = vmatprep.subr.bf16.mxu0 %v2263
        %3524 = vmatpush1.bf16.msra.mxu0 %v2262
        %3525 = vmatprep.subr.bf16.mxu0 %v2267
        %3526 = vmatpush1.bf16.msra.mxu0 %v2266
        %3527 = vmatprep.subr.bf16.mxu0 %v2271
        %3528 = vmatpush1.bf16.msra.mxu0 %v2270
        %3529 = vmatprep.subr.bf16.mxu0 %v2275
        %3530 = vmatpush1.bf16.msra.mxu0 %v2274
        %3531 = vmatprep.mubr.bf16.mxu0 %v1664
        %3532 = vmatmul.mubr.bf16.gmra.mrb[0].mxu0 %v1663
        %v3533 = vpop.f32.mrb[0].mxu0
        %v3534 = vadd.f32 %v3493, %v3533
        %v3535 = vpop.f32.mrb[0].mxu0
        %v3536 = vadd.f32 %v3495, %v3535
        %v3537 = vpop.f32.mrb[0].mxu0
        %v3538 = vpop.f32.mrb[0].mxu0
        %3539 = vdwg.mxu0
        %3540 = vmatprep.subr.bf16.mxu0 %v2279
        %3541 = vmatpush1.bf16.msra.mxu0 %v2278
        %3542 = vmatprep.subr.bf16.mxu0 %v2283
        %3543 = vmatpush1.bf16.msra.mxu0 %v2282
        %3544 = vmatprep.subr.bf16.mxu0 %v2287
        %3545 = vmatpush1.bf16.msra.mxu0 %v2286
        %3546 = vmatprep.subr.bf16.mxu0 %v2291
        %3547 = vmatpush1.bf16.msra.mxu0 %v2290
        %3548 = vmatprep.subr.bf16.mxu0 %v2295
        %3549 = vmatpush1.bf16.msra.mxu0 %v2294
        %3550 = vmatprep.subr.bf16.mxu0 %v2299
        %3551 = vmatpush1.bf16.msra.mxu0 %v2298
        %3552 = vmatprep.subr.bf16.mxu0 %v2303
        %3553 = vmatpush1.bf16.msra.mxu0 %v2302
        %3554 = vmatprep.subr.bf16.mxu0 %v2307
        %3555 = vmatpush1.bf16.msra.mxu0 %v2306
        %3556 = vmatprep.subr.bf16.mxu0 %v2311
        %3557 = vmatpush1.bf16.msra.mxu0 %v2310
        %3558 = vmatprep.subr.bf16.mxu0 %v2315
        %3559 = vmatpush1.bf16.msra.mxu0 %v2314
        %3560 = vmatprep.subr.bf16.mxu0 %v2319
        %3561 = vmatpush1.bf16.msra.mxu0 %v2318
        %3562 = vmatprep.subr.bf16.mxu0 %v2323
        %3563 = vmatpush1.bf16.msra.mxu0 %v2322
        %3564 = vmatprep.subr.bf16.mxu0 %v2327
        %3565 = vmatpush1.bf16.msra.mxu0 %v2326
        %3566 = vmatprep.subr.bf16.mxu0 %v2331
        %3567 = vmatpush1.bf16.msra.mxu0 %v2330
        %3568 = vmatprep.subr.bf16.mxu0 %v2335
        %3569 = vmatpush1.bf16.msra.mxu0 %v2334
        %3570 = vmatprep.subr.bf16.mxu0 %v2339
        %3571 = vmatpush1.bf16.msra.mxu0 %v2338
        %3572 = vmatprep.mubr.bf16.mxu0 %v1666
        %3573 = vmatmul.mubr.bf16.gmra.mrb[0].mxu0 %v1665
        %v3574 = vpop.f32.mrb[0].mxu0
        %v3575 = vadd.f32 %v3534, %v3574
        %v3576 = vpop.f32.mrb[0].mxu0
        %v3577 = vadd.f32 %v3536, %v3576
        %v3578 = vpop.f32.mrb[0].mxu0
        %v3579 = vpop.f32.mrb[0].mxu0
        %3580 = vdwg.mxu0
        %3581 = vmatprep.subr.bf16.mxu0 %v2343
        %3582 = vmatpush1.bf16.msra.mxu0 %v2342
        %3583 = vmatprep.subr.bf16.mxu0 %v2347
        %3584 = vmatpush1.bf16.msra.mxu0 %v2346
        %3585 = vmatprep.subr.bf16.mxu0 %v2351
        %3586 = vmatpush1.bf16.msra.mxu0 %v2350
        %3587 = vmatprep.subr.bf16.mxu0 %v2355
        %3588 = vmatpush1.bf16.msra.mxu0 %v2354
        %3589 = vmatprep.subr.bf16.mxu0 %v2359
        %3590 = vmatpush1.bf16.msra.mxu0 %v2358
        %3591 = vmatprep.subr.bf16.mxu0 %v2363
        %3592 = vmatpush1.bf16.msra.mxu0 %v2362
        %3593 = vmatprep.subr.bf16.mxu0 %v2367
        %3594 = vmatpush1.bf16.msra.mxu0 %v2366
        %3595 = vmatprep.subr.bf16.mxu0 %v2371
        %3596 = vmatpush1.bf16.msra.mxu0 %v2370
        %3597 = vmatprep.subr.bf16.mxu0 %v2375
        %3598 = vmatpush1.bf16.msra.mxu0 %v2374
        %3599 = vmatprep.subr.bf16.mxu0 %v2379
        %3600 = vmatpush1.bf16.msra.mxu0 %v2378
        %3601 = vmatprep.subr.bf16.mxu0 %v2383
        %3602 = vmatpush1.bf16.msra.mxu0 %v2382
        %3603 = vmatprep.subr.bf16.mxu0 %v2387
        %3604 = vmatpush1.bf16.msra.mxu0 %v2386
        %3605 = vmatprep.subr.bf16.mxu0 %v2391
        %3606 = vmatpush1.bf16.msra.mxu0 %v2390
        %3607 = vmatprep.subr.bf16.mxu0 %v2395
        %3608 = vmatpush1.bf16.msra.mxu0 %v2394
        %3609 = vmatprep.subr.bf16.mxu0 %v2399
        %3610 = vmatpush1.bf16.msra.mxu0 %v2398
        %3611 = vmatprep.subr.bf16.mxu0 %v2403
        %3612 = vmatpush1.bf16.msra.mxu0 %v2402
        %3613 = vmatprep.mubr.bf16.mxu0 %v1668
        %3614 = vmatmul.mubr.bf16.gmra.mrb[0].mxu0 %v1667
        %v3615 = vpop.f32.mrb[0].mxu0
        %v3616 = vadd.f32 %v3575, %v3615
        %v3617 = vpop.f32.mrb[0].mxu0
        %v3618 = vadd.f32 %v3577, %v3617
        %v3619 = vpop.f32.mrb[0].mxu0
        %v3620 = vpop.f32.mrb[0].mxu0
        %3621 = vdwg.mxu0
        %3622 = vmatprep.subr.bf16.mxu0 %v2407
        %3623 = vmatpush1.bf16.msra.mxu0 %v2406
        %3624 = vmatprep.subr.bf16.mxu0 %v2411
        %3625 = vmatpush1.bf16.msra.mxu0 %v2410
        %3626 = vmatprep.subr.bf16.mxu0 %v2415
        %3627 = vmatpush1.bf16.msra.mxu0 %v2414
        %3628 = vmatprep.subr.bf16.mxu0 %v2419
        %3629 = vmatpush1.bf16.msra.mxu0 %v2418
        %3630 = vmatprep.subr.bf16.mxu0 %v2423
        %3631 = vmatpush1.bf16.msra.mxu0 %v2422
        %3632 = vmatprep.subr.bf16.mxu0 %v2427
        %3633 = vmatpush1.bf16.msra.mxu0 %v2426
        %3634 = vmatprep.subr.bf16.mxu0 %v2431
        %3635 = vmatpush1.bf16.msra.mxu0 %v2430
        %3636 = vmatprep.subr.bf16.mxu0 %v2435
        %3637 = vmatpush1.bf16.msra.mxu0 %v2434
        %3638 = vmatprep.subr.bf16.mxu0 %v2439
        %3639 = vmatpush1.bf16.msra.mxu0 %v2438
        %3640 = vmatprep.subr.bf16.mxu0 %v2443
        %3641 = vmatpush1.bf16.msra.mxu0 %v2442
        %3642 = vmatprep.subr.bf16.mxu0 %v2447
        %3643 = vmatpush1.bf16.msra.mxu0 %v2446
        %3644 = vmatprep.subr.bf16.mxu0 %v2451
        %3645 = vmatpush1.bf16.msra.mxu0 %v2450
        %3646 = vmatprep.subr.bf16.mxu0 %v2455
        %3647 = vmatpush1.bf16.msra.mxu0 %v2454
        %3648 = vmatprep.subr.bf16.mxu0 %v2459
        %3649 = vmatpush1.bf16.msra.mxu0 %v2458
        %3650 = vmatprep.subr.bf16.mxu0 %v2463
        %3651 = vmatpush1.bf16.msra.mxu0 %v2462
        %3652 = vmatprep.subr.bf16.mxu0 %v2467
        %3653 = vmatpush1.bf16.msra.mxu0 %v2466
        %3654 = vmatprep.mubr.bf16.mxu0 %v1670
        %3655 = vmatmul.mubr.bf16.gmra.mrb[0].mxu0 %v1669
        %v3656 = vpop.f32.mrb[0].mxu0
        %v3657 = vadd.f32 %v3616, %v3656
        %v3658 = vpop.f32.mrb[0].mxu0
        %v3659 = vadd.f32 %v3618, %v3658
        %v3660 = vpop.f32.mrb[0].mxu0
        %v3661 = vpop.f32.mrb[0].mxu0
        %3662 = vdwg.mxu0
        %3663 = vmatprep.subr.bf16.mxu0 %v2471
        %3664 = vmatpush1.bf16.msra.mxu0 %v2470
        %3665 = vmatprep.subr.bf16.mxu0 %v2475
        %3666 = vmatpush1.bf16.msra.mxu0 %v2474
        %3667 = vmatprep.subr.bf16.mxu0 %v2479
        %3668 = vmatpush1.bf16.msra.mxu0 %v2478
        %3669 = vmatprep.subr.bf16.mxu0 %v2483
        %3670 = vmatpush1.bf16.msra.mxu0 %v2482
        %3671 = vmatprep.subr.bf16.mxu0 %v2487
        %3672 = vmatpush1.bf16.msra.mxu0 %v2486
        %3673 = vmatprep.subr.bf16.mxu0 %v2491
        %3674 = vmatpush1.bf16.msra.mxu0 %v2490
        %3675 = vmatprep.subr.bf16.mxu0 %v2495
        %3676 = vmatpush1.bf16.msra.mxu0 %v2494
        %3677 = vmatprep.subr.bf16.mxu0 %v2499
        %3678 = vmatpush1.bf16.msra.mxu0 %v2498
        %3679 = vmatprep.subr.bf16.mxu0 %v2503
        %3680 = vmatpush1.bf16.msra.mxu0 %v2502
        %3681 = vmatprep.subr.bf16.mxu0 %v2507
        %3682 = vmatpush1.bf16.msra.mxu0 %v2506
        %3683 = vmatprep.subr.bf16.mxu0 %v2511
        %3684 = vmatpush1.bf16.msra.mxu0 %v2510
        %3685 = vmatprep.subr.bf16.mxu0 %v2515
        %3686 = vmatpush1.bf16.msra.mxu0 %v2514
        %3687 = vmatprep.subr.bf16.mxu0 %v2519
        %3688 = vmatpush1.bf16.msra.mxu0 %v2518
        %3689 = vmatprep.subr.bf16.mxu0 %v2523
        %3690 = vmatpush1.bf16.msra.mxu0 %v2522
        %3691 = vmatprep.subr.bf16.mxu0 %v2527
        %3692 = vmatpush1.bf16.msra.mxu0 %v2526
        %3693 = vmatprep.subr.bf16.mxu0 %v2531
        %3694 = vmatpush1.bf16.msra.mxu0 %v2530
        %3695 = vmatprep.mubr.bf16.mxu0 %v1672
        %3696 = vmatmul.mubr.bf16.gmra.mrb[0].mxu0 %v1671
        %v3697 = vpop.f32.mrb[0].mxu0
        %v3698 = vadd.f32 %v3657, %v3697
        %v3699 = vpop.f32.mrb[0].mxu0
        %v3700 = vadd.f32 %v3659, %v3699
        %v3701 = vpop.f32.mrb[0].mxu0
        %v3702 = vpop.f32.mrb[0].mxu0
        %3703 = vdwg.mxu0
        %3704 = vmatprep.subr.bf16.mxu0 %v2535
        %3705 = vmatpush1.bf16.msra.mxu0 %v2534
        %3706 = vmatprep.subr.bf16.mxu0 %v2539
        %3707 = vmatpush1.bf16.msra.mxu0 %v2538
        %3708 = vmatprep.subr.bf16.mxu0 %v2543
        %3709 = vmatpush1.bf16.msra.mxu0 %v2542
        %3710 = vmatprep.subr.bf16.mxu0 %v2547
        %3711 = vmatpush1.bf16.msra.mxu0 %v2546
        %3712 = vmatprep.subr.bf16.mxu0 %v2551
        %3713 = vmatpush1.bf16.msra.mxu0 %v2550
        %3714 = vmatprep.subr.bf16.mxu0 %v2555
        %3715 = vmatpush1.bf16.msra.mxu0 %v2554
        %3716 = vmatprep.subr.bf16.mxu0 %v2559
        %3717 = vmatpush1.bf16.msra.mxu0 %v2558
        %3718 = vmatprep.subr.bf16.mxu0 %v2563
        %3719 = vmatpush1.bf16.msra.mxu0 %v2562
        %3720 = vmatprep.subr.bf16.mxu0 %v2567
        %3721 = vmatpush1.bf16.msra.mxu0 %v2566
        %3722 = vmatprep.subr.bf16.mxu0 %v2571
        %3723 = vmatpush1.bf16.msra.mxu0 %v2570
        %3724 = vmatprep.subr.bf16.mxu0 %v2575
        %3725 = vmatpush1.bf16.msra.mxu0 %v2574
        %3726 = vmatprep.subr.bf16.mxu0 %v2579
        %3727 = vmatpush1.bf16.msra.mxu0 %v2578
        %3728 = vmatprep.subr.bf16.mxu0 %v2583
        %3729 = vmatpush1.bf16.msra.mxu0 %v2582
        %3730 = vmatprep.subr.bf16.mxu0 %v2587
        %3731 = vmatpush1.bf16.msra.mxu0 %v2586
        %3732 = vmatprep.subr.bf16.mxu0 %v2591
        %3733 = vmatpush1.bf16.msra.mxu0 %v2590
        %3734 = vmatprep.subr.bf16.mxu0 %v2595
        %3735 = vmatpush1.bf16.msra.mxu0 %v2594
        %3736 = vmatprep.mubr.bf16.mxu0 %v1674
        %3737 = vmatmul.mubr.bf16.gmra.mrb[0].mxu0 %v1673
        %v3738 = vpop.f32.mrb[0].mxu0
        %v3739 = vadd.f32 %v3698, %v3738
        %v3740 = vpop.f32.mrb[0].mxu0
        %v3741 = vadd.f32 %v3700, %v3740
        %v3742 = vpop.f32.mrb[0].mxu0
        %v3743 = vpop.f32.mrb[0].mxu0
        %3744 = vdwg.mxu0
        %3745 = vmatprep.subr.bf16.mxu0 %v2599
        %3746 = vmatpush1.bf16.msra.mxu0 %v2598
        %3747 = vmatprep.subr.bf16.mxu0 %v2603
        %3748 = vmatpush1.bf16.msra.mxu0 %v2602
        %3749 = vmatprep.subr.bf16.mxu0 %v2607
        %3750 = vmatpush1.bf16.msra.mxu0 %v2606
        %3751 = vmatprep.subr.bf16.mxu0 %v2611
        %3752 = vmatpush1.bf16.msra.mxu0 %v2610
        %3753 = vmatprep.subr.bf16.mxu0 %v2615
        %3754 = vmatpush1.bf16.msra.mxu0 %v2614
        %3755 = vmatprep.subr.bf16.mxu0 %v2619
        %3756 = vmatpush1.bf16.msra.mxu0 %v2618
        %3757 = vmatprep.subr.bf16.mxu0 %v2623
        %3758 = vmatpush1.bf16.msra.mxu0 %v2622
        %3759 = vmatprep.subr.bf16.mxu0 %v2627
        %3760 = vmatpush1.bf16.msra.mxu0 %v2626
        %3761 = vmatprep.subr.bf16.mxu0 %v2631
        %3762 = vmatpush1.bf16.msra.mxu0 %v2630
        %3763 = vmatprep.subr.bf16.mxu0 %v2635
        %3764 = vmatpush1.bf16.msra.mxu0 %v2634
        %3765 = vmatprep.subr.bf16.mxu0 %v2639
        %3766 = vmatpush1.bf16.msra.mxu0 %v2638
        %3767 = vmatprep.subr.bf16.mxu0 %v2643
        %3768 = vmatpush1.bf16.msra.mxu0 %v2642
        %3769 = vmatprep.subr.bf16.mxu0 %v2647
        %3770 = vmatpush1.bf16.msra.mxu0 %v2646
        %3771 = vmatprep.subr.bf16.mxu0 %v2651
        %3772 = vmatpush1.bf16.msra.mxu0 %v2650
        %3773 = vmatprep.subr.bf16.mxu0 %v2655
        %3774 = vmatpush1.bf16.msra.mxu0 %v2654
        %3775 = vmatprep.subr.bf16.mxu0 %v2659
        %3776 = vmatpush1.bf16.msra.mxu0 %v2658
        %3777 = vmatprep.mubr.bf16.mxu0 %v1676
        %3778 = vmatmul.mubr.bf16.gmra.mrb[0].mxu0 %v1675
        %v3779 = vpop.f32.mrb[0].mxu0
        %v3780 = vadd.f32 %v3739, %v3779
        %v3781 = vpop.f32.mrb[0].mxu0
        %v3782 = vadd.f32 %v3741, %v3781
        %v3783 = vpop.f32.mrb[0].mxu0
        %v3784 = vpop.f32.mrb[0].mxu0
        %3785 = vdwg.mxu0
        %3786 = vmatprep.subr.bf16.mxu0 %v2663
        %3787 = vmatpush1.bf16.msra.mxu0 %v2662
        %3788 = vmatprep.subr.bf16.mxu0 %v2667
        %3789 = vmatpush1.bf16.msra.mxu0 %v2666
        %3790 = vmatprep.subr.bf16.mxu0 %v2671
        %3791 = vmatpush1.bf16.msra.mxu0 %v2670
        %3792 = vmatprep.subr.bf16.mxu0 %v2675
        %3793 = vmatpush1.bf16.msra.mxu0 %v2674
        %3794 = vmatprep.subr.bf16.mxu0 %v2679
        %3795 = vmatpush1.bf16.msra.mxu0 %v2678
        %3796 = vmatprep.subr.bf16.mxu0 %v2683
        %3797 = vmatpush1.bf16.msra.mxu0 %v2682
        %3798 = vmatprep.subr.bf16.mxu0 %v2687
        %3799 = vmatpush1.bf16.msra.mxu0 %v2686
        %3800 = vmatprep.subr.bf16.mxu0 %v2691
        %3801 = vmatpush1.bf16.msra.mxu0 %v2690
        %3802 = vmatprep.subr.bf16.mxu0 %v2695
        %3803 = vmatpush1.bf16.msra.mxu0 %v2694
        %3804 = vmatprep.subr.bf16.mxu0 %v2699
        %3805 = vmatpush1.bf16.msra.mxu0 %v2698
        %3806 = vmatprep.subr.bf16.mxu0 %v2703
        %3807 = vmatpush1.bf16.msra.mxu0 %v2702
        %3808 = vmatprep.subr.bf16.mxu0 %v2707
        %3809 = vmatpush1.bf16.msra.mxu0 %v2706
        %3810 = vmatprep.subr.bf16.mxu0 %v2711
        %3811 = vmatpush1.bf16.msra.mxu0 %v2710
        %3812 = vmatprep.subr.bf16.mxu0 %v2715
        %3813 = vmatpush1.bf16.msra.mxu0 %v2714
        %3814 = vmatprep.subr.bf16.mxu0 %v2719
        %3815 = vmatpush1.bf16.msra.mxu0 %v2718
        %3816 = vmatprep.subr.bf16.mxu0 %v2723
        %3817 = vmatpush1.bf16.msra.mxu0 %v2722
        %3818 = vmatprep.mubr.bf16.mxu0 %v1678
        %3819 = vmatmul.mubr.bf16.gmra.mrb[0].mxu0 %v1677
        %v3820 = vpop.f32.mrb[0].mxu0
        %v3821 = vadd.f32 %v3780, %v3820
        %v3822 = vpop.f32.mrb[0].mxu0
        %v3823 = vadd.f32 %v3782, %v3822
        %v3824 = vpop.f32.mrb[0].mxu0
        %v3825 = vpop.f32.mrb[0].mxu0
        %3826 = vdwg.mxu0
        %3827 = vmatprep.subr.bf16.mxu0 %v2727
        %3828 = vmatpush1.bf16.msra.mxu0 %v2726
        %3829 = vmatprep.subr.bf16.mxu0 %v2731
        %3830 = vmatpush1.bf16.msra.mxu0 %v2730
        %3831 = vmatprep.subr.bf16.mxu0 %v2735
        %3832 = vmatpush1.bf16.msra.mxu0 %v2734
        %3833 = vmatprep.subr.bf16.mxu0 %v2739
        %3834 = vmatpush1.bf16.msra.mxu0 %v2738
        %3835 = vmatprep.subr.bf16.mxu0 %v2743
        %3836 = vmatpush1.bf16.msra.mxu0 %v2742
        %3837 = vmatprep.subr.bf16.mxu0 %v2747
        %3838 = vmatpush1.bf16.msra.mxu0 %v2746
        %3839 = vmatprep.subr.bf16.mxu0 %v2751
        %3840 = vmatpush1.bf16.msra.mxu0 %v2750
        %3841 = vmatprep.subr.bf16.mxu0 %v2755
        %3842 = vmatpush1.bf16.msra.mxu0 %v2754
        %3843 = vmatprep.subr.bf16.mxu0 %v2759
        %3844 = vmatpush1.bf16.msra.mxu0 %v2758
        %3845 = vmatprep.subr.bf16.mxu0 %v2763
        %3846 = vmatpush1.bf16.msra.mxu0 %v2762
        %3847 = vmatprep.subr.bf16.mxu0 %v2767
        %3848 = vmatpush1.bf16.msra.mxu0 %v2766
        %3849 = vmatprep.subr.bf16.mxu0 %v2771
        %3850 = vmatpush1.bf16.msra.mxu0 %v2770
        %3851 = vmatprep.subr.bf16.mxu0 %v2775
        %3852 = vmatpush1.bf16.msra.mxu0 %v2774
        %3853 = vmatprep.subr.bf16.mxu0 %v2779
        %3854 = vmatpush1.bf16.msra.mxu0 %v2778
        %3855 = vmatprep.subr.bf16.mxu0 %v2783
        %3856 = vmatpush1.bf16.msra.mxu0 %v2782
        %3857 = vmatprep.subr.bf16.mxu0 %v2787
        %3858 = vmatpush1.bf16.msra.mxu0 %v2786
        %3859 = vmatprep.mubr.bf16.mxu0 %v1680
        %3860 = vmatmul.mubr.bf16.gmra.mrb[0].mxu0 %v1679
        %v3861 = vpop.f32.mrb[0].mxu0
        %v3862 = vadd.f32 %v3821, %v3861
        %v3863 = vpop.f32.mrb[0].mxu0
        %v3864 = vadd.f32 %v3823, %v3863
        %v3865 = vpop.f32.mrb[0].mxu0
        %v3866 = vpop.f32.mrb[0].mxu0
        %3867 = vdwg.mxu0
        %3868 = vmatprep.subr.bf16.mxu0 %v2791
        %3869 = vmatpush1.bf16.msra.mxu0 %v2790
        %3870 = vmatprep.subr.bf16.mxu0 %v2795
        %3871 = vmatpush1.bf16.msra.mxu0 %v2794
        %3872 = vmatprep.subr.bf16.mxu0 %v2799
        %3873 = vmatpush1.bf16.msra.mxu0 %v2798
        %3874 = vmatprep.subr.bf16.mxu0 %v2803
        %3875 = vmatpush1.bf16.msra.mxu0 %v2802
        %3876 = vmatprep.subr.bf16.mxu0 %v2807
        %3877 = vmatpush1.bf16.msra.mxu0 %v2806
        %3878 = vmatprep.subr.bf16.mxu0 %v2811
        %3879 = vmatpush1.bf16.msra.mxu0 %v2810
        %3880 = vmatprep.subr.bf16.mxu0 %v2815
        %3881 = vmatpush1.bf16.msra.mxu0 %v2814
        %3882 = vmatprep.subr.bf16.mxu0 %v2819
        %3883 = vmatpush1.bf16.msra.mxu0 %v2818
        %3884 = vmatprep.subr.bf16.mxu0 %v2823
        %3885 = vmatpush1.bf16.msra.mxu0 %v2822
        %3886 = vmatprep.subr.bf16.mxu0 %v2827
        %3887 = vmatpush1.bf16.msra.mxu0 %v2826
        %3888 = vmatprep.subr.bf16.mxu0 %v2831
        %3889 = vmatpush1.bf16.msra.mxu0 %v2830
        %3890 = vmatprep.subr.bf16.mxu0 %v2835
        %3891 = vmatpush1.bf16.msra.mxu0 %v2834
        %3892 = vmatprep.subr.bf16.mxu0 %v2839
        %3893 = vmatpush1.bf16.msra.mxu0 %v2838
        %3894 = vmatprep.subr.bf16.mxu0 %v2843
        %3895 = vmatpush1.bf16.msra.mxu0 %v2842
        %3896 = vmatprep.subr.bf16.mxu0 %v2847
        %3897 = vmatpush1.bf16.msra.mxu0 %v2846
        %3898 = vmatprep.subr.bf16.mxu0 %v2851
        %3899 = vmatpush1.bf16.msra.mxu0 %v2850
        %3900 = vmatprep.mubr.bf16.mxu0 %v1682
        %3901 = vmatmul.mubr.bf16.gmra.mrb[0].mxu0 %v1681
        %v3902 = vpop.f32.mrb[0].mxu0
        %v3903 = vadd.f32 %v3862, %v3902
        %v3904 = vpop.f32.mrb[0].mxu0
        %v3905 = vadd.f32 %v3864, %v3904
        %v3906 = vpop.f32.mrb[0].mxu0
        %v3907 = vpop.f32.mrb[0].mxu0
        %3908 = vdwg.mxu0
        %3909 = vmatprep.subr.bf16.mxu0 %v2855
        %3910 = vmatpush1.bf16.msra.mxu0 %v2854
        %3911 = vmatprep.subr.bf16.mxu0 %v2859
        %3912 = vmatpush1.bf16.msra.mxu0 %v2858
        %3913 = vmatprep.subr.bf16.mxu0 %v2863
        %3914 = vmatpush1.bf16.msra.mxu0 %v2862
        %3915 = vmatprep.subr.bf16.mxu0 %v2867
        %3916 = vmatpush1.bf16.msra.mxu0 %v2866
        %3917 = vmatprep.subr.bf16.mxu0 %v2871
        %3918 = vmatpush1.bf16.msra.mxu0 %v2870
        %3919 = vmatprep.subr.bf16.mxu0 %v2875
        %3920 = vmatpush1.bf16.msra.mxu0 %v2874
        %3921 = vmatprep.subr.bf16.mxu0 %v2879
        %3922 = vmatpush1.bf16.msra.mxu0 %v2878
        %3923 = vmatprep.subr.bf16.mxu0 %v2883
        %3924 = vmatpush1.bf16.msra.mxu0 %v2882
        %3925 = vmatprep.subr.bf16.mxu0 0
        %3926 = vmatpush1.bf16.msra.mxu0 0
        %3927 = vmatprep.subr.bf16.mxu0 0
        %3928 = vmatpush1.bf16.msra.mxu0 0
        %3929 = vmatprep.subr.bf16.mxu0 0
        %3930 = vmatpush1.bf16.msra.mxu0 0
        %3931 = vmatprep.subr.bf16.mxu0 0
        %3932 = vmatpush1.bf16.msra.mxu0 0
        %3933 = vmatprep.subr.bf16.mxu0 0
        %3934 = vmatpush1.bf16.msra.mxu0 0
        %3935 = vmatprep.subr.bf16.mxu0 0
        %3936 = vmatpush1.bf16.msra.mxu0 0
        %3937 = vmatprep.subr.bf16.mxu0 0
        %3938 = vmatpush1.bf16.msra.mxu0 0
        %3939 = vmatprep.subr.bf16.mxu0 0
        %3940 = vmatpush1.bf16.msra.mxu0 0
        %3941 = vmatprep.mubr.bf16.mxu0 0
        %3942 = vmatmul.mubr.bf16.gmra.mrb[0].mxu0 %v1683
        %v3943 = vpop.f32.mrb[0].mxu0
        %v3944 = vadd.f32 %v3903, %v3943
        %v3945 = vpop.f32.mrb[0].mxu0
        %v3946 = vadd.f32 %v3905, %v3945
        %v3947 = vpop.f32.mrb[0].mxu0
        %v3948 = vpop.f32.mrb[0].mxu0
        %3949 = vdwg.mxu0
        %v3950 = vld [vmem:[%s425] sm:$0xf]
        %v3952 = vlaneseq
        %v3953 = vshrl.u32 %v3952, 7
        %v3954 = vsub.s32 0, %v3953
        %v3955 = vrot.slane %v3950, %v3954
        %v3956 = vlaneseq
        %v3957 = vshrl.u32 %v3956, 7
        %v3958 = vsub.s32 1, %v3957
        %v3959 = vrot.slane %v3950, %v3958
        %v3960 = vlaneseq
        %v3961 = vshrl.u32 %v3960, 7
        %v3962 = vsub.s32 2, %v3961
        %v3963 = vrot.slane %v3950, %v3962
        %v3964 = vlaneseq
        %v3965 = vshrl.u32 %v3964, 7
        %v3966 = vsub.s32 3, %v3965
        %v3967 = vrot.slane %v3950, %v3966
        %v3972 = vmul.f32 %v3411, %v3955
        %v3973 = vmul.f32 %v3413, %v3959
        %v3974 = vmul.f32 %v3944, %v3963
        %v3975 = vmul.f32 %v3946, %v3967
        %v3976 = vld [vmem:[%s434] sm:$0xf]
        %v3978 = vlaneseq
        %v3979 = vshrl.u32 %v3978, 7
        %v3980 = vsub.s32 0, %v3979
        %v3981 = vrot.slane %v3976, %v3980
        %v3982 = vlaneseq
        %v3983 = vshrl.u32 %v3982, 7
        %v3984 = vsub.s32 1, %v3983
        %v3985 = vrot.slane %v3976, %v3984
        %v3986 = vlaneseq
        %v3987 = vshrl.u32 %v3986, 7
        %v3988 = vsub.s32 2, %v3987
        %v3989 = vrot.slane %v3976, %v3988
        %v3990 = vlaneseq
        %v3991 = vshrl.u32 %v3990, 7
        %v3992 = vsub.s32 3, %v3991
        %v3993 = vrot.slane %v3976, %v3992
        %v3998 = vadd.f32 %v3972, %v3981
        %v3999 = vadd.f32 %v3973, %v3985
        %v4000 = vadd.f32 %v3974, %v3989
        %v4001 = vadd.f32 %v3975, %v3993
        %v4002 = vmax.f32 %v3998, 0.0
        %v4003 = vmax.f32 %v3999, 0.0
        %v4004 = vmax.f32 %v4000, 0.0
        %v4005 = vmax.f32 %v4001, 0.0
        %v4006 = vpack.c.bf16 %v4002, %v4002
        %v4007 = vpack.c.bf16 %v4003, %v4003
        %v4008 = vpack.c.bf16 %v4004, %v4004
        %v4009 = vpack.c.bf16 %v4005, %v4005
        %v4010 = vld [vmem:[%s443] sm:$0xf]
        %v4011 = vld [vmem:[%s443 + $0x4] sm:$0xf]
        %v4012 = vld [vmem:[%s443 + $0x8] sm:$0xf]
        %v4013 = vld [vmem:[%s443 + $0xc] sm:$0xf]
        %v4014 = vld [vmem:[%s443 + $0x10] sm:$0xf]
        %v4015 = vld [vmem:[%s443 + $0x14] sm:$0xf]
        %v4016 = vld [vmem:[%s443 + $0x18] sm:$0xf]
        %v4017 = vld [vmem:[%s443 + $0x1c] sm:$0xf]
        %v4018 = vld [vmem:[%s443 + $0x20] sm:$0xf]
        %v4019 = vld [vmem:[%s443 + $0x24] sm:$0xf]
        %v4020 = vld [vmem:[%s443 + $0x28] sm:$0xf]
        %v4021 = vld [vmem:[%s443 + $0x2c] sm:$0xf]
        %v4022 = vld [vmem:[%s443 + $0x30] sm:$0xf]
        %v4023 = vld [vmem:[%s443 + $0x34] sm:$0xf]
        %v4024 = vld [vmem:[%s443 + $0x38] sm:$0xf]
        %v4025 = vld [vmem:[%s443 + $0x3c] sm:$0xf]
        %v4026 = vld [vmem:[%s443 + $0x40] sm:$0xf]
        %v4027 = vld [vmem:[%s443 + $0x44] sm:$0xf]
        %v4028 = vld [vmem:[%s443 + $0x48] sm:$0xf]
        %v4029 = vld [vmem:[%s443 + $0x4c] sm:$0xf]
        %v4030 = vld [vmem:[%s443 + $0x50] sm:$0xf]
        %v4031 = vld [vmem:[%s443 + $0x54] sm:$0xf]
        %v4032 = vld [vmem:[%s443 + $0x58] sm:$0xf]
        %v4033 = vld [vmem:[%s443 + $0x5c] sm:$0xf]
        %v4034 = vld [vmem:[%s443 + $0x60] sm:$0xf]
        %v4035 = vld [vmem:[%s443 + $0x64] sm:$0xf]
        %v4036 = vld [vmem:[%s443 + $0x68] sm:$0xf]
        %v4037 = vld [vmem:[%s443 + $0x6c] sm:$0xf]
        %v4038 = vld [vmem:[%s443 + $0x70] sm:$0xf]
        %v4039 = vld [vmem:[%s443 + $0x74] sm:$0xf]
        %v4040 = vld [vmem:[%s443 + $0x78] sm:$0xf]
        %v4041 = vld [vmem:[%s443 + $0x7c] sm:$0xf]
        %v4042 = vld [vmem:[%s443 + $0x80] sm:$0xf]
        %v4043 = vld [vmem:[%s443 + $0x84] sm:$0xf]
        %v4044 = vld [vmem:[%s443 + $0x88] sm:$0xf]
        %v4045 = vld [vmem:[%s443 + $0x8c] sm:$0xf]
        %v4046 = vld [vmem:[%s443 + $0x90] sm:$0xf]
        %v4047 = vld [vmem:[%s443 + $0x94] sm:$0xf]
        %v4048 = vld [vmem:[%s443 + $0x98] sm:$0xf]
        %v4049 = vld [vmem:[%s443 + $0x9c] sm:$0xf]
        %v4050 = vld [vmem:[%s443 + $0xa0] sm:$0xf]
        %v4051 = vld [vmem:[%s443 + $0xa4] sm:$0xf]
        %v4052 = vld [vmem:[%s443 + $0xa8] sm:$0xf]
        %v4053 = vld [vmem:[%s443 + $0xac] sm:$0xf]
        %v4054 = vld [vmem:[%s443 + $0xb0] sm:$0xf]
        %v4055 = vld [vmem:[%s443 + $0xb4] sm:$0xf]
        %v4056 = vld [vmem:[%s443 + $0xb8] sm:$0xf]
        %v4057 = vld [vmem:[%s443 + $0xbc] sm:$0xf]
        %v4058 = vld [vmem:[%s443 + $0xc0] sm:$0xf]
        %v4059 = vld [vmem:[%s443 + $0xc4] sm:$0xf]
        %v4060 = vld [vmem:[%s443 + $0xc8] sm:$0xf]
        %v4061 = vld [vmem:[%s443 + $0xcc] sm:$0xf]
        %v4062 = vld [vmem:[%s443 + $0xd0] sm:$0xf]
        %v4063 = vld [vmem:[%s443 + $0xd4] sm:$0xf]
        %v4064 = vld [vmem:[%s443 + $0xd8] sm:$0xf]
        %v4065 = vld [vmem:[%s443 + $0xdc] sm:$0xf]
        %v4066 = vld [vmem:[%s443 + $0xe0] sm:$0xf]
        %v4067 = vld [vmem:[%s443 + $0xe4] sm:$0xf]
        %v4068 = vld [vmem:[%s443 + $0xe8] sm:$0xf]
        %v4069 = vld [vmem:[%s443 + $0xec] sm:$0xf]
        %v4070 = vld [vmem:[%s443 + $0xf0] sm:$0xf]
        %v4071 = vld [vmem:[%s443 + $0xf4] sm:$0xf]
        %v4072 = vld [vmem:[%s443 + $0xf8] sm:$0xf]
        %v4073 = vld [vmem:[%s443 + $0xfc] sm:$0xf]
        %v4074 = vld [vmem:[%s451] sm:$0x1]
        %v4076 = vlaneseq
        %v4077 = vshrl.u32 %v4076, 7
        %v4078 = vsub.s32 0, %v4077
        %v4079 = vrot.slane %v4074, %v4078
        %v4145 = vunpack.c.l.b16 %v4010
        %v4146 = vunpack.c.l.b16 %v4011
        %v4147 = vunpack.c.l.b16 %v4012
        %v4148 = vunpack.c.l.b16 %v4013
        %v4149 = vunpack.c.l.b16 %v4014
        %v4150 = vunpack.c.l.b16 %v4015
        %v4151 = vunpack.c.l.b16 %v4016
        %v4152 = vunpack.c.l.b16 %v4017
        %v4153 = vunpack.c.l.b16 %v4018
        %v4154 = vunpack.c.l.b16 %v4019
        %v4155 = vunpack.c.l.b16 %v4020
        %v4156 = vunpack.c.l.b16 %v4021
        %v4157 = vunpack.c.l.b16 %v4022
        %v4158 = vunpack.c.l.b16 %v4023
        %v4159 = vunpack.c.l.b16 %v4024
        %v4160 = vunpack.c.l.b16 %v4025
        %v4161 = vunpack.c.l.b16 %v4026
        %v4162 = vunpack.c.l.b16 %v4027
        %v4163 = vunpack.c.l.b16 %v4028
        %v4164 = vunpack.c.l.b16 %v4029
        %v4165 = vunpack.c.l.b16 %v4030
        %v4166 = vunpack.c.l.b16 %v4031
        %v4167 = vunpack.c.l.b16 %v4032
        %v4168 = vunpack.c.l.b16 %v4033
        %v4169 = vunpack.c.l.b16 %v4034
        %v4170 = vunpack.c.l.b16 %v4035
        %v4171 = vunpack.c.l.b16 %v4036
        %v4172 = vunpack.c.l.b16 %v4037
        %v4173 = vunpack.c.l.b16 %v4038
        %v4174 = vunpack.c.l.b16 %v4039
        %v4175 = vunpack.c.l.b16 %v4040
        %v4176 = vunpack.c.l.b16 %v4041
        %v4177 = vunpack.c.l.b16 %v4042
        %v4178 = vunpack.c.l.b16 %v4043
        %v4179 = vunpack.c.l.b16 %v4044
        %v4180 = vunpack.c.l.b16 %v4045
        %v4181 = vunpack.c.l.b16 %v4046
        %v4182 = vunpack.c.l.b16 %v4047
        %v4183 = vunpack.c.l.b16 %v4048
        %v4184 = vunpack.c.l.b16 %v4049
        %v4185 = vunpack.c.l.b16 %v4050
        %v4186 = vunpack.c.l.b16 %v4051
        %v4187 = vunpack.c.l.b16 %v4052
        %v4188 = vunpack.c.l.b16 %v4053
        %v4189 = vunpack.c.l.b16 %v4054
        %v4190 = vunpack.c.l.b16 %v4055
        %v4191 = vunpack.c.l.b16 %v4056
        %v4192 = vunpack.c.l.b16 %v4057
        %v4193 = vunpack.c.l.b16 %v4058
        %v4194 = vunpack.c.l.b16 %v4059
        %v4195 = vunpack.c.l.b16 %v4060
        %v4196 = vunpack.c.l.b16 %v4061
        %v4197 = vunpack.c.l.b16 %v4062
        %v4198 = vunpack.c.l.b16 %v4063
        %v4199 = vunpack.c.l.b16 %v4064
        %v4200 = vunpack.c.l.b16 %v4065
        %v4201 = vunpack.c.l.b16 %v4066
        %v4202 = vunpack.c.l.b16 %v4067
        %v4203 = vunpack.c.l.b16 %v4068
        %v4204 = vunpack.c.l.b16 %v4069
        %v4205 = vunpack.c.l.b16 %v4070
        %v4206 = vunpack.c.l.b16 %v4071
        %v4207 = vunpack.c.l.b16 %v4072
        %v4208 = vunpack.c.l.b16 %v4073
        %v4209 = vpack.c.b16 %v4146, %v4145
        %v4210 = vpack.c.b16 %v4148, %v4147
        %v4211 = vpack.c.b16 %v4150, %v4149
        %v4212 = vpack.c.b16 %v4152, %v4151
        %v4213 = vpack.c.b16 %v4154, %v4153
        %v4214 = vpack.c.b16 %v4156, %v4155
        %v4215 = vpack.c.b16 %v4158, %v4157
        %v4216 = vpack.c.b16 %v4160, %v4159
        %v4217 = vpack.c.b16 %v4162, %v4161
        %v4218 = vpack.c.b16 %v4164, %v4163
        %v4219 = vpack.c.b16 %v4166, %v4165
        %v4220 = vpack.c.b16 %v4168, %v4167
        %v4221 = vpack.c.b16 %v4170, %v4169
        %v4222 = vpack.c.b16 %v4172, %v4171
        %v4223 = vpack.c.b16 %v4174, %v4173
        %v4224 = vpack.c.b16 %v4176, %v4175
        %v4225 = vpack.c.b16 %v4178, %v4177
        %v4226 = vpack.c.b16 %v4180, %v4179
        %v4227 = vpack.c.b16 %v4182, %v4181
        %v4228 = vpack.c.b16 %v4184, %v4183
        %v4229 = vpack.c.b16 %v4186, %v4185
        %v4230 = vpack.c.b16 %v4188, %v4187
        %v4231 = vpack.c.b16 %v4190, %v4189
        %v4232 = vpack.c.b16 %v4192, %v4191
        %v4233 = vpack.c.b16 %v4194, %v4193
        %v4234 = vpack.c.b16 %v4196, %v4195
        %v4235 = vpack.c.b16 %v4198, %v4197
        %v4236 = vpack.c.b16 %v4200, %v4199
        %v4237 = vpack.c.b16 %v4202, %v4201
        %v4238 = vpack.c.b16 %v4204, %v4203
        %v4239 = vpack.c.b16 %v4206, %v4205
        %v4240 = vpack.c.b16 %v4208, %v4207
        %4273 = vmatprep.subr.bf16.mxu0 0
        %4274 = vmatpush1.bf16.msra.mxu0 %v4209
        %4275 = vmatprep.subr.bf16.mxu0 0
        %4276 = vmatpush1.bf16.msra.mxu0 %v4210
        %4277 = vmatprep.subr.bf16.mxu0 0
        %4278 = vmatpush1.bf16.msra.mxu0 %v4211
        %4279 = vmatprep.subr.bf16.mxu0 0
        %4280 = vmatpush1.bf16.msra.mxu0 %v4212
        %4281 = vmatprep.subr.bf16.mxu0 0
        %4282 = vmatpush1.bf16.msra.mxu0 %v4213
        %4283 = vmatprep.subr.bf16.mxu0 0
        %4284 = vmatpush1.bf16.msra.mxu0 %v4214
        %4285 = vmatprep.subr.bf16.mxu0 0
        %4286 = vmatpush1.bf16.msra.mxu0 %v4215
        %4287 = vmatprep.subr.bf16.mxu0 0
        %4288 = vmatpush1.bf16.msra.mxu0 %v4216
        %4289 = vmatprep.subr.bf16.mxu0 0
        %4290 = vmatpush1.bf16.msra.mxu0 %v4217
        %4291 = vmatprep.subr.bf16.mxu0 0
        %4292 = vmatpush1.bf16.msra.mxu0 %v4218
        %4293 = vmatprep.subr.bf16.mxu0 0
        %4294 = vmatpush1.bf16.msra.mxu0 %v4219
        %4295 = vmatprep.subr.bf16.mxu0 0
        %4296 = vmatpush1.bf16.msra.mxu0 %v4220
        %4297 = vmatprep.subr.bf16.mxu0 0
        %4298 = vmatpush1.bf16.msra.mxu0 %v4221
        %4299 = vmatprep.subr.bf16.mxu0 0
        %4300 = vmatpush1.bf16.msra.mxu0 %v4222
        %4301 = vmatprep.subr.bf16.mxu0 0
        %4302 = vmatpush1.bf16.msra.mxu0 %v4223
        %4303 = vmatprep.subr.bf16.mxu0 0
        %4304 = vmatpush1.bf16.msra.mxu0 %v4224
        %4305 = vmatprep.mubr.bf16.mxu0 %v4007
        %4306 = vmatmul.mubr.bf16.gmra.mrb[0].mxu0 %v4006
        %v4307 = vpop.f32.mrb[0].mxu0
        %v4308 = vadd.f32 %v4079, %v4307
        %v4309 = vpop.f32.mrb[0].mxu0
        %v4310 = vpop.f32.mrb[0].mxu0
        %v4311 = vpop.f32.mrb[0].mxu0
        %4312 = vdwg.mxu0
        %4313 = vmatprep.subr.bf16.mxu0 0
        %4314 = vmatpush1.bf16.msra.mxu0 %v4225
        %4315 = vmatprep.subr.bf16.mxu0 0
        %4316 = vmatpush1.bf16.msra.mxu0 %v4226
        %4317 = vmatprep.subr.bf16.mxu0 0
        %4318 = vmatpush1.bf16.msra.mxu0 %v4227
        %4319 = vmatprep.subr.bf16.mxu0 0
        %4320 = vmatpush1.bf16.msra.mxu0 %v4228
        %4321 = vmatprep.subr.bf16.mxu0 0
        %4322 = vmatpush1.bf16.msra.mxu0 %v4229
        %4323 = vmatprep.subr.bf16.mxu0 0
        %4324 = vmatpush1.bf16.msra.mxu0 %v4230
        %4325 = vmatprep.subr.bf16.mxu0 0
        %4326 = vmatpush1.bf16.msra.mxu0 %v4231
        %4327 = vmatprep.subr.bf16.mxu0 0
        %4328 = vmatpush1.bf16.msra.mxu0 %v4232
        %4329 = vmatprep.subr.bf16.mxu0 0
        %4330 = vmatpush1.bf16.msra.mxu0 %v4233
        %4331 = vmatprep.subr.bf16.mxu0 0
        %4332 = vmatpush1.bf16.msra.mxu0 %v4234
        %4333 = vmatprep.subr.bf16.mxu0 0
        %4334 = vmatpush1.bf16.msra.mxu0 %v4235
        %4335 = vmatprep.subr.bf16.mxu0 0
        %4336 = vmatpush1.bf16.msra.mxu0 %v4236
        %4337 = vmatprep.subr.bf16.mxu0 0
        %4338 = vmatpush1.bf16.msra.mxu0 %v4237
        %4339 = vmatprep.subr.bf16.mxu0 0
        %4340 = vmatpush1.bf16.msra.mxu0 %v4238
        %4341 = vmatprep.subr.bf16.mxu0 0
        %4342 = vmatpush1.bf16.msra.mxu0 %v4239
        %4343 = vmatprep.subr.bf16.mxu0 0
        %4344 = vmatpush1.bf16.msra.mxu0 %v4240
        %4345 = vmatprep.mubr.bf16.mxu0 %v4009
        %4346 = vmatmul.mubr.bf16.gmra.mrb[0].mxu0 %v4008
        %v4347 = vpop.f32.mrb[0].mxu0
        %v4348 = vadd.f32 %v4308, %v4347
        %v4349 = vpop.f32.mrb[0].mxu0
        %v4350 = vpop.f32.mrb[0].mxu0
        %v4351 = vpop.f32.mrb[0].mxu0
        %4352 = vdwg.mxu0
        %4353 = vst [vmem:[%s508] sm:$0x3] %v4348
        %p4354 = scmp.lt.s32.totalorder %s30, 1
        %s4355 = scalar_select %p4354, %s30, 1
        %s4356 = smul.addr %s4355, 2
        %s4357 = scalar_lea.vmem %s8, %s4356
        // Predicated region
        $region85: #{cnn_qnetwork_forward.1} parent=51 // pred_check
          %p4358 = pneg %p241
        $region86: #{cnn_qnetwork_forward.1} parent=51 // pred_check_branch
          %4360 = sbr.rel (%p4358) target = $region88
        $region87: #{cnn_qnetwork_forward.1} parent=51 // pred_region
          _
        $region88: #{cnn_qnetwork_forward.1} parent=51 // pred_fallthru
          _
      $region52: #{cnn_qnetwork_forward.1} parent=5 // pred_fallthru
        _
      %p4361 = scmp.le.s32.totalorder 2, %s25
      // Predicated region
      $region89: #{cnn_qnetwork_forward.1} parent=5 // pred_check
        %p4362 = pneg %p4361
      $region90: #{cnn_qnetwork_forward.1} parent=5 // pred_check_branch
        %4364 = sbr.rel (%p4362) target = $region92
      $region91: #{cnn_qnetwork_forward.1} parent=5 // pred_region
        %s4365 = ssub.s32 %s25, 2
        // Predicated region
        $region93: #{cnn_qnetwork_forward.1} parent=91 // pred_check
          %p4366 = pneg %p247
        $region94: #{cnn_qnetwork_forward.1} parent=91 // pred_check_branch
          %4368 = sbr.rel (%p4366) target = $region96
        $region95: #{cnn_qnetwork_forward.1} parent=91 // pred_region
          %p4369 = scmp.lt.s32.totalorder %s31, 1
          %s4370 = scalar_select %p4369, %s31, 1
          %s4371 = smul.addr %s4370, 2
          %s4372 = scalar_lea.vmem %s8, %s4371
        $region96: #{cnn_qnetwork_forward.1} parent=91 // pred_fallthru
          _
      $region92: #{cnn_qnetwork_forward.1} parent=5 // pred_fallthru
        _
    $region6: #{cnn_qnetwork_forward.1} parent=1 // loop_footer
      %s29 = sadd.s32 1, %s25
    $region7: #{cnn_qnetwork_forward.1} parent=1 // loop_footer_branch
      %24 = sbr.rel target = $region3
    $region8: #{cnn_qnetwork_forward.1} parent=1 // loop_exit
      _
    %4373 = vsyncpa [#allocation3], 1
    %s4374 = scalar_lea.sflag [#allocation3], 1
    %4375 = vsyncpa %s4374, 1
    %4376 = vsyncpa [#allocation5], 1
    %4377 = vsyncpa [#allocation8], 1
    %s4378 = scalar_lea.sflag [#allocation8], 1
    %4379 = vsyncpa %s4378, 1
    %4380 = vsyncpa [#allocation11], 1
    %s4381 = scalar_lea.sflag [#allocation11], 1
    %4382 = vsyncpa %s4381, 1
    %4383 = vsyncpa [#allocation14], 1
    %s4384 = scalar_lea.sflag [#allocation14], 1
    %4385 = vsyncpa %s4384, 1

</llo_original>
